<compile_context>
chip_gen: v7x
topology: tpu7x:2x2x1
jax: 0.10.0
libtpu: 0.0.40
codegen_flags: <defaults>
</compile_context>

<pallas_src>
import functools

import jax
import jax.numpy as jnp
from jax.experimental import pallas as pl
from jax.experimental.pallas import tpu as pltpu

BN_EPS = 1e-5
_LANE = 128
_SUBLANE = 8


def _rup(x, m):
    return (x + m - 1) // m * m


def _phys_vmem_bytes(shape, dtype_bytes=4):
    """Physical VMEM footprint: minor dim occupies 128 lanes, 2nd-minor rounds to 8 sublanes."""
    if len(shape) == 0:
        return dtype_bytes
    if len(shape) == 1:
        return _rup(shape[0], _LANE) * dtype_bytes
    lead = 1
    for d in shape[:-2]:
        lead *= d
    return lead * _rup(shape[-2], _SUBLANE) * _rup(shape[-1], _LANE) * dtype_bytes


def _vmem_limit_bytes():
    """Per-generation scoped-VMEM budget (v5e/v6e: 128 MiB physical, v7x: 64 MiB)."""
    try:
        phys = pltpu.get_tpu_info().vmem_capacity_bytes
    except Exception:  # pragma: no cover - fallback if query unavailable
        phys = 64 * 1024 * 1024
    return int(min(phys // 2, 64 * 1024 * 1024))


# --------------------------------- fused kernel ------------------------------------
def _make_fused_kernel(*, h, w, cin, cout, kh, kw, padding, pool, res,
                       ho, wo, ho_e, wo_e, inv_count):
    P = ho * wo

    def kernel(x_ref, w_ref, p_ref, o_ref, y_ref, st_ref):
        phase = pl.program_id(0)
        b = pl.program_id(1)

        # Zero the (sum, centered-sum-of-squares) accumulator once, at the first step.
        @pl.when(jnp.logical_and(phase == 0, b == 0))
        def _init_stats():
            st_ref[...] = jnp.zeros_like(st_ref)

        # ---- phase 0: conv as kh*kw shifted-tap GEMMs (in-kernel im2col) + bias + ReLU ----
        @pl.when(phase == 0)
        def _conv():
            acc = jnp.zeros((P, cout), jnp.float32)
            for dh in range(kh):
                for dw in range(kw):
                    xt = x_ref[0, dh:dh + ho, dw:dw + wo, :]          # (ho, wo, cin)
                    xt = xt.reshape(P, cin)                           # lane dim unchanged
                    acc = acc + jnp.dot(xt, w_ref[dh * kw + dw],
                                        preferred_element_type=jnp.float32)
            y = jnp.maximum(acc + p_ref[0:1, :], 0.0)                 # bias + ReLU
            y_ref[b] = y                                              # stays resident in VMEM
            st_ref[0:1, :] += jnp.sum(y, axis=0, keepdims=True)       # per-channel sum

        # ---- phase 1: centered sum of squares (numerically robust two-pass variance) ----
        @pl.when(phase == 1)
        def _var():
            mean = st_ref[0:1, :] * inv_count
            d = y_ref[b] - mean
            st_ref[1:2, :] += jnp.sum(d * d, axis=0, keepdims=True)

        # ---- phase 2: folded BN affine + MaxPool2d(2) + residual + store ----
        @pl.when(phase == 2)
        def _emit():
            mean = st_ref[0:1, :] * inv_count
            var = st_ref[1:2, :] * inv_count
            inv_std = jax.lax.rsqrt(var + BN_EPS)
            scale = p_ref[1:2, :] * inv_std                           # gamma * inv_std
            shift = p_ref[2:3, :] - mean * scale                      # beta - mean*scale
            z = y_ref[b] * scale + shift                              # (P, cout)
            z = z.reshape(ho, wo, cout)
            if pool:
                if (ho_e, wo_e) != (ho, wo):                          # PyTorch floors odd dims
                    z = z[:ho_e, :wo_e, :]
                # H pairs: leading-dim split -> free VPU max.  W pairs: sublane-pair max.
                z = jnp.max(z.reshape(ho_e // 2, 2, wo_e, cout), axis=1)
                z = jnp.max(z.reshape(ho_e // 2, wo_e // 2, 2, cout), axis=2)
            if res:
                # identity = centre crop of the padded input already sitting in VMEM
                z = z + x_ref[0, padding:padding + h, padding:padding + w, :]
            o_ref[0] = z

    return kernel


# ------------------------------------ wrapper --------------------------------------
@functools.partial(jax.jit, static_argnames=("padding", "pool", "res"))
def complete_conv_layer(x_nchw, w_oihw, bias, gamma, beta, *, padding, pool=True, res=False):
    """PyTorch-equivalent forward. Inputs/outputs are NCHW, weight is OIHW."""
    n, cin, h, w = x_nchw.shape
    cout, cin_w, kh, kw = w_oihw.shape
    assert cin_w == cin, "weight/input channel mismatch"
    ho = h + 2 * padding - kh + 1
    wo = w + 2 * padding - kw + 1
    assert ho > 0 and wo > 0, "conv output must be non-empty"
    if res:
        assert (not pool) and cin == cout and (ho, wo) == (h, w), (
            "residual add requires pool=False, cin == cout and a 'same'-shaped conv")

    ho_e, wo_e = (ho // 2 * 2, wo // 2 * 2) if pool else (ho, wo)
    oh, ow = (ho_e // 2, wo_e // 2) if pool else (ho, wo)
    P = ho * wo
    Hp, Wp = h + 2 * padding, w + 2 * padding
    vmem_limit = _vmem_limit_bytes()

    # ---- XLA-side prep (cheap, exact-size): NHWC + spatial zero pad, per-tap weights ----
    x_nhwc = jnp.transpose(x_nchw, (0, 2, 3, 1)).astype(jnp.float32)
    xp = jnp.pad(x_nhwc, ((0, 0), (padding, padding), (padding, padding), (0, 0)))
    w_taps = jnp.transpose(w_oihw, (2, 3, 1, 0)).reshape(kh * kw, cin, cout).astype(jnp.float32)
    params = jnp.stack([bias, gamma, beta], axis=0).astype(jnp.float32)   # (3, cout)

    # ---- VMEM residency budget check (double buffers on pipelined inputs/output) ----
    footprint = (
        _phys_vmem_bytes((n, P, cout))                 # resident conv+ReLU intermediate
        + _phys_vmem_bytes((2, cout))                  # BN stats
        + 2 * _phys_vmem_bytes((1, Hp, Wp, cin))       # padded image block (double buffered)
        + 2 * _phys_vmem_bytes((kh * kw, cin, cout))   # weights
        + 2 * _phys_vmem_bytes((3, cout))              # bias/gamma/beta
        + 2 * _phys_vmem_bytes((1, oh, ow, cout)))     # output block
    assert footprint <= 3 * vmem_limit // 4, (
        f"fused CompleteConvLayer needs ~{footprint} B of VMEM (> 3/4 of the "
        f"{vmem_limit} B budget); an H-tiled spill path is not implemented yet")

    # ---- index maps: freeze block indices during phases that do not use an operand ----
    if res:
        x_idx = lambda p, b: (jnp.where(p == 1, 0, b), 0, 0, 0)   # conv + residual phases
    else:
        x_idx = lambda p, b: (jnp.where(p == 0, b, 0), 0, 0, 0)   # conv phase only
    out_idx = lambda p, b: (jnp.where(p == 2, b, 0), 0, 0, 0)     # emit phase only

    kernel = _make_fused_kernel(h=h, w=w, cin=cin, cout=cout, kh=kh, kw=kw,
                                padding=padding, pool=pool, res=res,
                                ho=ho, wo=wo, ho_e=ho_e, wo_e=wo_e,
                                inv_count=1.0 / float(n * P))

    out_nhwc = pl.pallas_call(
        kernel,
        grid=(3, n),                                   # (phase, batch); phase is outer/slower
        in_specs=[
            pl.BlockSpec((1, Hp, Wp, cin), x_idx),
            pl.BlockSpec((kh * kw, cin, cout), lambda p, b: (0, 0, 0)),
            pl.BlockSpec((3, cout), lambda p, b: (0, 0)),
        ],
        out_specs=pl.BlockSpec((1, oh, ow, cout), out_idx),
        out_shape=jax.ShapeDtypeStruct((n, oh, ow, cout), jnp.float32),
        scratch_shapes=[
            pltpu.VMEM((n, P, cout), jnp.float32),     # resident conv+ReLU intermediate
            pltpu.VMEM((2, cout), jnp.float32),        # [channel sum ; centered sum-of-squares]
        ],
        compiler_params=pltpu.CompilerParams(
            # Shared scratch accumulation across the whole grid => both axes sequential.
            dimension_semantics=("arbitrary", "arbitrary"),
            vmem_limit_bytes=vmem_limit),
    )(xp, w_taps, params)

    # NHWC -> NCHW on exact-size (un-padded) data only.
    return jnp.transpose(out_nhwc, (0, 3, 1, 2))


# ----------------------------------- reference -------------------------------------
def reference(x_nchw, w_oihw, bias, gamma, beta, *, padding, pool, res):
    """Pure-JAX NCHW reference mirroring the PyTorch forward (train-mode BN)."""
    y = jax.lax.conv_general_dilated(
        x_nchw.astype(jnp.float32), w_oihw.astype(jnp.float32),
        window_strides=(1, 1),
        padding=[(padding, padding), (padding, padding)],
        dimension_numbers=('NCHW', 'OIHW', 'NCHW'),
        preferred_element_type=jnp.float32)
    y = y + bias[None, :, None, None]
    y = jnp.maximum(y, 0.0)
    mean = jnp.mean(y, axis=(0, 2, 3), keepdims=True)
    var = jnp.mean((y - mean) ** 2, axis=(0, 2, 3), keepdims=True)
    y = (y - mean) * jax.lax.rsqrt(var + BN_EPS) * gamma[None, :, None, None] \
        + beta[None, :, None, None]
    if pool:
        nb, c, hh, ww = y.shape
        y = y[:, :, :hh // 2 * 2, :ww // 2 * 2]
        y = y.reshape(nb, c, hh // 2, 2, ww // 2, 2).max(axis=(3, 5))
    if res:
        y = y + x_nchw
    return y


if __name__ == "__main__":
    key = jax.random.PRNGKey(0)
    k1, k2, k3, k4, k5 = jax.random.split(key, 5)

    # --- Config 1: classic block (pool=True, res=False), in_c=4 -> out_c=8 ---
    n, cin, cout, h, w_sz, ksz, pad = 2, 4, 8, 16, 16, 3, 1
    x = jax.random.normal(k1, (n, cin, h, w_sz), jnp.float32)
    w1 = 0.1 * jax.random.normal(k2, (cout, cin, ksz, ksz), jnp.float32)
    b1 = 0.1 * jax.random.normal(k3, (cout,), jnp.float32)
    g1 = 1.0 + 0.1 * jax.random.normal(k4, (cout,), jnp.float32)
    bt1 = 0.1 * jax.random.normal(k5, (cout,), jnp.float32)

    out1 = jax.block_until_ready(
        complete_conv_layer(x, w1, b1, g1, bt1, padding=pad, pool=True, res=False))
    assert out1.shape == (n, cout, h // 2, w_sz // 2), out1.shape
    ref1 = reference(x, w1, b1, g1, bt1, padding=pad, pool=True, res=False)
    err1 = float(jnp.max(jnp.abs(out1 - ref1)))
    assert jnp.allclose(out1, ref1, atol=4e-2, rtol=4e-2), f"config 1 mismatch: {err1}"

    # --- Config 2: residual block (pool=False, res=True), in_c == out_c = 8 ---
    cin2 = cout2 = 8
    x2 = jax.random.normal(k1, (n, cin2, h, w_sz), jnp.float32)
    w2 = 0.1 * jax.random.normal(k2, (cout2, cin2, ksz, ksz), jnp.float32)
    b2 = 0.1 * jax.random.normal(k3, (cout2,), jnp.float32)
    g2 = 1.0 + 0.1 * jax.random.normal(k4, (cout2,), jnp.float32)
    bt2 = 0.1 * jax.random.normal(k5, (cout2,), jnp.float32)

    out2 = jax.block_until_ready(
        complete_conv_layer(x2, w2, b2, g2, bt2, padding=pad, pool=False, res=True))
    assert out2.shape == (n, cout2, h, w_sz), out2.shape
    ref2 = reference(x2, w2, b2, g2, bt2, padding=pad, pool=False, res=True)
    err2 = float(jnp.max(jnp.abs(out2 - ref2)))
    assert jnp.allclose(out2, ref2, atol=4e-2, rtol=4e-2), f"config 2 mismatch: {err2}"

    print("KERNEL_OK")
</pallas_src>

<mosaic_0001>
module attributes {stable_mosaic.version = 11 : i64} {
  func.func @kernel(%arg0: i32, %arg1: i32, %arg2: memref<1x18x18x4xf32, #tpu.memory_space<vmem>>, %arg3: memref<9x4x8xf32, #tpu.memory_space<vmem>>, %arg4: memref<3x8xf32, #tpu.memory_space<vmem>>, %arg5: memref<1x8x8x8xf32, #tpu.memory_space<vmem>>, %arg6: memref<2x256x8xf32, #tpu.memory_space<vmem>>, %arg7: memref<2x8xf32, #tpu.memory_space<vmem>>) attributes {dimension_semantics = [#tpu.dimension_semantics<arbitrary>, #tpu.dimension_semantics<arbitrary>], iteration_bounds = array<i64: 3, 2>, scalar_prefetch = 0 : i64, scratch_operands = 2 : i64, tpu.core_type = #tpu.core_type<tc>, window_params = [{transform_indices = @transform_0, window_bounds = array<i64: 1, 18, 18, 4>}, {pipeline_mode = #tpu.pipeline_mode<synchronous>, transform_indices = @transform_1, window_bounds = array<i64: 9, 4, 8>}, {pipeline_mode = #tpu.pipeline_mode<synchronous>, transform_indices = @transform_2, window_bounds = array<i64: 3, 8>}, {transform_indices = @transform_3, window_bounds = array<i64: 1, 8, 8, 8>}]} {
    %c0_i32 = arith.constant 0 : i32
    %0 = arith.cmpi eq, %arg0, %c0_i32 : i32
    %c0_i32_0 = arith.constant 0 : i32
    %1 = arith.cmpi eq, %arg1, %c0_i32_0 : i32
    %2 = arith.andi %0, %1 : i1
    %3 = arith.extui %2 : i1 to i32
    %c0_i32_1 = arith.constant 0 : i32
    %4 = arith.cmpi ne, %3, %c0_i32_1 : i32
    scf.if %4 {
      %cst = arith.constant 0.000000e+00 : f32
      %14 = vector.broadcast %cst : f32 to vector<2x8xf32>
      %c0 = arith.constant 0 : index
      %c0_6 = arith.constant 0 : index
      %15 = vector.load %arg7[%c0, %c0_6] : memref<2x8xf32, #tpu.memory_space<vmem>>, vector<2x8xf32>
      tpu.vector_store %arg7[%c0, %c0_6], %14 {strides = array<i32>} : memref<2x8xf32, #tpu.memory_space<vmem>>, vector<2x8xf32>,
    } else {
    }
    %c0_i32_2 = arith.constant 0 : i32
    %5 = arith.cmpi eq, %arg0, %c0_i32_2 : i32
    %6 = arith.extui %5 : i1 to i32
    %c0_i32_3 = arith.constant 0 : i32
    %7 = arith.cmpi ne, %6, %c0_i32_3 : i32
    scf.if %7 {
      %cst = arith.constant 0.000000e+00 : f32
      %14 = vector.broadcast %cst : f32 to vector<256x8xf32>
      %c0 = arith.constant 0 : index
      %c0_6 = arith.constant 0 : index
      %c0_7 = arith.constant 0 : index
      %c0_8 = arith.constant 0 : index
      %15 = vector.load %arg2[%c0, %c0_6, %c0_7, %c0_8] : memref<1x18x18x4xf32, #tpu.memory_space<vmem>>, vector<1x16x16x4xf32>
      %16 = vector.shape_cast %15 : vector<1x16x16x4xf32> to vector<16x16x4xf32>
      %17 = vector.shape_cast %16 : vector<16x16x4xf32> to vector<256x4xf32>
      %c0_9 = arith.constant 0 : index
      %c0_10 = arith.constant 0 : index
      %c0_11 = arith.constant 0 : index
      %18 = vector.load %arg3[%c0_9, %c0_10, %c0_11] : memref<9x4x8xf32, #tpu.memory_space<vmem>>, vector<1x4x8xf32>
      %19 = vector.shape_cast %18 : vector<1x4x8xf32> to vector<4x8xf32>
      %cst_12 = arith.constant dense<0.000000e+00> : vector<256x8xf32>
      %20 = tpu.matmul %17, %19, %cst_12 {dimension_numbers = #tpu.dot_dimension_numbers<[1], [0], [0], [1], [0, 0, 1, 1], [], []>} : vector<256x4xf32>, vector<4x8xf32>, vector<256x8xf32> -> vector<256x8xf32>
      %21 = arith.addf %14, %20 : vector<256x8xf32>
      %c0_13 = arith.constant 0 : index
      %c0_14 = arith.constant 0 : index
      %c1 = arith.constant 1 : index
      %c0_15 = arith.constant 0 : index
      %22 = vector.load %arg2[%c0_13, %c0_14, %c1, %c0_15] : memref<1x18x18x4xf32, #tpu.memory_space<vmem>>, vector<1x16x16x4xf32>
      %23 = vector.shape_cast %22 : vector<1x16x16x4xf32> to vector<16x16x4xf32>
      %24 = vector.shape_cast %23 : vector<16x16x4xf32> to vector<256x4xf32>
      %c1_16 = arith.constant 1 : index
      %c0_17 = arith.constant 0 : index
      %c0_18 = arith.constant 0 : index
      %25 = vector.load %arg3[%c1_16, %c0_17, %c0_18] : memref<9x4x8xf32, #tpu.memory_space<vmem>>, vector<1x4x8xf32>
      %26 = vector.shape_cast %25 : vector<1x4x8xf32> to vector<4x8xf32>
      %cst_19 = arith.constant dense<0.000000e+00> : vector<256x8xf32>
      %27 = tpu.matmul %24, %26, %cst_19 {dimension_numbers = #tpu.dot_dimension_numbers<[1], [0], [0], [1], [0, 0, 1, 1], [], []>} : vector<256x4xf32>, vector<4x8xf32>, vector<256x8xf32> -> vector<256x8xf32>
      %28 = arith.addf %21, %27 : vector<256x8xf32>
      %c0_20 = arith.constant 0 : index
      %c0_21 = arith.constant 0 : index
      %c2 = arith.constant 2 : index
      %c0_22 = arith.constant 0 : index
      %29 = vector.load %arg2[%c0_20, %c0_21, %c2, %c0_22] : memref<1x18x18x4xf32, #tpu.memory_space<vmem>>, vector<1x16x16x4xf32>
      %30 = vector.shape_cast %29 : vector<1x16x16x4xf32> to vector<16x16x4xf32>
      %31 = vector.shape_cast %30 : vector<16x16x4xf32> to vector<256x4xf32>
      %c2_23 = arith.constant 2 : index
      %c0_24 = arith.constant 0 : index
      %c0_25 = arith.constant 0 : index
      %32 = vector.load %arg3[%c2_23, %c0_24, %c0_25] : memref<9x4x8xf32, #tpu.memory_space<vmem>>, vector<1x4x8xf32>
      %33 = vector.shape_cast %32 : vector<1x4x8xf32> to vector<4x8xf32>
      %cst_26 = arith.constant dense<0.000000e+00> : vector<256x8xf32>
      %34 = tpu.matmul %31, %33, %cst_26 {dimension_numbers = #tpu.dot_dimension_numbers<[1], [0], [0], [1], [0, 0, 1, 1], [], []>} : vector<256x4xf32>, vector<4x8xf32>, vector<256x8xf32> -> vector<256x8xf32>
      %35 = arith.addf %28, %34 : vector<256x8xf32>
      %c0_27 = arith.constant 0 : index
      %c1_28 = arith.constant 1 : index
      %c0_29 = arith.constant 0 : index
      %c0_30 = arith.constant 0 : index
      %36 = vector.load %arg2[%c0_27, %c1_28, %c0_29, %c0_30] : memref<1x18x18x4xf32, #tpu.memory_space<vmem>>, vector<1x16x16x4xf32>
      %37 = vector.shape_cast %36 : vector<1x16x16x4xf32> to vector<16x16x4xf32>
      %38 = vector.shape_cast %37 : vector<16x16x4xf32> to vector<256x4xf32>
      %c3 = arith.constant 3 : index
      %c0_31 = arith.constant 0 : index
      %c0_32 = arith.constant 0 : index
      %39 = vector.load %arg3[%c3, %c0_31, %c0_32] : memref<9x4x8xf32, #tpu.memory_space<vmem>>, vector<1x4x8xf32>
      %40 = vector.shape_cast %39 : vector<1x4x8xf32> to vector<4x8xf32>
      %cst_33 = arith.constant dense<0.000000e+00> : vector<256x8xf32>
      %41 = tpu.matmul %38, %40, %cst_33 {dimension_numbers = #tpu.dot_dimension_numbers<[1], [0], [0], [1], [0, 0, 1, 1], [], []>} : vector<256x4xf32>, vector<4x8xf32>, vector<256x8xf32> -> vector<256x8xf32>
      %42 = arith.addf %35, %41 : vector<256x8xf32>
      %c0_34 = arith.constant 0 : index
      %c1_35 = arith.constant 1 : index
      %c1_36 = arith.constant 1 : index
      %c0_37 = arith.constant 0 : index
      %43 = vector.load %arg2[%c0_34, %c1_35, %c1_36, %c0_37] : memref<1x18x18x4xf32, #tpu.memory_space<vmem>>, vector<1x16x16x4xf32>
      %44 = vector.shape_cast %43 : vector<1x16x16x4xf32> to vector<16x16x4xf32>
      %45 = vector.shape_cast %44 : vector<16x16x4xf32> to vector<256x4xf32>
      %c4 = arith.constant 4 : index
      %c0_38 = arith.constant 0 : index
      %c0_39 = arith.constant 0 : index
      %46 = vector.load %arg3[%c4, %c0_38, %c0_39] : memref<9x4x8xf32, #tpu.memory_space<vmem>>, vector<1x4x8xf32>
      %47 = vector.shape_cast %46 : vector<1x4x8xf32> to vector<4x8xf32>
      %cst_40 = arith.constant dense<0.000000e+00> : vector<256x8xf32>
      %48 = tpu.matmul %45, %47, %cst_40 {dimension_numbers = #tpu.dot_dimension_numbers<[1], [0], [0], [1], [0, 0, 1, 1], [], []>} : vector<256x4xf32>, vector<4x8xf32>, vector<256x8xf32> -> vector<256x8xf32>
      %49 = arith.addf %42, %48 : vector<256x8xf32>
      %c0_41 = arith.constant 0 : index
      %c1_42 = arith.constant 1 : index
      %c2_43 = arith.constant 2 : index
      %c0_44 = arith.constant 0 : index
      %50 = vector.load %arg2[%c0_41, %c1_42, %c2_43, %c0_44] : memref<1x18x18x4xf32, #tpu.memory_space<vmem>>, vector<1x16x16x4xf32>
      %51 = vector.shape_cast %50 : vector<1x16x16x4xf32> to vector<16x16x4xf32>
      %52 = vector.shape_cast %51 : vector<16x16x4xf32> to vector<256x4xf32>
      %c5 = arith.constant 5 : index
      %c0_45 = arith.constant 0 : index
      %c0_46 = arith.constant 0 : index
      %53 = vector.load %arg3[%c5, %c0_45, %c0_46] : memref<9x4x8xf32, #tpu.memory_space<vmem>>, vector<1x4x8xf32>
      %54 = vector.shape_cast %53 : vector<1x4x8xf32> to vector<4x8xf32>
      %cst_47 = arith.constant dense<0.000000e+00> : vector<256x8xf32>
      %55 = tpu.matmul %52, %54, %cst_47 {dimension_numbers = #tpu.dot_dimension_numbers<[1], [0], [0], [1], [0, 0, 1, 1], [], []>} : vector<256x4xf32>, vector<4x8xf32>, vector<256x8xf32> -> vector<256x8xf32>
      %56 = arith.addf %49, %55 : vector<256x8xf32>
      %c0_48 = arith.constant 0 : index
      %c2_49 = arith.constant 2 : index
      %c0_50 = arith.constant 0 : index
      %c0_51 = arith.constant 0 : index
      %57 = vector.load %arg2[%c0_48, %c2_49, %c0_50, %c0_51] : memref<1x18x18x4xf32, #tpu.memory_space<vmem>>, vector<1x16x16x4xf32>
      %58 = vector.shape_cast %57 : vector<1x16x16x4xf32> to vector<16x16x4xf32>
      %59 = vector.shape_cast %58 : vector<16x16x4xf32> to vector<256x4xf32>
      %c6 = arith.constant 6 : index
      %c0_52 = arith.constant 0 : index
      %c0_53 = arith.constant 0 : index
      %60 = vector.load %arg3[%c6, %c0_52, %c0_53] : memref<9x4x8xf32, #tpu.memory_space<vmem>>, vector<1x4x8xf32>
      %61 = vector.shape_cast %60 : vector<1x4x8xf32> to vector<4x8xf32>
      %cst_54 = arith.constant dense<0.000000e+00> : vector<256x8xf32>
      %62 = tpu.matmul %59, %61, %cst_54 {dimension_numbers = #tpu.dot_dimension_numbers<[1], [0], [0], [1], [0, 0, 1, 1], [], []>} : vector<256x4xf32>, vector<4x8xf32>, vector<256x8xf32> -> vector<256x8xf32>
      %63 = arith.addf %56, %62 : vector<256x8xf32>
      %c0_55 = arith.constant 0 : index
      %c2_56 = arith.constant 2 : index
      %c1_57 = arith.constant 1 : index
      %c0_58 = arith.constant 0 : index
      %64 = vector.load %arg2[%c0_55, %c2_56, %c1_57, %c0_58] : memref<1x18x18x4xf32, #tpu.memory_space<vmem>>, vector<1x16x16x4xf32>
      %65 = vector.shape_cast %64 : vector<1x16x16x4xf32> to vector<16x16x4xf32>
      %66 = vector.shape_cast %65 : vector<16x16x4xf32> to vector<256x4xf32>
      %c7 = arith.constant 7 : index
      %c0_59 = arith.constant 0 : index
      %c0_60 = arith.constant 0 : index
      %67 = vector.load %arg3[%c7, %c0_59, %c0_60] : memref<9x4x8xf32, #tpu.memory_space<vmem>>, vector<1x4x8xf32>
      %68 = vector.shape_cast %67 : vector<1x4x8xf32> to vector<4x8xf32>
      %cst_61 = arith.constant dense<0.000000e+00> : vector<256x8xf32>
      %69 = tpu.matmul %66, %68, %cst_61 {dimension_numbers = #tpu.dot_dimension_numbers<[1], [0], [0], [1], [0, 0, 1, 1], [], []>} : vector<256x4xf32>, vector<4x8xf32>, vector<256x8xf32> -> vector<256x8xf32>
      %70 = arith.addf %63, %69 : vector<256x8xf32>
      %c0_62 = arith.constant 0 : index
      %c2_63 = arith.constant 2 : index
      %c2_64 = arith.constant 2 : index
      %c0_65 = arith.constant 0 : index
      %71 = vector.load %arg2[%c0_62, %c2_63, %c2_64, %c0_65] : memref<1x18x18x4xf32, #tpu.memory_space<vmem>>, vector<1x16x16x4xf32>
      %72 = vector.shape_cast %71 : vector<1x16x16x4xf32> to vector<16x16x4xf32>
      %73 = vector.shape_cast %72 : vector<16x16x4xf32> to vector<256x4xf32>
      %c8 = arith.constant 8 : index
      %c0_66 = arith.constant 0 : index
      %c0_67 = arith.constant 0 : index
      %74 = vector.load %arg3[%c8, %c0_66, %c0_67] : memref<9x4x8xf32, #tpu.memory_space<vmem>>, vector<1x4x8xf32>
      %75 = vector.shape_cast %74 : vector<1x4x8xf32> to vector<4x8xf32>
      %cst_68 = arith.constant dense<0.000000e+00> : vector<256x8xf32>
      %76 = tpu.matmul %73, %75, %cst_68 {dimension_numbers = #tpu.dot_dimension_numbers<[1], [0], [0], [1], [0, 0, 1, 1], [], []>} : vector<256x4xf32>, vector<4x8xf32>, vector<256x8xf32> -> vector<256x8xf32>
      %77 = arith.addf %70, %76 : vector<256x8xf32>
      %c0_69 = arith.constant 0 : index
      %c0_70 = arith.constant 0 : index
      %78 = vector.load %arg4[%c0_69, %c0_70] : memref<3x8xf32, #tpu.memory_space<vmem>>, vector<1x8xf32>
      %79 = vector.broadcast %78 : vector<1x8xf32> to vector<256x8xf32>
      %80 = arith.addf %77, %79 : vector<256x8xf32>
      %cst_71 = arith.constant 0.000000e+00 : f32
      %81 = vector.broadcast %cst_71 : f32 to vector<256x8xf32>
      %82 = arith.maximumf %80, %81 : vector<256x8xf32>
      %83 = arith.index_cast %arg1 : i32 to index
      %c0_72 = arith.constant 0 : index
      %c0_73 = arith.constant 0 : index
      %84 = vector.load %arg6[%83, %c0_72, %c0_73] : memref<2x256x8xf32, #tpu.memory_space<vmem>>, vector<1x256x8xf32>
      %85 = vector.shape_cast %84 : vector<1x256x8xf32> to vector<256x8xf32>
      %86 = vector.shape_cast %82 : vector<256x8xf32> to vector<1x256x8xf32>
      tpu.vector_store %arg6[%83, %c0_72, %c0_73], %86 {strides = array<i32>} : memref<2x256x8xf32, #tpu.memory_space<vmem>>, vector<1x256x8xf32>,
      %c0_74 = arith.constant 0 : index
      %c0_75 = arith.constant 0 : index
      %87 = vector.load %arg7[%c0_74, %c0_75] : memref<2x8xf32, #tpu.memory_space<vmem>>, vector<1x8xf32>
      %cst_76 = arith.constant dense<0.000000e+00> : vector<8xf32>
      %88 = vector.multi_reduction <add>, %82, %cst_76 [0] : vector<256x8xf32> to vector<8xf32>
      %89 = vector.shape_cast %88 : vector<8xf32> to vector<1x8xf32>
      %90 = arith.addf %87, %89 : vector<1x8xf32>
      %c0_77 = arith.constant 0 : index
      %c0_78 = arith.constant 0 : index
      %91 = vector.load %arg7[%c0_77, %c0_78] : memref<2x8xf32, #tpu.memory_space<vmem>>, vector<1x8xf32>
      tpu.vector_store %arg7[%c0_77, %c0_78], %90 {strides = array<i32>} : memref<2x8xf32, #tpu.memory_space<vmem>>, vector<1x8xf32>,
    } else {
    }
    %c1_i32 = arith.constant 1 : i32
    %8 = arith.cmpi eq, %arg0, %c1_i32 : i32
    %9 = arith.extui %8 : i1 to i32
    %c0_i32_4 = arith.constant 0 : i32
    %10 = arith.cmpi ne, %9, %c0_i32_4 : i32
    scf.if %10 {
      %c0 = arith.constant 0 : index
      %c0_6 = arith.constant 0 : index
      %14 = vector.load %arg7[%c0, %c0_6] : memref<2x8xf32, #tpu.memory_space<vmem>>, vector<1x8xf32>
      %cst = arith.constant 0.001953125 : f32
      %15 = vector.broadcast %cst : f32 to vector<1x8xf32>
      %16 = arith.mulf %14, %15 : vector<1x8xf32>
      %17 = arith.index_cast %arg1 : i32 to index
      %c0_7 = arith.constant 0 : index
      %c0_8 = arith.constant 0 : index
      %18 = vector.load %arg6[%17, %c0_7, %c0_8] : memref<2x256x8xf32, #tpu.memory_space<vmem>>, vector<1x256x8xf32>
      %19 = vector.shape_cast %18 : vector<1x256x8xf32> to vector<256x8xf32>
      %20 = vector.broadcast %16 : vector<1x8xf32> to vector<256x8xf32>
      %21 = arith.subf %19, %20 : vector<256x8xf32>
      %c1 = arith.constant 1 : index
      %c0_9 = arith.constant 0 : index
      %22 = vector.load %arg7[%c1, %c0_9] : memref<2x8xf32, #tpu.memory_space<vmem>>, vector<1x8xf32>
      %23 = arith.mulf %21, %21 : vector<256x8xf32>
      %cst_10 = arith.constant dense<0.000000e+00> : vector<8xf32>
      %24 = vector.multi_reduction <add>, %23, %cst_10 [0] : vector<256x8xf32> to vector<8xf32>
      %25 = vector.shape_cast %24 : vector<8xf32> to vector<1x8xf32>
      %26 = arith.addf %22, %25 : vector<1x8xf32>
      %c1_11 = arith.constant 1 : index
      %c0_12 = arith.constant 0 : index
      %27 = vector.load %arg7[%c1_11, %c0_12] : memref<2x8xf32, #tpu.memory_space<vmem>>, vector<1x8xf32>
      tpu.vector_store %arg7[%c1_11, %c0_12], %26 {strides = array<i32>} : memref<2x8xf32, #tpu.memory_space<vmem>>, vector<1x8xf32>,
    } else {
    }
    %c2_i32 = arith.constant 2 : i32
    %11 = arith.cmpi eq, %arg0, %c2_i32 : i32
    %12 = arith.extui %11 : i1 to i32
    %c0_i32_5 = arith.constant 0 : i32
    %13 = arith.cmpi ne, %12, %c0_i32_5 : i32
    scf.if %13 {
      %c0 = arith.constant 0 : index
      %c0_6 = arith.constant 0 : index
      %14 = vector.load %arg7[%c0, %c0_6] : memref<2x8xf32, #tpu.memory_space<vmem>>, vector<1x8xf32>
      %cst = arith.constant 0.001953125 : f32
      %15 = vector.broadcast %cst : f32 to vector<1x8xf32>
      %16 = arith.mulf %14, %15 : vector<1x8xf32>
      %c1 = arith.constant 1 : index
      %c0_7 = arith.constant 0 : index
      %17 = vector.load %arg7[%c1, %c0_7] : memref<2x8xf32, #tpu.memory_space<vmem>>, vector<1x8xf32>
      %cst_8 = arith.constant 0.001953125 : f32
      %18 = vector.broadcast %cst_8 : f32 to vector<1x8xf32>
      %19 = arith.mulf %17, %18 : vector<1x8xf32>
      %cst_9 = arith.constant 9.99999974E-6 : f32
      %20 = vector.broadcast %cst_9 : f32 to vector<1x8xf32>
      %21 = arith.addf %19, %20 : vector<1x8xf32>
      %22 = math.rsqrt %21 : vector<1x8xf32>
      %c1_10 = arith.constant 1 : index
      %c0_11 = arith.constant 0 : index
      %23 = vector.load %arg4[%c1_10, %c0_11] : memref<3x8xf32, #tpu.memory_space<vmem>>, vector<1x8xf32>
      %24 = arith.mulf %23, %22 : vector<1x8xf32>
      %c2 = arith.constant 2 : index
      %c0_12 = arith.constant 0 : index
      %25 = vector.load %arg4[%c2, %c0_12] : memref<3x8xf32, #tpu.memory_space<vmem>>, vector<1x8xf32>
      %26 = arith.mulf %16, %24 : vector<1x8xf32>
      %27 = arith.subf %25, %26 : vector<1x8xf32>
      %28 = arith.index_cast %arg1 : i32 to index
      %c0_13 = arith.constant 0 : index
      %c0_14 = arith.constant 0 : index
      %29 = vector.load %arg6[%28, %c0_13, %c0_14] : memref<2x256x8xf32, #tpu.memory_space<vmem>>, vector<1x256x8xf32>
      %30 = vector.shape_cast %29 : vector<1x256x8xf32> to vector<256x8xf32>
      %31 = vector.broadcast %24 : vector<1x8xf32> to vector<256x8xf32>
      %32 = arith.mulf %30, %31 : vector<256x8xf32>
      %33 = vector.broadcast %27 : vector<1x8xf32> to vector<256x8xf32>
      %34 = arith.addf %32, %33 : vector<256x8xf32>
      %35 = vector.shape_cast %34 : vector<256x8xf32> to vector<16x16x8xf32>
      %36 = vector.shape_cast %35 : vector<16x16x8xf32> to vector<8x2x16x8xf32>
      %cst_15 = arith.constant dense<0xFF800000> : vector<8x16x8xf32>
      %37 = vector.multi_reduction <maximumf>, %36, %cst_15 [1] : vector<8x2x16x8xf32> to vector<8x16x8xf32>
      %38 = vector.shape_cast %37 : vector<8x16x8xf32> to vector<8x8x2x8xf32>
      %cst_16 = arith.constant dense<0xFF800000> : vector<8x8x8xf32>
      %39 = vector.multi_reduction <maximumf>, %38, %cst_16 [2] : vector<8x8x2x8xf32> to vector<8x8x8xf32>
      %c0_17 = arith.constant 0 : index
      %c0_18 = arith.constant 0 : index
      %c0_19 = arith.constant 0 : index
      %c0_20 = arith.constant 0 : index
      %40 = vector.load %arg5[%c0_17, %c0_18, %c0_19, %c0_20] : memref<1x8x8x8xf32, #tpu.memory_space<vmem>>, vector<1x8x8x8xf32>
      %41 = vector.shape_cast %40 : vector<1x8x8x8xf32> to vector<8x8x8xf32>
      %42 = vector.shape_cast %39 : vector<8x8x8xf32> to vector<1x8x8x8xf32>
      tpu.vector_store %arg5[%c0_17, %c0_18, %c0_19, %c0_20], %42 {strides = array<i32>} : memref<1x8x8x8xf32, #tpu.memory_space<vmem>>, vector<1x8x8x8xf32>,
    } else {
    }
    return
  }
  func.func @transform_0(%arg0: i32, %arg1: i32) -> (i32, i32, i32, i32) {
    %c0_i32 = arith.constant 0 : i32
    %0 = arith.cmpi eq, %arg0, %c0_i32 : i32
    %c0_i32_0 = arith.constant 0 : i32
    %1 = arith.select %0, %arg1, %c0_i32_0 : i32
    %c0_i32_1 = arith.constant 0 : i32
    %c0_i32_2 = arith.constant 0 : i32
    %c0_i32_3 = arith.constant 0 : i32
    %c0_i32_4 = arith.constant 0 : i32
    return %1, %c0_i32_1, %c0_i32_2, %c0_i32_3 : i32, i32, i32, i32
  }
  func.func @transform_1(%arg0: i32, %arg1: i32) -> (i32, i32, i32) {
    %c0_i32 = arith.constant 0 : i32
    %c0_i32_0 = arith.constant 0 : i32
    %c0_i32_1 = arith.constant 0 : i32
    %c0_i32_2 = arith.constant 0 : i32
    return %c0_i32, %c0_i32_0, %c0_i32_1 : i32, i32, i32
  }
  func.func @transform_2(%arg0: i32, %arg1: i32) -> (i32, i32) {
    %c0_i32 = arith.constant 0 : i32
    %c0_i32_0 = arith.constant 0 : i32
    %c0_i32_1 = arith.constant 0 : i32
    return %c0_i32, %c0_i32_0 : i32, i32
  }
  func.func @transform_3(%arg0: i32, %arg1: i32) -> (i32, i32, i32, i32) {
    %c2_i32 = arith.constant 2 : i32
    %0 = arith.cmpi eq, %arg0, %c2_i32 : i32
    %c0_i32 = arith.constant 0 : i32
    %1 = arith.select %0, %arg1, %c0_i32 : i32
    %c0_i32_0 = arith.constant 0 : i32
    %c0_i32_1 = arith.constant 0 : i32
    %c0_i32_2 = arith.constant 0 : i32
    %c0_i32_3 = arith.constant 0 : i32
    return %1, %c0_i32_0, %c0_i32_1, %c0_i32_2 : i32, i32, i32, i32
  }
}

</mosaic_0001>

<llo_original>
// kernel: complete_conv_layer.1
$region0: #{complete_conv_layer.1}
  #allocation0 [shape = 'u32[]', space=smem, size = 0x4, offset = 0x4, fixed_abs, tag = 'smem constant byte address 0x4 - core index']
  #allocation1 [shape = 'u32[144,128]{1,0:T(1,128)}', space=vmem, size = 0x12000, scoped, tag = 'internal scratch']
  #allocation2 [shape = 'f32[2,256,8]{2,1,0:T(8,128)}', space=vmem, size = 0x40000, scoped, tag = 'scratch operand']
  #allocation3 [shape = 'f32[2,8]{1,0:T(2,128)}', space=vmem, size = 0x400, scoped, tag = 'scratch operand']
  %s0 = inlined_call_operand.vmem [shape: f32[2,18,18,4], index: 0, kind: input, shape index: {}]
  %s1 = inlined_call_operand.vmem [shape: f32[9,4,8], index: 1, kind: input, shape index: {}]
  %s2 = inlined_call_operand.vmem [shape: f32[3,8], index: 2, kind: input, shape index: {}]
  %s3 = inlined_call_operand.vmem [shape: f32[2,8,8,8], index: 3, kind: output, shape index: {}]
  %s4 = sld [smem:[#allocation0]]
  $region61: #{complete_conv_layer.1} parent=0
    _
  %s6 = ssub.s32 1, %s4
  %s7 = scalar_select 0, %s6, %s4
  loop: start=0, step=1, limit=8
  $region2: #{complete_conv_layer.1} parent=0 // loop_pre_header
    _
  $region3: #{complete_conv_layer.1} parent=0 // loop_header
    %s9 = sphi 0, %s13
    %p10 = scmp.ge.s32.totalorder %s9, 8
    %s16 = sphi 0, %s28
    %s17 = sphi 0, %s24
    %s18 = sphi 0, %s16
    %s19 = sphi 0, %s17
    %s20 = sphi 0, %s18
    %s21 = sphi 0, %s19
    %s35 = sphi 0, %s37
    %s38 = sphi 0, %s35
    %s39 = sphi 0, %s38
    %s55 = sphi 0, %s39
    %s59 = sphi 0, %s59
    %s61 = sphi 0, %s59
    %s62 = sphi 0, %s61
    %s76 = sphi 0, %s62
    %s80 = sphi 0, %s80
    %s82 = sphi 0, %s80
    %s83 = sphi 0, %s82
    %s97 = sphi 0, %s83
    %s107 = sphi 0, %s109
    %s110 = sphi 0, %s107
    %s111 = sphi 0, %s110
    %s127 = sphi 0, %s111
  $region4: #{complete_conv_layer.1} parent=0 // loop_header_branch
    %12 = sbr.rel (%p10) target = $region8
  $region5: #{complete_conv_layer.1} parent=0 // loop_body
    %s14 = ssub.s32 %s9, 1
    %s15 = ssub.s32 %s9, 2
    %s22 = sadd.s32 1, %s17
    %p23 = scmp.ge.s32.totalorder %s22, 2
    %s24 = scalar_select %p23, 0, %s22
    %s25 = sadd.s32 1, %s16
    %s26 = scalar_select %p23, %s25, %s16
    %p27 = scmp.ge.s32.totalorder %s26, 3
    %s28 = scalar_select %p27, 0, %s26
    %p29 = scmp.eq.s32.totalorder %s16, 0
    %s30 = scalar_select %p29, %s17, 0
    %p31 = scmp.eq.s32.totalorder %s28, 0
    %s32 = scalar_select %p31, %s24, 0
    %s33 = ssub.s32 %s30, %s32
    %p34 = scmp.eq.s32.totalorder %s33, 0
    %s36 = sadd.s32 %s35, 1
    %s37 = scalar_select %p34, %s35, %s36
    %p40 = pneg %p34
    %p41 = scmp.eq.s32.totalorder %s9, 5
    %p42 = por %p40, %p41
    %p43 = scmp.ne.s32.totalorder %s35, %s38
    %p44 = scmp.eq.s32.totalorder %s9, 0
    %p45 = por %p43, %p44
    %p46 = scmp.ne.s32.totalorder %s35, %s38
    %p47 = scmp.eq.s32.totalorder %s14, 5
    %p48 = por %p46, %p47
    %p49 = scmp.ne.s32.totalorder %s38, %s39
    %p50 = scmp.eq.s32.totalorder %s14, 0
    %p51 = por %p49, %p50
    %p52 = scmp.ne.s32.totalorder %s38, %s39
    %p53 = scmp.eq.s32.totalorder %s15, 5
    %p54 = por %p52, %p53
    %p56 = scmp.ne.s32.totalorder %s39, %s55
    %p57 = scmp.eq.s32.totalorder %s15, 0
    %p58 = por %p56, %p57
    %s60 = sadd.s32 %s59, 1
    %p63 = scmp.eq.s32.totalorder %s9, 5
    %p64 = scmp.ne.s32.totalorder %s59, %s61
    %p65 = scmp.eq.s32.totalorder %s9, 0
    %p66 = por %p64, %p65
    %p67 = scmp.ne.s32.totalorder %s59, %s61
    %p68 = scmp.eq.s32.totalorder %s14, 5
    %p69 = por %p67, %p68
    %p70 = scmp.ne.s32.totalorder %s61, %s62
    %p71 = scmp.eq.s32.totalorder %s14, 0
    %p72 = por %p70, %p71
    %p73 = scmp.ne.s32.totalorder %s61, %s62
    %p74 = scmp.eq.s32.totalorder %s15, 5
    %p75 = por %p73, %p74
    %p77 = scmp.ne.s32.totalorder %s62, %s76
    %p78 = scmp.eq.s32.totalorder %s15, 0
    %p79 = por %p77, %p78
    %s81 = sadd.s32 %s80, 1
    %p84 = scmp.eq.s32.totalorder %s9, 5
    %p85 = scmp.ne.s32.totalorder %s80, %s82
    %p86 = scmp.eq.s32.totalorder %s9, 0
    %p87 = por %p85, %p86
    %p88 = scmp.ne.s32.totalorder %s80, %s82
    %p89 = scmp.eq.s32.totalorder %s14, 5
    %p90 = por %p88, %p89
    %p91 = scmp.ne.s32.totalorder %s82, %s83
    %p92 = scmp.eq.s32.totalorder %s14, 0
    %p93 = por %p91, %p92
    %p94 = scmp.ne.s32.totalorder %s82, %s83
    %p95 = scmp.eq.s32.totalorder %s15, 5
    %p96 = por %p94, %p95
    %p98 = scmp.ne.s32.totalorder %s83, %s97
    %p99 = scmp.eq.s32.totalorder %s15, 0
    %p100 = por %p98, %p99
    %p101 = scmp.eq.s32.totalorder %s16, 2
    %s102 = scalar_select %p101, %s17, 0
    %p103 = scmp.eq.s32.totalorder %s28, 2
    %s104 = scalar_select %p103, %s24, 0
    %s105 = ssub.s32 %s102, %s104
    %p106 = scmp.eq.s32.totalorder %s105, 0
    %s108 = sadd.s32 %s107, 1
    %s109 = scalar_select %p106, %s107, %s108
    %p112 = pneg %p106
    %p113 = scmp.eq.s32.totalorder %s9, 5
    %p114 = por %p112, %p113
    %p115 = scmp.ne.s32.totalorder %s107, %s110
    %p116 = scmp.eq.s32.totalorder %s9, 0
    %p117 = por %p115, %p116
    %p118 = scmp.ne.s32.totalorder %s107, %s110
    %p119 = scmp.eq.s32.totalorder %s14, 5
    %p120 = por %p118, %p119
    %p121 = scmp.ne.s32.totalorder %s110, %s111
    %p122 = scmp.eq.s32.totalorder %s14, 0
    %p123 = por %p121, %p122
    %p124 = scmp.ne.s32.totalorder %s110, %s111
    %p125 = scmp.eq.s32.totalorder %s15, 5
    %p126 = por %p124, %p125
    %p128 = scmp.ne.s32.totalorder %s111, %s127
    %p129 = scmp.eq.s32.totalorder %s15, 0
    %p130 = por %p128, %p129
    %p131 = scmp.le.s32.totalorder 1, %s9
    %p132 = scmp.lt.s32.totalorder %s9, 7
    %p133 = pnand %p131, %p132
    %p134 = pneg %p133
    // Predicated region
    $region9: #{complete_conv_layer.1} parent=5 // pred_check
      _
    $region10: #{complete_conv_layer.1} parent=5 // pred_check_branch
      %136 = sbr.rel (%p133) target = $region12
    $region11: #{complete_conv_layer.1} parent=5 // pred_region
      %s137 = ssub.s32 %s9, 1
      // Predicated region
      $region13: #{complete_conv_layer.1} parent=11 // pred_check
        %p138 = pneg %p72
      $region14: #{complete_conv_layer.1} parent=11 // pred_check_branch
        %140 = sbr.rel (%p138) target = $region16
      $region15: #{complete_conv_layer.1} parent=11 // pred_region
        _
      $region16: #{complete_conv_layer.1} parent=11 // pred_fallthru
        _
      // Predicated region
      $region17: #{complete_conv_layer.1} parent=11 // pred_check
        %p141 = pneg %p93
      $region18: #{complete_conv_layer.1} parent=11 // pred_check_branch
        %143 = sbr.rel (%p141) target = $region20
      $region19: #{complete_conv_layer.1} parent=11 // pred_region
        _
      $region20: #{complete_conv_layer.1} parent=11 // pred_fallthru
        _
    $region12: #{complete_conv_layer.1} parent=5 // pred_fallthru
      _
    %p144 = scmp.lt.s32.totalorder %s9, 6
    // Predicated region
    $region21: #{complete_conv_layer.1} parent=5 // pred_check
      %p145 = pneg %p144
    $region22: #{complete_conv_layer.1} parent=5 // pred_check_branch
      %147 = sbr.rel (%p145) target = $region24
    $region23: #{complete_conv_layer.1} parent=5 // pred_region
      // Predicated region
      $region25: #{complete_conv_layer.1} parent=23 // pred_check
        %p148 = pneg %p45
      $region26: #{complete_conv_layer.1} parent=23 // pred_check_branch
        %150 = sbr.rel (%p148) target = $region28
      $region27: #{complete_conv_layer.1} parent=23 // pred_region
        %p151 = scmp.eq.s32.totalorder %s16, 0
        %s152 = scalar_select %p151, %s17, 0
        %p153 = scmp.lt.s32.totalorder %s152, 1
        %s154 = scalar_select %p153, %s152, 1
        %s155 = smul.addr %s154, 54
        %s156 = smul.addr %s155, 8
        %s157 = scalar_lea.vmem %s0, %s156
        %p158 = scmp.eq.s32.totalorder %s16, 0
        %s159 = scalar_select %p158, %s17, 0
      $region28: #{complete_conv_layer.1} parent=23 // pred_fallthru
        _
    $region24: #{complete_conv_layer.1} parent=5 // pred_fallthru
      _
    %p160 = scmp.le.s32.totalorder 1, %s9
    %p161 = scmp.lt.s32.totalorder %s9, 7
    %p162 = pnand %p160, %p161
    %p163 = pneg %p162
    // Predicated region
    $region29: #{complete_conv_layer.1} parent=5 // pred_check
      _
    $region30: #{complete_conv_layer.1} parent=5 // pred_check_branch
      %165 = sbr.rel (%p162) target = $region32
    $region31: #{complete_conv_layer.1} parent=5 // pred_region
      %s166 = ssub.s32 %s9, 1
      %p167 = scmp.eq.s32.totalorder %s18, 0
      %s168 = scalar_select %p167, %s19, 0
      %p169 = scmp.lt.s32.totalorder %s168, 1
      %s170 = scalar_select %p169, %s168, 1
      %s171 = smul.addr %s170, 54
      %s172 = smul.addr %s171, 8
      %s173 = scalar_lea.vmem %s0, %s172
      %p174 = pneg %p51
      %p175 = pneg %p48
      %p176 = pneg %p72
      %p177 = pneg %p69
      %p178 = pneg %p93
      %p179 = pneg %p90
      %p180 = pneg %p123
      %p181 = pneg %p120
      %p182 = scmp.eq.s32.totalorder %s18, 2
      %s183 = scalar_select %p182, %s19, 0
      %p184 = scmp.lt.s32.totalorder %s183, 1
      %s185 = scalar_select %p184, %s183, 1
      %s186 = smul.addr %s185, 8
      %s187 = smul.addr %s186, 8
      %s188 = scalar_lea.vmem %s3, %s187
      %p189 = scmp.eq.s32.totalorder %s18, 0
      %s190 = scalar_select %p189, %s19, 0
      %p191 = scmp.lt.s32.totalorder %s190, 1
      %s192 = scalar_select %p191, %s190, 1
      %s193 = smul.addr %s192, 54
      %s194 = smul.addr %s193, 8
      %s195 = scalar_lea.vmem %s0, %s194
      %p196 = scmp.eq.s32.totalorder %s18, 0
      %s197 = scalar_select %p196, %s19, 0
      %p198 = scmp.eq.s32.totalorder %s18, 2
      %s199 = scalar_select %p198, %s19, 0
      %p200 = scmp.lt.s32.totalorder %s199, 1
      %s201 = scalar_select %p200, %s199, 1
      %s202 = smul.addr %s201, 8
      %s203 = smul.addr %s202, 8
      %s204 = scalar_lea.vmem %s3, %s203
      %p205 = scmp.eq.s32.totalorder %s18, 2
      %s206 = scalar_select %p205, %s19, 0
      %p207 = scmp.eq.s32.totalorder %s18, 0
      %p208 = scmp.eq.s32.totalorder %s19, 0
      %p209 = pnand %p207, %p208
      %p210 = pneg %p209
      // Predicated region
      $region33: #{complete_conv_layer.1} parent=31 // pred_check
        _
      $region34: #{complete_conv_layer.1} parent=31 // pred_check_branch
        %212 = sbr.rel (%p209) target = $region36
      $region35: #{complete_conv_layer.1} parent=31 // pred_region
        %vm213 = vcmask 58368
        %214 = vst.msk [vmem:[#allocation3] sm:$0x3] %vm213, 0.0
      $region36: #{complete_conv_layer.1} parent=31 // pred_fallthru
        _
      // Predicated region
      $region37: #{complete_conv_layer.1} parent=31 // pred_check
        %p215 = pneg %p207
      $region38: #{complete_conv_layer.1} parent=31 // pred_check_branch
        %217 = sbr.rel (%p215) target = $region40
      $region39: #{complete_conv_layer.1} parent=31 // pred_region
        %v218 = vld [vmem:[%s195] sm:$0xff]
        %v219 = vld [vmem:[%s195 + $0x8] sm:$0xff]
        %v220 = vld [vmem:[%s195 + $0x18] sm:$0xff]
        %v221 = vld [vmem:[%s195 + $0x20] sm:$0xff]
        %v222 = vld [vmem:[%s195 + $0x30] sm:$0xff]
        %v223 = vld [vmem:[%s195 + $0x38] sm:$0xff]
        %v224 = vld [vmem:[%s195 + $0x48] sm:$0xff]
        %v225 = vld [vmem:[%s195 + $0x50] sm:$0xff]
        %v226 = vld [vmem:[%s195 + $0x60] sm:$0xff]
        %v227 = vld [vmem:[%s195 + $0x68] sm:$0xff]
        %v228 = vld [vmem:[%s195 + $0x78] sm:$0xff]
        %v229 = vld [vmem:[%s195 + $0x80] sm:$0xff]
        %v230 = vld [vmem:[%s195 + $0x90] sm:$0xff]
        %v231 = vld [vmem:[%s195 + $0x98] sm:$0xff]
        %v232 = vld [vmem:[%s195 + $0xa8] sm:$0xff]
        %v233 = vld [vmem:[%s195 + $0xb0] sm:$0xff]
        %v234 = vld [vmem:[%s195 + $0xc0] sm:$0xff]
        %v235 = vld [vmem:[%s195 + $0xc8] sm:$0xff]
        %v236 = vld [vmem:[%s195 + $0xd8] sm:$0xff]
        %v237 = vld [vmem:[%s195 + $0xe0] sm:$0xff]
        %v238 = vld [vmem:[%s195 + $0xf0] sm:$0xff]
        %v239 = vld [vmem:[%s195 + $0xf8] sm:$0xff]
        %v240 = vld [vmem:[%s195 + $0x108] sm:$0xff]
        %v241 = vld [vmem:[%s195 + $0x110] sm:$0xff]
        %v242 = vld [vmem:[%s195 + $0x120] sm:$0xff]
        %v243 = vld [vmem:[%s195 + $0x128] sm:$0xff]
        %v244 = vld [vmem:[%s195 + $0x138] sm:$0xff]
        %v245 = vld [vmem:[%s195 + $0x140] sm:$0xff]
        %v246 = vld [vmem:[%s195 + $0x150] sm:$0xff]
        %v247 = vld [vmem:[%s195 + $0x158] sm:$0xff]
        %v248 = vld [vmem:[%s195 + $0x168] sm:$0xff]
        %v249 = vld [vmem:[%s195 + $0x170] sm:$0xff]
        %v250 = vld [vmem:[%s1] sm:$0xf]
        %v251 = vld [vmem:[%s195 + $0x1] sm:$0xff]
        %v252 = vld [vmem:[%s195 + $0x9] sm:$0xff]
        %v253 = vld [vmem:[%s195 + $0x19] sm:$0xff]
        %v254 = vld [vmem:[%s195 + $0x21] sm:$0xff]
        %v255 = vld [vmem:[%s195 + $0x31] sm:$0xff]
        %v256 = vld [vmem:[%s195 + $0x39] sm:$0xff]
        %v257 = vld [vmem:[%s195 + $0x49] sm:$0xff]
        %v258 = vld [vmem:[%s195 + $0x51] sm:$0xff]
        %v259 = vld [vmem:[%s195 + $0x61] sm:$0xff]
        %v260 = vld [vmem:[%s195 + $0x69] sm:$0xff]
        %v261 = vld [vmem:[%s195 + $0x79] sm:$0xff]
        %v262 = vld [vmem:[%s195 + $0x81] sm:$0xff]
        %v263 = vld [vmem:[%s195 + $0x91] sm:$0xff]
        %v264 = vld [vmem:[%s195 + $0x99] sm:$0xff]
        %v265 = vld [vmem:[%s195 + $0xa9] sm:$0xff]
        %v266 = vld [vmem:[%s195 + $0xb1] sm:$0xff]
        %v267 = vld [vmem:[%s195 + $0xc1] sm:$0xff]
        %v268 = vld [vmem:[%s195 + $0xc9] sm:$0xff]
        %v269 = vld [vmem:[%s195 + $0xd9] sm:$0xff]
        %v270 = vld [vmem:[%s195 + $0xe1] sm:$0xff]
        %v271 = vld [vmem:[%s195 + $0xf1] sm:$0xff]
        %v272 = vld [vmem:[%s195 + $0xf9] sm:$0xff]
        %v273 = vld [vmem:[%s195 + $0x109] sm:$0xff]
        %v274 = vld [vmem:[%s195 + $0x111] sm:$0xff]
        %v275 = vld [vmem:[%s195 + $0x121] sm:$0xff]
        %v276 = vld [vmem:[%s195 + $0x129] sm:$0xff]
        %v277 = vld [vmem:[%s195 + $0x139] sm:$0xff]
        %v278 = vld [vmem:[%s195 + $0x141] sm:$0xff]
        %v279 = vld [vmem:[%s195 + $0x151] sm:$0xff]
        %v280 = vld [vmem:[%s195 + $0x159] sm:$0xff]
        %v281 = vld [vmem:[%s195 + $0x169] sm:$0xff]
        %v282 = vld [vmem:[%s195 + $0x171] sm:$0xff]
        %s283 = scalar_lea.vmem %s1, 4
        %v284 = vld [vmem:[%s283] sm:$0xf]
        %vm285 = vcmask 31744
        %v287 = vsel %vm285, %v251, 0
        %v290 = vsel %vm285, %v252, 0
        %v293 = vsel %vm285, %v253, 0
        %v296 = vsel %vm285, %v254, 0
        %v299 = vsel %vm285, %v255, 0
        %v302 = vsel %vm285, %v256, 0
        %v305 = vsel %vm285, %v257, 0
        %v308 = vsel %vm285, %v258, 0
        %v311 = vsel %vm285, %v259, 0
        %v314 = vsel %vm285, %v260, 0
        %v317 = vsel %vm285, %v261, 0
        %v320 = vsel %vm285, %v262, 0
        %v323 = vsel %vm285, %v263, 0
        %v326 = vsel %vm285, %v264, 0
        %v329 = vsel %vm285, %v265, 0
        %v332 = vsel %vm285, %v266, 0
        %v335 = vsel %vm285, %v267, 0
        %v338 = vsel %vm285, %v268, 0
        %v341 = vsel %vm285, %v269, 0
        %v344 = vsel %vm285, %v270, 0
        %v347 = vsel %vm285, %v271, 0
        %v350 = vsel %vm285, %v272, 0
        %v353 = vsel %vm285, %v273, 0
        %v356 = vsel %vm285, %v274, 0
        %v359 = vsel %vm285, %v275, 0
        %v362 = vsel %vm285, %v276, 0
        %v365 = vsel %vm285, %v277, 0
        %v368 = vsel %vm285, %v278, 0
        %v371 = vsel %vm285, %v279, 0
        %v374 = vsel %vm285, %v280, 0
        %v377 = vsel %vm285, %v281, 0
        %v380 = vsel %vm285, %v282, 0
        %vm382 = vcmask 1043456
        %v384 = vsel %vm382, %v284, 0
        %386 = vmatprep.subr.mxu0 0.0
        %387 = vmatpush1.msra.mxu0 %v384
        %388 = vmatprep.subr.mxu0 0.0
        %389 = vmatpush1.msra.mxu0 0.0
        %390 = vmatprep.subr.mxu0 0.0
        %391 = vmatpush1.msra.mxu0 0.0
        %392 = vmatprep.subr.mxu0 0.0
        %393 = vmatpush1.msra.mxu0 0.0
        %394 = vmatprep.subr.mxu0 0.0
        %395 = vmatpush1.msra.mxu0 0.0
        %396 = vmatprep.subr.mxu0 0.0
        %397 = vmatpush1.msra.mxu0 0.0
        %398 = vmatprep.subr.mxu0 0.0
        %399 = vmatpush1.msra.mxu0 0.0
        %400 = vmatprep.subr.mxu0 0.0
        %401 = vmatpush1.msra.mxu0 0.0
        %402 = vmatprep.subr.mxu0 0.0
        %403 = vmatpush1.msra.mxu0 0.0
        %404 = vmatprep.subr.mxu0 0.0
        %405 = vmatpush1.msra.mxu0 0.0
        %406 = vmatprep.subr.mxu0 0.0
        %407 = vmatpush1.msra.mxu0 0.0
        %408 = vmatprep.subr.mxu0 0.0
        %409 = vmatpush1.msra.mxu0 0.0
        %410 = vmatprep.subr.mxu0 0.0
        %411 = vmatpush1.msra.mxu0 0.0
        %412 = vmatprep.subr.mxu0 0.0
        %413 = vmatpush1.msra.mxu0 0.0
        %414 = vmatprep.subr.mxu0 0.0
        %415 = vmatpush1.msra.mxu0 0.0
        %416 = vmatprep.subr.mxu0 0.0
        %417 = vmatpush1.msra.mxu0 0.0
        %418 = vmatprep.subr.mxu0 0.0
        %419 = vmatpush1.msra.mxu0 0.0
        %420 = vmatprep.subr.mxu0 0.0
        %421 = vmatpush1.msra.mxu0 0.0
        %422 = vmatprep.subr.mxu0 0.0
        %423 = vmatpush1.msra.mxu0 0.0
        %424 = vmatprep.subr.mxu0 0.0
        %425 = vmatpush1.msra.mxu0 0.0
        %426 = vmatprep.subr.mxu0 0.0
        %427 = vmatpush1.msra.mxu0 0.0
        %428 = vmatprep.subr.mxu0 0.0
        %429 = vmatpush1.msra.mxu0 0.0
        %430 = vmatprep.subr.mxu0 0.0
        %431 = vmatpush1.msra.mxu0 0.0
        %432 = vmatprep.subr.mxu0 0.0
        %433 = vmatpush1.msra.mxu0 0.0
        %434 = vmatprep.subr.mxu0 0.0
        %435 = vmatpush1.msra.mxu0 0.0
        %436 = vmatprep.subr.mxu0 0.0
        %437 = vmatpush1.msra.mxu0 0.0
        %438 = vmatprep.subr.mxu0 0.0
        %439 = vmatpush1.msra.mxu0 0.0
        %440 = vmatprep.subr.mxu0 0.0
        %441 = vmatpush1.msra.mxu0 0.0
        %442 = vmatprep.subr.mxu0 0.0
        %443 = vmatpush1.msra.mxu0 0.0
        %444 = vmatprep.subr.mxu0 0.0
        %445 = vmatpush1.msra.mxu0 0.0
        %446 = vmatprep.subr.mxu0 0.0
        %447 = vmatpush1.msra.mxu0 0.0
        %448 = vmatprep.subr.mxu0 0.0
        %449 = vmatpush1.msra.mxu0 0.0
        %450 = vmatprep.mubr.f32.mxu0 0.0
        %451 = vmatmul.mubr.f32.gmra.mrb[0].mxu0 %v287
        %v452 = vpop.f32.mrb[0].mxu0
        %v453 = vadd.f32 0.0, %v452
        %v454 = vpop.f32.mrb[0].mxu0
        %455 = vmatprep.mubr.f32.mxu0 0.0
        %456 = vmatmul.mubr.f32.gmra.mrb[0].mxu0 %v290
        %v457 = vpop.f32.mrb[0].mxu0
        %v458 = vadd.f32 0.0, %v457
        %v459 = vpop.f32.mrb[0].mxu0
        %460 = vmatprep.mubr.f32.mxu0 0.0
        %461 = vmatmul.mubr.f32.gmra.mrb[0].mxu0 %v293
        %v462 = vpop.f32.mrb[0].mxu0
        %v463 = vadd.f32 0.0, %v462
        %v464 = vpop.f32.mrb[0].mxu0
        %465 = vmatprep.mubr.f32.mxu0 0.0
        %466 = vmatmul.mubr.f32.gmra.mrb[0].mxu0 %v296
        %v467 = vpop.f32.mrb[0].mxu0
        %v468 = vadd.f32 0.0, %v467
        %v469 = vpop.f32.mrb[0].mxu0
        %470 = vmatprep.mubr.f32.mxu0 0.0
        %471 = vmatmul.mubr.f32.gmra.mrb[0].mxu0 %v299
        %v472 = vpop.f32.mrb[0].mxu0
        %v473 = vadd.f32 0.0, %v472
        %v474 = vpop.f32.mrb[0].mxu0
        %475 = vmatprep.mubr.f32.mxu0 0.0
        %476 = vmatmul.mubr.f32.gmra.mrb[0].mxu0 %v302
        %v477 = vpop.f32.mrb[0].mxu0
        %v478 = vadd.f32 0.0, %v477
        %v479 = vpop.f32.mrb[0].mxu0
        %480 = vmatprep.mubr.f32.mxu0 0.0
        %481 = vmatmul.mubr.f32.gmra.mrb[0].mxu0 %v305
        %v482 = vpop.f32.mrb[0].mxu0
        %v483 = vadd.f32 0.0, %v482
        %v484 = vpop.f32.mrb[0].mxu0
        %485 = vmatprep.mubr.f32.mxu0 0.0
        %486 = vmatmul.mubr.f32.gmra.mrb[0].mxu0 %v308
        %v487 = vpop.f32.mrb[0].mxu0
        %v488 = vadd.f32 0.0, %v487
        %v489 = vpop.f32.mrb[0].mxu0
        %490 = vmatprep.mubr.f32.mxu0 0.0
        %491 = vmatmul.mubr.f32.gmra.mrb[0].mxu0 %v311
        %v492 = vpop.f32.mrb[0].mxu0
        %v493 = vadd.f32 0.0, %v492
        %v494 = vpop.f32.mrb[0].mxu0
        %495 = vmatprep.mubr.f32.mxu0 0.0
        %496 = vmatmul.mubr.f32.gmra.mrb[0].mxu0 %v314
        %v497 = vpop.f32.mrb[0].mxu0
        %v498 = vadd.f32 0.0, %v497
        %v499 = vpop.f32.mrb[0].mxu0
        %500 = vmatprep.mubr.f32.mxu0 0.0
        %501 = vmatmul.mubr.f32.gmra.mrb[0].mxu0 %v317
        %v502 = vpop.f32.mrb[0].mxu0
        %v503 = vadd.f32 0.0, %v502
        %v504 = vpop.f32.mrb[0].mxu0
        %505 = vmatprep.mubr.f32.mxu0 0.0
        %506 = vmatmul.mubr.f32.gmra.mrb[0].mxu0 %v320
        %v507 = vpop.f32.mrb[0].mxu0
        %v508 = vadd.f32 0.0, %v507
        %v509 = vpop.f32.mrb[0].mxu0
        %510 = vmatprep.mubr.f32.mxu0 0.0
        %511 = vmatmul.mubr.f32.gmra.mrb[0].mxu0 %v323
        %v512 = vpop.f32.mrb[0].mxu0
        %v513 = vadd.f32 0.0, %v512
        %v514 = vpop.f32.mrb[0].mxu0
        %515 = vmatprep.mubr.f32.mxu0 0.0
        %516 = vmatmul.mubr.f32.gmra.mrb[0].mxu0 %v326
        %v517 = vpop.f32.mrb[0].mxu0
        %v518 = vadd.f32 0.0, %v517
        %v519 = vpop.f32.mrb[0].mxu0
        %520 = vmatprep.mubr.f32.mxu0 0.0
        %521 = vmatmul.mubr.f32.gmra.mrb[0].mxu0 %v329
        %v522 = vpop.f32.mrb[0].mxu0
        %v523 = vadd.f32 0.0, %v522
        %v524 = vpop.f32.mrb[0].mxu0
        %525 = vmatprep.mubr.f32.mxu0 0.0
        %526 = vmatmul.mubr.f32.gmra.mrb[0].mxu0 %v332
        %v527 = vpop.f32.mrb[0].mxu0
        %v528 = vadd.f32 0.0, %v527
        %v529 = vpop.f32.mrb[0].mxu0
        %530 = vmatprep.mubr.f32.mxu0 0.0
        %531 = vmatmul.mubr.f32.gmra.mrb[0].mxu0 %v335
        %v532 = vpop.f32.mrb[0].mxu0
        %v533 = vadd.f32 0.0, %v532
        %v534 = vpop.f32.mrb[0].mxu0
        %535 = vmatprep.mubr.f32.mxu0 0.0
        %536 = vmatmul.mubr.f32.gmra.mrb[0].mxu0 %v338
        %v537 = vpop.f32.mrb[0].mxu0
        %v538 = vadd.f32 0.0, %v537
        %v539 = vpop.f32.mrb[0].mxu0
        %540 = vmatprep.mubr.f32.mxu0 0.0
        %541 = vmatmul.mubr.f32.gmra.mrb[0].mxu0 %v341
        %v542 = vpop.f32.mrb[0].mxu0
        %v543 = vadd.f32 0.0, %v542
        %v544 = vpop.f32.mrb[0].mxu0
        %545 = vmatprep.mubr.f32.mxu0 0.0
        %546 = vmatmul.mubr.f32.gmra.mrb[0].mxu0 %v344
        %v547 = vpop.f32.mrb[0].mxu0
        %v548 = vadd.f32 0.0, %v547
        %v549 = vpop.f32.mrb[0].mxu0
        %550 = vmatprep.mubr.f32.mxu0 0.0
        %551 = vmatmul.mubr.f32.gmra.mrb[0].mxu0 %v347
        %v552 = vpop.f32.mrb[0].mxu0
        %v553 = vadd.f32 0.0, %v552
        %v554 = vpop.f32.mrb[0].mxu0
        %555 = vmatprep.mubr.f32.mxu0 0.0
        %556 = vmatmul.mubr.f32.gmra.mrb[0].mxu0 %v350
        %v557 = vpop.f32.mrb[0].mxu0
        %v558 = vadd.f32 0.0, %v557
        %v559 = vpop.f32.mrb[0].mxu0
        %560 = vmatprep.mubr.f32.mxu0 0.0
        %561 = vmatmul.mubr.f32.gmra.mrb[0].mxu0 %v353
        %v562 = vpop.f32.mrb[0].mxu0
        %v563 = vadd.f32 0.0, %v562
        %v564 = vpop.f32.mrb[0].mxu0
        %565 = vmatprep.mubr.f32.mxu0 0.0
        %566 = vmatmul.mubr.f32.gmra.mrb[0].mxu0 %v356
        %v567 = vpop.f32.mrb[0].mxu0
        %v568 = vadd.f32 0.0, %v567
        %v569 = vpop.f32.mrb[0].mxu0
        %570 = vmatprep.mubr.f32.mxu0 0.0
        %571 = vmatmul.mubr.f32.gmra.mrb[0].mxu0 %v359
        %v572 = vpop.f32.mrb[0].mxu0
        %v573 = vadd.f32 0.0, %v572
        %v574 = vpop.f32.mrb[0].mxu0
        %575 = vmatprep.mubr.f32.mxu0 0.0
        %576 = vmatmul.mubr.f32.gmra.mrb[0].mxu0 %v362
        %v577 = vpop.f32.mrb[0].mxu0
        %v578 = vadd.f32 0.0, %v577
        %v579 = vpop.f32.mrb[0].mxu0
        %580 = vmatprep.mubr.f32.mxu0 0.0
        %581 = vmatmul.mubr.f32.gmra.mrb[0].mxu0 %v365
        %v582 = vpop.f32.mrb[0].mxu0
        %v583 = vadd.f32 0.0, %v582
        %v584 = vpop.f32.mrb[0].mxu0
        %585 = vmatprep.mubr.f32.mxu0 0.0
        %586 = vmatmul.mubr.f32.gmra.mrb[0].mxu0 %v368
        %v587 = vpop.f32.mrb[0].mxu0
        %v588 = vadd.f32 0.0, %v587
        %v589 = vpop.f32.mrb[0].mxu0
        %590 = vmatprep.mubr.f32.mxu0 0.0
        %591 = vmatmul.mubr.f32.gmra.mrb[0].mxu0 %v371
        %v592 = vpop.f32.mrb[0].mxu0
        %v593 = vadd.f32 0.0, %v592
        %v594 = vpop.f32.mrb[0].mxu0
        %595 = vmatprep.mubr.f32.mxu0 0.0
        %596 = vmatmul.mubr.f32.gmra.mrb[0].mxu0 %v374
        %v597 = vpop.f32.mrb[0].mxu0
        %v598 = vadd.f32 0.0, %v597
        %v599 = vpop.f32.mrb[0].mxu0
        %600 = vmatprep.mubr.f32.mxu0 0.0
        %601 = vmatmul.mubr.f32.gmra.mrb[0].mxu0 %v377
        %v602 = vpop.f32.mrb[0].mxu0
        %v603 = vadd.f32 0.0, %v602
        %v604 = vpop.f32.mrb[0].mxu0
        %605 = vmatprep.mubr.f32.mxu0 0.0
        %606 = vmatmul.mubr.f32.gmra.mrb[0].mxu0 %v380
        %v607 = vpop.f32.mrb[0].mxu0
        %v608 = vadd.f32 0.0, %v607
        %v609 = vpop.f32.mrb[0].mxu0
        %610 = vdwg.mxu0
        %v612 = vsel %vm285, %v218, 0
        %v615 = vsel %vm285, %v219, 0
        %v618 = vsel %vm285, %v220, 0
        %v621 = vsel %vm285, %v221, 0
        %v624 = vsel %vm285, %v222, 0
        %v627 = vsel %vm285, %v223, 0
        %v630 = vsel %vm285, %v224, 0
        %v633 = vsel %vm285, %v225, 0
        %v636 = vsel %vm285, %v226, 0
        %v639 = vsel %vm285, %v227, 0
        %v642 = vsel %vm285, %v228, 0
        %v645 = vsel %vm285, %v229, 0
        %v648 = vsel %vm285, %v230, 0
        %v651 = vsel %vm285, %v231, 0
        %v654 = vsel %vm285, %v232, 0
        %v657 = vsel %vm285, %v233, 0
        %v660 = vsel %vm285, %v234, 0
        %v663 = vsel %vm285, %v235, 0
        %v666 = vsel %vm285, %v236, 0
        %v669 = vsel %vm285, %v237, 0
        %v672 = vsel %vm285, %v238, 0
        %v675 = vsel %vm285, %v239, 0
        %v678 = vsel %vm285, %v240, 0
        %v681 = vsel %vm285, %v241, 0
        %v684 = vsel %vm285, %v242, 0
        %v687 = vsel %vm285, %v243, 0
        %v690 = vsel %vm285, %v244, 0
        %v693 = vsel %vm285, %v245, 0
        %v696 = vsel %vm285, %v246, 0
        %v699 = vsel %vm285, %v247, 0
        %v702 = vsel %vm285, %v248, 0
        %v705 = vsel %vm285, %v249, 0
        %v708 = vsel %vm382, %v250, 0
        %710 = vmatprep.subr.mxu0 0.0
        %711 = vmatpush1.msra.mxu0 %v708
        %712 = vmatprep.subr.mxu0 0.0
        %713 = vmatpush1.msra.mxu0 0.0
        %714 = vmatprep.subr.mxu0 0.0
        %715 = vmatpush1.msra.mxu0 0.0
        %716 = vmatprep.subr.mxu0 0.0
        %717 = vmatpush1.msra.mxu0 0.0
        %718 = vmatprep.subr.mxu0 0.0
        %719 = vmatpush1.msra.mxu0 0.0
        %720 = vmatprep.subr.mxu0 0.0
        %721 = vmatpush1.msra.mxu0 0.0
        %722 = vmatprep.subr.mxu0 0.0
        %723 = vmatpush1.msra.mxu0 0.0
        %724 = vmatprep.subr.mxu0 0.0
        %725 = vmatpush1.msra.mxu0 0.0
        %726 = vmatprep.subr.mxu0 0.0
        %727 = vmatpush1.msra.mxu0 0.0
        %728 = vmatprep.subr.mxu0 0.0
        %729 = vmatpush1.msra.mxu0 0.0
        %730 = vmatprep.subr.mxu0 0.0
        %731 = vmatpush1.msra.mxu0 0.0
        %732 = vmatprep.subr.mxu0 0.0
        %733 = vmatpush1.msra.mxu0 0.0
        %734 = vmatprep.subr.mxu0 0.0
        %735 = vmatpush1.msra.mxu0 0.0
        %736 = vmatprep.subr.mxu0 0.0
        %737 = vmatpush1.msra.mxu0 0.0
        %738 = vmatprep.subr.mxu0 0.0
        %739 = vmatpush1.msra.mxu0 0.0
        %740 = vmatprep.subr.mxu0 0.0
        %741 = vmatpush1.msra.mxu0 0.0
        %742 = vmatprep.subr.mxu0 0.0
        %743 = vmatpush1.msra.mxu0 0.0
        %744 = vmatprep.subr.mxu0 0.0
        %745 = vmatpush1.msra.mxu0 0.0
        %746 = vmatprep.subr.mxu0 0.0
        %747 = vmatpush1.msra.mxu0 0.0
        %748 = vmatprep.subr.mxu0 0.0
        %749 = vmatpush1.msra.mxu0 0.0
        %750 = vmatprep.subr.mxu0 0.0
        %751 = vmatpush1.msra.mxu0 0.0
        %752 = vmatprep.subr.mxu0 0.0
        %753 = vmatpush1.msra.mxu0 0.0
        %754 = vmatprep.subr.mxu0 0.0
        %755 = vmatpush1.msra.mxu0 0.0
        %756 = vmatprep.subr.mxu0 0.0
        %757 = vmatpush1.msra.mxu0 0.0
        %758 = vmatprep.subr.mxu0 0.0
        %759 = vmatpush1.msra.mxu0 0.0
        %760 = vmatprep.subr.mxu0 0.0
        %761 = vmatpush1.msra.mxu0 0.0
        %762 = vmatprep.subr.mxu0 0.0
        %763 = vmatpush1.msra.mxu0 0.0
        %764 = vmatprep.subr.mxu0 0.0
        %765 = vmatpush1.msra.mxu0 0.0
        %766 = vmatprep.subr.mxu0 0.0
        %767 = vmatpush1.msra.mxu0 0.0
        %768 = vmatprep.subr.mxu0 0.0
        %769 = vmatpush1.msra.mxu0 0.0
        %770 = vmatprep.subr.mxu0 0.0
        %771 = vmatpush1.msra.mxu0 0.0
        %772 = vmatprep.subr.mxu0 0.0
        %773 = vmatpush1.msra.mxu0 0.0
        %774 = vmatprep.mubr.f32.mxu0 0.0
        %775 = vmatmul.mubr.f32.gmra.mrb[0].mxu0 %v612
        %v776 = vpop.f32.mrb[0].mxu0
        %v777 = vadd.f32 %v453, %v776
        %v778 = vpop.f32.mrb[0].mxu0
        %779 = vmatprep.mubr.f32.mxu0 0.0
        %780 = vmatmul.mubr.f32.gmra.mrb[0].mxu0 %v615
        %v781 = vpop.f32.mrb[0].mxu0
        %v782 = vadd.f32 %v458, %v781
        %v783 = vpop.f32.mrb[0].mxu0
        %784 = vmatprep.mubr.f32.mxu0 0.0
        %785 = vmatmul.mubr.f32.gmra.mrb[0].mxu0 %v618
        %v786 = vpop.f32.mrb[0].mxu0
        %v787 = vadd.f32 %v463, %v786
        %v788 = vpop.f32.mrb[0].mxu0
        %789 = vmatprep.mubr.f32.mxu0 0.0
        %790 = vmatmul.mubr.f32.gmra.mrb[0].mxu0 %v621
        %v791 = vpop.f32.mrb[0].mxu0
        %v792 = vadd.f32 %v468, %v791
        %v793 = vpop.f32.mrb[0].mxu0
        %794 = vmatprep.mubr.f32.mxu0 0.0
        %795 = vmatmul.mubr.f32.gmra.mrb[0].mxu0 %v624
        %v796 = vpop.f32.mrb[0].mxu0
        %v797 = vadd.f32 %v473, %v796
        %v798 = vpop.f32.mrb[0].mxu0
        %799 = vmatprep.mubr.f32.mxu0 0.0
        %800 = vmatmul.mubr.f32.gmra.mrb[0].mxu0 %v627
        %v801 = vpop.f32.mrb[0].mxu0
        %v802 = vadd.f32 %v478, %v801
        %v803 = vpop.f32.mrb[0].mxu0
        %804 = vmatprep.mubr.f32.mxu0 0.0
        %805 = vmatmul.mubr.f32.gmra.mrb[0].mxu0 %v630
        %v806 = vpop.f32.mrb[0].mxu0
        %v807 = vadd.f32 %v483, %v806
        %v808 = vpop.f32.mrb[0].mxu0
        %809 = vmatprep.mubr.f32.mxu0 0.0
        %810 = vmatmul.mubr.f32.gmra.mrb[0].mxu0 %v633
        %v811 = vpop.f32.mrb[0].mxu0
        %v812 = vadd.f32 %v488, %v811
        %v813 = vpop.f32.mrb[0].mxu0
        %814 = vmatprep.mubr.f32.mxu0 0.0
        %815 = vmatmul.mubr.f32.gmra.mrb[0].mxu0 %v636
        %v816 = vpop.f32.mrb[0].mxu0
        %v817 = vadd.f32 %v493, %v816
        %v818 = vpop.f32.mrb[0].mxu0
        %819 = vmatprep.mubr.f32.mxu0 0.0
        %820 = vmatmul.mubr.f32.gmra.mrb[0].mxu0 %v639
        %v821 = vpop.f32.mrb[0].mxu0
        %v822 = vadd.f32 %v498, %v821
        %v823 = vpop.f32.mrb[0].mxu0
        %824 = vmatprep.mubr.f32.mxu0 0.0
        %825 = vmatmul.mubr.f32.gmra.mrb[0].mxu0 %v642
        %v826 = vpop.f32.mrb[0].mxu0
        %v827 = vadd.f32 %v503, %v826
        %v828 = vpop.f32.mrb[0].mxu0
        %829 = vmatprep.mubr.f32.mxu0 0.0
        %830 = vmatmul.mubr.f32.gmra.mrb[0].mxu0 %v645
        %v831 = vpop.f32.mrb[0].mxu0
        %v832 = vadd.f32 %v508, %v831
        %v833 = vpop.f32.mrb[0].mxu0
        %834 = vmatprep.mubr.f32.mxu0 0.0
        %835 = vmatmul.mubr.f32.gmra.mrb[0].mxu0 %v648
        %v836 = vpop.f32.mrb[0].mxu0
        %v837 = vadd.f32 %v513, %v836
        %v838 = vpop.f32.mrb[0].mxu0
        %839 = vmatprep.mubr.f32.mxu0 0.0
        %840 = vmatmul.mubr.f32.gmra.mrb[0].mxu0 %v651
        %v841 = vpop.f32.mrb[0].mxu0
        %v842 = vadd.f32 %v518, %v841
        %v843 = vpop.f32.mrb[0].mxu0
        %844 = vmatprep.mubr.f32.mxu0 0.0
        %845 = vmatmul.mubr.f32.gmra.mrb[0].mxu0 %v654
        %v846 = vpop.f32.mrb[0].mxu0
        %v847 = vadd.f32 %v523, %v846
        %v848 = vpop.f32.mrb[0].mxu0
        %849 = vmatprep.mubr.f32.mxu0 0.0
        %850 = vmatmul.mubr.f32.gmra.mrb[0].mxu0 %v657
        %v851 = vpop.f32.mrb[0].mxu0
        %v852 = vadd.f32 %v528, %v851
        %v853 = vpop.f32.mrb[0].mxu0
        %854 = vmatprep.mubr.f32.mxu0 0.0
        %855 = vmatmul.mubr.f32.gmra.mrb[0].mxu0 %v660
        %v856 = vpop.f32.mrb[0].mxu0
        %v857 = vadd.f32 %v533, %v856
        %v858 = vpop.f32.mrb[0].mxu0
        %859 = vmatprep.mubr.f32.mxu0 0.0
        %860 = vmatmul.mubr.f32.gmra.mrb[0].mxu0 %v663
        %v861 = vpop.f32.mrb[0].mxu0
        %v862 = vadd.f32 %v538, %v861
        %v863 = vpop.f32.mrb[0].mxu0
        %864 = vmatprep.mubr.f32.mxu0 0.0
        %865 = vmatmul.mubr.f32.gmra.mrb[0].mxu0 %v666
        %v866 = vpop.f32.mrb[0].mxu0
        %v867 = vadd.f32 %v543, %v866
        %v868 = vpop.f32.mrb[0].mxu0
        %869 = vmatprep.mubr.f32.mxu0 0.0
        %870 = vmatmul.mubr.f32.gmra.mrb[0].mxu0 %v669
        %v871 = vpop.f32.mrb[0].mxu0
        %v872 = vadd.f32 %v548, %v871
        %v873 = vpop.f32.mrb[0].mxu0
        %874 = vmatprep.mubr.f32.mxu0 0.0
        %875 = vmatmul.mubr.f32.gmra.mrb[0].mxu0 %v672
        %v876 = vpop.f32.mrb[0].mxu0
        %v877 = vadd.f32 %v553, %v876
        %v878 = vpop.f32.mrb[0].mxu0
        %879 = vmatprep.mubr.f32.mxu0 0.0
        %880 = vmatmul.mubr.f32.gmra.mrb[0].mxu0 %v675
        %v881 = vpop.f32.mrb[0].mxu0
        %v882 = vadd.f32 %v558, %v881
        %v883 = vpop.f32.mrb[0].mxu0
        %884 = vmatprep.mubr.f32.mxu0 0.0
        %885 = vmatmul.mubr.f32.gmra.mrb[0].mxu0 %v678
        %v886 = vpop.f32.mrb[0].mxu0
        %v887 = vadd.f32 %v563, %v886
        %v888 = vpop.f32.mrb[0].mxu0
        %889 = vmatprep.mubr.f32.mxu0 0.0
        %890 = vmatmul.mubr.f32.gmra.mrb[0].mxu0 %v681
        %v891 = vpop.f32.mrb[0].mxu0
        %v892 = vadd.f32 %v568, %v891
        %v893 = vpop.f32.mrb[0].mxu0
        %894 = vmatprep.mubr.f32.mxu0 0.0
        %895 = vmatmul.mubr.f32.gmra.mrb[0].mxu0 %v684
        %v896 = vpop.f32.mrb[0].mxu0
        %v897 = vadd.f32 %v573, %v896
        %v898 = vpop.f32.mrb[0].mxu0
        %899 = vmatprep.mubr.f32.mxu0 0.0
        %900 = vmatmul.mubr.f32.gmra.mrb[0].mxu0 %v687
        %v901 = vpop.f32.mrb[0].mxu0
        %v902 = vadd.f32 %v578, %v901
        %v903 = vpop.f32.mrb[0].mxu0
        %904 = vmatprep.mubr.f32.mxu0 0.0
        %905 = vmatmul.mubr.f32.gmra.mrb[0].mxu0 %v690
        %v906 = vpop.f32.mrb[0].mxu0
        %v907 = vadd.f32 %v583, %v906
        %v908 = vpop.f32.mrb[0].mxu0
        %909 = vmatprep.mubr.f32.mxu0 0.0
        %910 = vmatmul.mubr.f32.gmra.mrb[0].mxu0 %v693
        %v911 = vpop.f32.mrb[0].mxu0
        %v912 = vadd.f32 %v588, %v911
        %v913 = vpop.f32.mrb[0].mxu0
        %914 = vmatprep.mubr.f32.mxu0 0.0
        %915 = vmatmul.mubr.f32.gmra.mrb[0].mxu0 %v696
        %v916 = vpop.f32.mrb[0].mxu0
        %v917 = vadd.f32 %v593, %v916
        %v918 = vpop.f32.mrb[0].mxu0
        %919 = vmatprep.mubr.f32.mxu0 0.0
        %920 = vmatmul.mubr.f32.gmra.mrb[0].mxu0 %v699
        %v921 = vpop.f32.mrb[0].mxu0
        %v922 = vadd.f32 %v598, %v921
        %v923 = vpop.f32.mrb[0].mxu0
        %924 = vmatprep.mubr.f32.mxu0 0.0
        %925 = vmatmul.mubr.f32.gmra.mrb[0].mxu0 %v702
        %v926 = vpop.f32.mrb[0].mxu0
        %v927 = vadd.f32 %v603, %v926
        %v928 = vpop.f32.mrb[0].mxu0
        %929 = vmatprep.mubr.f32.mxu0 0.0
        %930 = vmatmul.mubr.f32.gmra.mrb[0].mxu0 %v705
        %v931 = vpop.f32.mrb[0].mxu0
        %v932 = vadd.f32 %v608, %v931
        %v933 = vpop.f32.mrb[0].mxu0
        %934 = vdwg.mxu0
        %v935 = vld [vmem:[%s195 + $0x2] sm:$0xff]
        %v936 = vld [vmem:[%s195 + $0xa] sm:$0xff]
        %v937 = vld [vmem:[%s195 + $0x1a] sm:$0xff]
        %v938 = vld [vmem:[%s195 + $0x22] sm:$0xff]
        %v939 = vld [vmem:[%s195 + $0x32] sm:$0xff]
        %v940 = vld [vmem:[%s195 + $0x3a] sm:$0xff]
        %v941 = vld [vmem:[%s195 + $0x4a] sm:$0xff]
        %v942 = vld [vmem:[%s195 + $0x52] sm:$0xff]
        %v943 = vld [vmem:[%s195 + $0x62] sm:$0xff]
        %v944 = vld [vmem:[%s195 + $0x6a] sm:$0xff]
        %v945 = vld [vmem:[%s195 + $0x7a] sm:$0xff]
        %v946 = vld [vmem:[%s195 + $0x82] sm:$0xff]
        %v947 = vld [vmem:[%s195 + $0x92] sm:$0xff]
        %v948 = vld [vmem:[%s195 + $0x9a] sm:$0xff]
        %v949 = vld [vmem:[%s195 + $0xaa] sm:$0xff]
        %v950 = vld [vmem:[%s195 + $0xb2] sm:$0xff]
        %v951 = vld [vmem:[%s195 + $0xc2] sm:$0xff]
        %v952 = vld [vmem:[%s195 + $0xca] sm:$0xff]
        %v953 = vld [vmem:[%s195 + $0xda] sm:$0xff]
        %v954 = vld [vmem:[%s195 + $0xe2] sm:$0xff]
        %v955 = vld [vmem:[%s195 + $0xf2] sm:$0xff]
        %v956 = vld [vmem:[%s195 + $0xfa] sm:$0xff]
        %v957 = vld [vmem:[%s195 + $0x10a] sm:$0xff]
        %v958 = vld [vmem:[%s195 + $0x112] sm:$0xff]
        %v959 = vld [vmem:[%s195 + $0x122] sm:$0xff]
        %v960 = vld [vmem:[%s195 + $0x12a] sm:$0xff]
        %v961 = vld [vmem:[%s195 + $0x13a] sm:$0xff]
        %v962 = vld [vmem:[%s195 + $0x142] sm:$0xff]
        %v963 = vld [vmem:[%s195 + $0x152] sm:$0xff]
        %v964 = vld [vmem:[%s195 + $0x15a] sm:$0xff]
        %v965 = vld [vmem:[%s195 + $0x16a] sm:$0xff]
        %v966 = vld [vmem:[%s195 + $0x172] sm:$0xff]
        %s967 = scalar_lea.vmem %s1, 8
        %v968 = vld [vmem:[%s967] sm:$0xf]
        %v970 = vsel %vm285, %v935, 0
        %v973 = vsel %vm285, %v936, 0
        %v976 = vsel %vm285, %v937, 0
        %v979 = vsel %vm285, %v938, 0
        %v982 = vsel %vm285, %v939, 0
        %v985 = vsel %vm285, %v940, 0
        %v988 = vsel %vm285, %v941, 0
        %v991 = vsel %vm285, %v942, 0
        %v994 = vsel %vm285, %v943, 0
        %v997 = vsel %vm285, %v944, 0
        %v1000 = vsel %vm285, %v945, 0
        %v1003 = vsel %vm285, %v946, 0
        %v1006 = vsel %vm285, %v947, 0
        %v1009 = vsel %vm285, %v948, 0
        %v1012 = vsel %vm285, %v949, 0
        %v1015 = vsel %vm285, %v950, 0
        %v1018 = vsel %vm285, %v951, 0
        %v1021 = vsel %vm285, %v952, 0
        %v1024 = vsel %vm285, %v953, 0
        %v1027 = vsel %vm285, %v954, 0
        %v1030 = vsel %vm285, %v955, 0
        %v1033 = vsel %vm285, %v956, 0
        %v1036 = vsel %vm285, %v957, 0
        %v1039 = vsel %vm285, %v958, 0
        %v1042 = vsel %vm285, %v959, 0
        %v1045 = vsel %vm285, %v960, 0
        %v1048 = vsel %vm285, %v961, 0
        %v1051 = vsel %vm285, %v962, 0
        %v1054 = vsel %vm285, %v963, 0
        %v1057 = vsel %vm285, %v964, 0
        %v1060 = vsel %vm285, %v965, 0
        %v1063 = vsel %vm285, %v966, 0
        %v1066 = vsel %vm382, %v968, 0
        %1068 = vmatprep.subr.mxu0 0.0
        %1069 = vmatpush1.msra.mxu0 %v1066
        %1070 = vmatprep.subr.mxu0 0.0
        %1071 = vmatpush1.msra.mxu0 0.0
        %1072 = vmatprep.subr.mxu0 0.0
        %1073 = vmatpush1.msra.mxu0 0.0
        %1074 = vmatprep.subr.mxu0 0.0
        %1075 = vmatpush1.msra.mxu0 0.0
        %1076 = vmatprep.subr.mxu0 0.0
        %1077 = vmatpush1.msra.mxu0 0.0
        %1078 = vmatprep.subr.mxu0 0.0
        %1079 = vmatpush1.msra.mxu0 0.0
        %1080 = vmatprep.subr.mxu0 0.0
        %1081 = vmatpush1.msra.mxu0 0.0
        %1082 = vmatprep.subr.mxu0 0.0
        %1083 = vmatpush1.msra.mxu0 0.0
        %1084 = vmatprep.subr.mxu0 0.0
        %1085 = vmatpush1.msra.mxu0 0.0
        %1086 = vmatprep.subr.mxu0 0.0
        %1087 = vmatpush1.msra.mxu0 0.0
        %1088 = vmatprep.subr.mxu0 0.0
        %1089 = vmatpush1.msra.mxu0 0.0
        %1090 = vmatprep.subr.mxu0 0.0
        %1091 = vmatpush1.msra.mxu0 0.0
        %1092 = vmatprep.subr.mxu0 0.0
        %1093 = vmatpush1.msra.mxu0 0.0
        %1094 = vmatprep.subr.mxu0 0.0
        %1095 = vmatpush1.msra.mxu0 0.0
        %1096 = vmatprep.subr.mxu0 0.0
        %1097 = vmatpush1.msra.mxu0 0.0
        %1098 = vmatprep.subr.mxu0 0.0
        %1099 = vmatpush1.msra.mxu0 0.0
        %1100 = vmatprep.subr.mxu0 0.0
        %1101 = vmatpush1.msra.mxu0 0.0
        %1102 = vmatprep.subr.mxu0 0.0
        %1103 = vmatpush1.msra.mxu0 0.0
        %1104 = vmatprep.subr.mxu0 0.0
        %1105 = vmatpush1.msra.mxu0 0.0
        %1106 = vmatprep.subr.mxu0 0.0
        %1107 = vmatpush1.msra.mxu0 0.0
        %1108 = vmatprep.subr.mxu0 0.0
        %1109 = vmatpush1.msra.mxu0 0.0
        %1110 = vmatprep.subr.mxu0 0.0
        %1111 = vmatpush1.msra.mxu0 0.0
        %1112 = vmatprep.subr.mxu0 0.0
        %1113 = vmatpush1.msra.mxu0 0.0
        %1114 = vmatprep.subr.mxu0 0.0
        %1115 = vmatpush1.msra.mxu0 0.0
        %1116 = vmatprep.subr.mxu0 0.0
        %1117 = vmatpush1.msra.mxu0 0.0
        %1118 = vmatprep.subr.mxu0 0.0
        %1119 = vmatpush1.msra.mxu0 0.0
        %1120 = vmatprep.subr.mxu0 0.0
        %1121 = vmatpush1.msra.mxu0 0.0
        %1122 = vmatprep.subr.mxu0 0.0
        %1123 = vmatpush1.msra.mxu0 0.0
        %1124 = vmatprep.subr.mxu0 0.0
        %1125 = vmatpush1.msra.mxu0 0.0
        %1126 = vmatprep.subr.mxu0 0.0
        %1127 = vmatpush1.msra.mxu0 0.0
        %1128 = vmatprep.subr.mxu0 0.0
        %1129 = vmatpush1.msra.mxu0 0.0
        %1130 = vmatprep.subr.mxu0 0.0
        %1131 = vmatpush1.msra.mxu0 0.0
        %1132 = vmatprep.mubr.f32.mxu0 0.0
        %1133 = vmatmul.mubr.f32.gmra.mrb[0].mxu0 %v970
        %v1134 = vpop.f32.mrb[0].mxu0
        %v1135 = vadd.f32 0.0, %v1134
        %v1136 = vpop.f32.mrb[0].mxu0
        %1137 = vmatprep.mubr.f32.mxu0 0.0
        %1138 = vmatmul.mubr.f32.gmra.mrb[0].mxu0 %v973
        %v1139 = vpop.f32.mrb[0].mxu0
        %v1140 = vadd.f32 0.0, %v1139
        %v1141 = vpop.f32.mrb[0].mxu0
        %1142 = vmatprep.mubr.f32.mxu0 0.0
        %1143 = vmatmul.mubr.f32.gmra.mrb[0].mxu0 %v976
        %v1144 = vpop.f32.mrb[0].mxu0
        %v1145 = vadd.f32 0.0, %v1144
        %v1146 = vpop.f32.mrb[0].mxu0
        %1147 = vmatprep.mubr.f32.mxu0 0.0
        %1148 = vmatmul.mubr.f32.gmra.mrb[0].mxu0 %v979
        %v1149 = vpop.f32.mrb[0].mxu0
        %v1150 = vadd.f32 0.0, %v1149
        %v1151 = vpop.f32.mrb[0].mxu0
        %1152 = vmatprep.mubr.f32.mxu0 0.0
        %1153 = vmatmul.mubr.f32.gmra.mrb[0].mxu0 %v982
        %v1154 = vpop.f32.mrb[0].mxu0
        %v1155 = vadd.f32 0.0, %v1154
        %v1156 = vpop.f32.mrb[0].mxu0
        %1157 = vmatprep.mubr.f32.mxu0 0.0
        %1158 = vmatmul.mubr.f32.gmra.mrb[0].mxu0 %v985
        %v1159 = vpop.f32.mrb[0].mxu0
        %v1160 = vadd.f32 0.0, %v1159
        %v1161 = vpop.f32.mrb[0].mxu0
        %1162 = vmatprep.mubr.f32.mxu0 0.0
        %1163 = vmatmul.mubr.f32.gmra.mrb[0].mxu0 %v988
        %v1164 = vpop.f32.mrb[0].mxu0
        %v1165 = vadd.f32 0.0, %v1164
        %v1166 = vpop.f32.mrb[0].mxu0
        %1167 = vmatprep.mubr.f32.mxu0 0.0
        %1168 = vmatmul.mubr.f32.gmra.mrb[0].mxu0 %v991
        %v1169 = vpop.f32.mrb[0].mxu0
        %v1170 = vadd.f32 0.0, %v1169
        %v1171 = vpop.f32.mrb[0].mxu0
        %1172 = vmatprep.mubr.f32.mxu0 0.0
        %1173 = vmatmul.mubr.f32.gmra.mrb[0].mxu0 %v994
        %v1174 = vpop.f32.mrb[0].mxu0
        %v1175 = vadd.f32 0.0, %v1174
        %v1176 = vpop.f32.mrb[0].mxu0
        %1177 = vmatprep.mubr.f32.mxu0 0.0
        %1178 = vmatmul.mubr.f32.gmra.mrb[0].mxu0 %v997
        %v1179 = vpop.f32.mrb[0].mxu0
        %v1180 = vadd.f32 0.0, %v1179
        %v1181 = vpop.f32.mrb[0].mxu0
        %1182 = vmatprep.mubr.f32.mxu0 0.0
        %1183 = vmatmul.mubr.f32.gmra.mrb[0].mxu0 %v1000
        %v1184 = vpop.f32.mrb[0].mxu0
        %v1185 = vadd.f32 0.0, %v1184
        %v1186 = vpop.f32.mrb[0].mxu0
        %1187 = vmatprep.mubr.f32.mxu0 0.0
        %1188 = vmatmul.mubr.f32.gmra.mrb[0].mxu0 %v1003
        %v1189 = vpop.f32.mrb[0].mxu0
        %v1190 = vadd.f32 0.0, %v1189
        %v1191 = vpop.f32.mrb[0].mxu0
        %1192 = vmatprep.mubr.f32.mxu0 0.0
        %1193 = vmatmul.mubr.f32.gmra.mrb[0].mxu0 %v1006
        %v1194 = vpop.f32.mrb[0].mxu0
        %v1195 = vadd.f32 0.0, %v1194
        %v1196 = vpop.f32.mrb[0].mxu0
        %1197 = vmatprep.mubr.f32.mxu0 0.0
        %1198 = vmatmul.mubr.f32.gmra.mrb[0].mxu0 %v1009
        %v1199 = vpop.f32.mrb[0].mxu0
        %v1200 = vadd.f32 0.0, %v1199
        %v1201 = vpop.f32.mrb[0].mxu0
        %1202 = vmatprep.mubr.f32.mxu0 0.0
        %1203 = vmatmul.mubr.f32.gmra.mrb[0].mxu0 %v1012
        %v1204 = vpop.f32.mrb[0].mxu0
        %v1205 = vadd.f32 0.0, %v1204
        %v1206 = vpop.f32.mrb[0].mxu0
        %1207 = vmatprep.mubr.f32.mxu0 0.0
        %1208 = vmatmul.mubr.f32.gmra.mrb[0].mxu0 %v1015
        %v1209 = vpop.f32.mrb[0].mxu0
        %v1210 = vadd.f32 0.0, %v1209
        %v1211 = vpop.f32.mrb[0].mxu0
        %1212 = vmatprep.mubr.f32.mxu0 0.0
        %1213 = vmatmul.mubr.f32.gmra.mrb[0].mxu0 %v1018
        %v1214 = vpop.f32.mrb[0].mxu0
        %v1215 = vadd.f32 0.0, %v1214
        %v1216 = vpop.f32.mrb[0].mxu0
        %1217 = vmatprep.mubr.f32.mxu0 0.0
        %1218 = vmatmul.mubr.f32.gmra.mrb[0].mxu0 %v1021
        %v1219 = vpop.f32.mrb[0].mxu0
        %v1220 = vadd.f32 0.0, %v1219
        %v1221 = vpop.f32.mrb[0].mxu0
        %1222 = vmatprep.mubr.f32.mxu0 0.0
        %1223 = vmatmul.mubr.f32.gmra.mrb[0].mxu0 %v1024
        %v1224 = vpop.f32.mrb[0].mxu0
        %v1225 = vadd.f32 0.0, %v1224
        %v1226 = vpop.f32.mrb[0].mxu0
        %1227 = vmatprep.mubr.f32.mxu0 0.0
        %1228 = vmatmul.mubr.f32.gmra.mrb[0].mxu0 %v1027
        %v1229 = vpop.f32.mrb[0].mxu0
        %v1230 = vadd.f32 0.0, %v1229
        %v1231 = vpop.f32.mrb[0].mxu0
        %1232 = vmatprep.mubr.f32.mxu0 0.0
        %1233 = vmatmul.mubr.f32.gmra.mrb[0].mxu0 %v1030
        %v1234 = vpop.f32.mrb[0].mxu0
        %v1235 = vadd.f32 0.0, %v1234
        %v1236 = vpop.f32.mrb[0].mxu0
        %1237 = vmatprep.mubr.f32.mxu0 0.0
        %1238 = vmatmul.mubr.f32.gmra.mrb[0].mxu0 %v1033
        %v1239 = vpop.f32.mrb[0].mxu0
        %v1240 = vadd.f32 0.0, %v1239
        %v1241 = vpop.f32.mrb[0].mxu0
        %1242 = vmatprep.mubr.f32.mxu0 0.0
        %1243 = vmatmul.mubr.f32.gmra.mrb[0].mxu0 %v1036
        %v1244 = vpop.f32.mrb[0].mxu0
        %v1245 = vadd.f32 0.0, %v1244
        %v1246 = vpop.f32.mrb[0].mxu0
        %1247 = vmatprep.mubr.f32.mxu0 0.0
        %1248 = vmatmul.mubr.f32.gmra.mrb[0].mxu0 %v1039
        %v1249 = vpop.f32.mrb[0].mxu0
        %v1250 = vadd.f32 0.0, %v1249
        %v1251 = vpop.f32.mrb[0].mxu0
        %1252 = vmatprep.mubr.f32.mxu0 0.0
        %1253 = vmatmul.mubr.f32.gmra.mrb[0].mxu0 %v1042
        %v1254 = vpop.f32.mrb[0].mxu0
        %v1255 = vadd.f32 0.0, %v1254
        %v1256 = vpop.f32.mrb[0].mxu0
        %1257 = vmatprep.mubr.f32.mxu0 0.0
        %1258 = vmatmul.mubr.f32.gmra.mrb[0].mxu0 %v1045
        %v1259 = vpop.f32.mrb[0].mxu0
        %v1260 = vadd.f32 0.0, %v1259
        %v1261 = vpop.f32.mrb[0].mxu0
        %1262 = vmatprep.mubr.f32.mxu0 0.0
        %1263 = vmatmul.mubr.f32.gmra.mrb[0].mxu0 %v1048
        %v1264 = vpop.f32.mrb[0].mxu0
        %v1265 = vadd.f32 0.0, %v1264
        %v1266 = vpop.f32.mrb[0].mxu0
        %1267 = vmatprep.mubr.f32.mxu0 0.0
        %1268 = vmatmul.mubr.f32.gmra.mrb[0].mxu0 %v1051
        %v1269 = vpop.f32.mrb[0].mxu0
        %v1270 = vadd.f32 0.0, %v1269
        %v1271 = vpop.f32.mrb[0].mxu0
        %1272 = vmatprep.mubr.f32.mxu0 0.0
        %1273 = vmatmul.mubr.f32.gmra.mrb[0].mxu0 %v1054
        %v1274 = vpop.f32.mrb[0].mxu0
        %v1275 = vadd.f32 0.0, %v1274
        %v1276 = vpop.f32.mrb[0].mxu0
        %1277 = vmatprep.mubr.f32.mxu0 0.0
        %1278 = vmatmul.mubr.f32.gmra.mrb[0].mxu0 %v1057
        %v1279 = vpop.f32.mrb[0].mxu0
        %v1280 = vadd.f32 0.0, %v1279
        %v1281 = vpop.f32.mrb[0].mxu0
        %1282 = vmatprep.mubr.f32.mxu0 0.0
        %1283 = vmatmul.mubr.f32.gmra.mrb[0].mxu0 %v1060
        %v1284 = vpop.f32.mrb[0].mxu0
        %v1285 = vadd.f32 0.0, %v1284
        %v1286 = vpop.f32.mrb[0].mxu0
        %1287 = vmatprep.mubr.f32.mxu0 0.0
        %1288 = vmatmul.mubr.f32.gmra.mrb[0].mxu0 %v1063
        %v1289 = vpop.f32.mrb[0].mxu0
        %v1290 = vadd.f32 0.0, %v1289
        %v1291 = vpop.f32.mrb[0].mxu0
        %1292 = vdwg.mxu0
        %v1293 = vadd.f32 %v777, %v1135
        %v1294 = vadd.f32 %v782, %v1140
        %v1295 = vadd.f32 %v787, %v1145
        %v1296 = vadd.f32 %v792, %v1150
        %v1297 = vadd.f32 %v797, %v1155
        %v1298 = vadd.f32 %v802, %v1160
        %v1299 = vadd.f32 %v807, %v1165
        %v1300 = vadd.f32 %v812, %v1170
        %v1301 = vadd.f32 %v817, %v1175
        %v1302 = vadd.f32 %v822, %v1180
        %v1303 = vadd.f32 %v827, %v1185
        %v1304 = vadd.f32 %v832, %v1190
        %v1305 = vadd.f32 %v837, %v1195
        %v1306 = vadd.f32 %v842, %v1200
        %v1307 = vadd.f32 %v847, %v1205
        %v1308 = vadd.f32 %v852, %v1210
        %v1309 = vadd.f32 %v857, %v1215
        %v1310 = vadd.f32 %v862, %v1220
        %v1311 = vadd.f32 %v867, %v1225
        %v1312 = vadd.f32 %v872, %v1230
        %v1313 = vadd.f32 %v877, %v1235
        %v1314 = vadd.f32 %v882, %v1240
        %v1315 = vadd.f32 %v887, %v1245
        %v1316 = vadd.f32 %v892, %v1250
        %v1317 = vadd.f32 %v897, %v1255
        %v1318 = vadd.f32 %v902, %v1260
        %v1319 = vadd.f32 %v907, %v1265
        %v1320 = vadd.f32 %v912, %v1270
        %v1321 = vadd.f32 %v917, %v1275
        %v1322 = vadd.f32 %v922, %v1280
        %v1323 = vadd.f32 %v927, %v1285
        %v1324 = vadd.f32 %v932, %v1290
        %s1325 = scalar_lea.vmem %s195, 24
        %v1326 = vld [vmem:[%s1325] sm:$0xff]
        %v1327 = vld [vmem:[%s1325 + $0x8] sm:$0xff]
        %v1328 = vld [vmem:[%s1325 + $0x18] sm:$0xff]
        %v1329 = vld [vmem:[%s1325 + $0x20] sm:$0xff]
        %v1330 = vld [vmem:[%s1325 + $0x30] sm:$0xff]
        %v1331 = vld [vmem:[%s1325 + $0x38] sm:$0xff]
        %v1332 = vld [vmem:[%s1325 + $0x48] sm:$0xff]
        %v1333 = vld [vmem:[%s1325 + $0x50] sm:$0xff]
        %v1334 = vld [vmem:[%s1325 + $0x60] sm:$0xff]
        %v1335 = vld [vmem:[%s1325 + $0x68] sm:$0xff]
        %v1336 = vld [vmem:[%s1325 + $0x78] sm:$0xff]
        %v1337 = vld [vmem:[%s1325 + $0x80] sm:$0xff]
        %v1338 = vld [vmem:[%s1325 + $0x90] sm:$0xff]
        %v1339 = vld [vmem:[%s1325 + $0x98] sm:$0xff]
        %v1340 = vld [vmem:[%s1325 + $0xa8] sm:$0xff]
        %v1341 = vld [vmem:[%s1325 + $0xb0] sm:$0xff]
        %v1342 = vld [vmem:[%s1325 + $0xc0] sm:$0xff]
        %v1343 = vld [vmem:[%s1325 + $0xc8] sm:$0xff]
        %v1344 = vld [vmem:[%s1325 + $0xd8] sm:$0xff]
        %v1345 = vld [vmem:[%s1325 + $0xe0] sm:$0xff]
        %v1346 = vld [vmem:[%s1325 + $0xf0] sm:$0xff]
        %v1347 = vld [vmem:[%s1325 + $0xf8] sm:$0xff]
        %v1348 = vld [vmem:[%s1325 + $0x108] sm:$0xff]
        %v1349 = vld [vmem:[%s1325 + $0x110] sm:$0xff]
        %v1350 = vld [vmem:[%s1325 + $0x120] sm:$0xff]
        %v1351 = vld [vmem:[%s1325 + $0x128] sm:$0xff]
        %v1352 = vld [vmem:[%s1325 + $0x138] sm:$0xff]
        %v1353 = vld [vmem:[%s1325 + $0x140] sm:$0xff]
        %v1354 = vld [vmem:[%s1325 + $0x150] sm:$0xff]
        %v1355 = vld [vmem:[%s1325 + $0x158] sm:$0xff]
        %v1356 = vld [vmem:[%s1325 + $0x168] sm:$0xff]
        %v1357 = vld [vmem:[%s1325 + $0x170] sm:$0xff]
        %s1358 = scalar_lea.vmem %s1, 12
        %v1359 = vld [vmem:[%s1358] sm:$0xf]
        %v1361 = vsel %vm285, %v1326, 0
        %v1364 = vsel %vm285, %v1327, 0
        %v1367 = vsel %vm285, %v1328, 0
        %v1370 = vsel %vm285, %v1329, 0
        %v1373 = vsel %vm285, %v1330, 0
        %v1376 = vsel %vm285, %v1331, 0
        %v1379 = vsel %vm285, %v1332, 0
        %v1382 = vsel %vm285, %v1333, 0
        %v1385 = vsel %vm285, %v1334, 0
        %v1388 = vsel %vm285, %v1335, 0
        %v1391 = vsel %vm285, %v1336, 0
        %v1394 = vsel %vm285, %v1337, 0
        %v1397 = vsel %vm285, %v1338, 0
        %v1400 = vsel %vm285, %v1339, 0
        %v1403 = vsel %vm285, %v1340, 0
        %v1406 = vsel %vm285, %v1341, 0
        %v1409 = vsel %vm285, %v1342, 0
        %v1412 = vsel %vm285, %v1343, 0
        %v1415 = vsel %vm285, %v1344, 0
        %v1418 = vsel %vm285, %v1345, 0
        %v1421 = vsel %vm285, %v1346, 0
        %v1424 = vsel %vm285, %v1347, 0
        %v1427 = vsel %vm285, %v1348, 0
        %v1430 = vsel %vm285, %v1349, 0
        %v1433 = vsel %vm285, %v1350, 0
        %v1436 = vsel %vm285, %v1351, 0
        %v1439 = vsel %vm285, %v1352, 0
        %v1442 = vsel %vm285, %v1353, 0
        %v1445 = vsel %vm285, %v1354, 0
        %v1448 = vsel %vm285, %v1355, 0
        %v1451 = vsel %vm285, %v1356, 0
        %v1454 = vsel %vm285, %v1357, 0
        %v1457 = vsel %vm382, %v1359, 0
        %1459 = vmatprep.subr.mxu0 0.0
        %1460 = vmatpush1.msra.mxu0 %v1457
        %1461 = vmatprep.subr.mxu0 0.0
        %1462 = vmatpush1.msra.mxu0 0.0
        %1463 = vmatprep.subr.mxu0 0.0
        %1464 = vmatpush1.msra.mxu0 0.0
        %1465 = vmatprep.subr.mxu0 0.0
        %1466 = vmatpush1.msra.mxu0 0.0
        %1467 = vmatprep.subr.mxu0 0.0
        %1468 = vmatpush1.msra.mxu0 0.0
        %1469 = vmatprep.subr.mxu0 0.0
        %1470 = vmatpush1.msra.mxu0 0.0
        %1471 = vmatprep.subr.mxu0 0.0
        %1472 = vmatpush1.msra.mxu0 0.0
        %1473 = vmatprep.subr.mxu0 0.0
        %1474 = vmatpush1.msra.mxu0 0.0
        %1475 = vmatprep.subr.mxu0 0.0
        %1476 = vmatpush1.msra.mxu0 0.0
        %1477 = vmatprep.subr.mxu0 0.0
        %1478 = vmatpush1.msra.mxu0 0.0
        %1479 = vmatprep.subr.mxu0 0.0
        %1480 = vmatpush1.msra.mxu0 0.0
        %1481 = vmatprep.subr.mxu0 0.0
        %1482 = vmatpush1.msra.mxu0 0.0
        %1483 = vmatprep.subr.mxu0 0.0
        %1484 = vmatpush1.msra.mxu0 0.0
        %1485 = vmatprep.subr.mxu0 0.0
        %1486 = vmatpush1.msra.mxu0 0.0
        %1487 = vmatprep.subr.mxu0 0.0
        %1488 = vmatpush1.msra.mxu0 0.0
        %1489 = vmatprep.subr.mxu0 0.0
        %1490 = vmatpush1.msra.mxu0 0.0
        %1491 = vmatprep.subr.mxu0 0.0
        %1492 = vmatpush1.msra.mxu0 0.0
        %1493 = vmatprep.subr.mxu0 0.0
        %1494 = vmatpush1.msra.mxu0 0.0
        %1495 = vmatprep.subr.mxu0 0.0
        %1496 = vmatpush1.msra.mxu0 0.0
        %1497 = vmatprep.subr.mxu0 0.0
        %1498 = vmatpush1.msra.mxu0 0.0
        %1499 = vmatprep.subr.mxu0 0.0
        %1500 = vmatpush1.msra.mxu0 0.0
        %1501 = vmatprep.subr.mxu0 0.0
        %1502 = vmatpush1.msra.mxu0 0.0
        %1503 = vmatprep.subr.mxu0 0.0
        %1504 = vmatpush1.msra.mxu0 0.0
        %1505 = vmatprep.subr.mxu0 0.0
        %1506 = vmatpush1.msra.mxu0 0.0
        %1507 = vmatprep.subr.mxu0 0.0
        %1508 = vmatpush1.msra.mxu0 0.0
        %1509 = vmatprep.subr.mxu0 0.0
        %1510 = vmatpush1.msra.mxu0 0.0
        %1511 = vmatprep.subr.mxu0 0.0
        %1512 = vmatpush1.msra.mxu0 0.0
        %1513 = vmatprep.subr.mxu0 0.0
        %1514 = vmatpush1.msra.mxu0 0.0
        %1515 = vmatprep.subr.mxu0 0.0
        %1516 = vmatpush1.msra.mxu0 0.0
        %1517 = vmatprep.subr.mxu0 0.0
        %1518 = vmatpush1.msra.mxu0 0.0
        %1519 = vmatprep.subr.mxu0 0.0
        %1520 = vmatpush1.msra.mxu0 0.0
        %1521 = vmatprep.subr.mxu0 0.0
        %1522 = vmatpush1.msra.mxu0 0.0
        %1523 = vmatprep.mubr.f32.mxu0 0.0
        %1524 = vmatmul.mubr.f32.gmra.mrb[0].mxu0 %v1361
        %v1525 = vpop.f32.mrb[0].mxu0
        %v1526 = vadd.f32 0.0, %v1525
        %v1527 = vpop.f32.mrb[0].mxu0
        %1528 = vmatprep.mubr.f32.mxu0 0.0
        %1529 = vmatmul.mubr.f32.gmra.mrb[0].mxu0 %v1364
        %v1530 = vpop.f32.mrb[0].mxu0
        %v1531 = vadd.f32 0.0, %v1530
        %v1532 = vpop.f32.mrb[0].mxu0
        %1533 = vmatprep.mubr.f32.mxu0 0.0
        %1534 = vmatmul.mubr.f32.gmra.mrb[0].mxu0 %v1367
        %v1535 = vpop.f32.mrb[0].mxu0
        %v1536 = vadd.f32 0.0, %v1535
        %v1537 = vpop.f32.mrb[0].mxu0
        %1538 = vmatprep.mubr.f32.mxu0 0.0
        %1539 = vmatmul.mubr.f32.gmra.mrb[0].mxu0 %v1370
        %v1540 = vpop.f32.mrb[0].mxu0
        %v1541 = vadd.f32 0.0, %v1540
        %v1542 = vpop.f32.mrb[0].mxu0
        %1543 = vmatprep.mubr.f32.mxu0 0.0
        %1544 = vmatmul.mubr.f32.gmra.mrb[0].mxu0 %v1373
        %v1545 = vpop.f32.mrb[0].mxu0
        %v1546 = vadd.f32 0.0, %v1545
        %v1547 = vpop.f32.mrb[0].mxu0
        %1548 = vmatprep.mubr.f32.mxu0 0.0
        %1549 = vmatmul.mubr.f32.gmra.mrb[0].mxu0 %v1376
        %v1550 = vpop.f32.mrb[0].mxu0
        %v1551 = vadd.f32 0.0, %v1550
        %v1552 = vpop.f32.mrb[0].mxu0
        %1553 = vmatprep.mubr.f32.mxu0 0.0
        %1554 = vmatmul.mubr.f32.gmra.mrb[0].mxu0 %v1379
        %v1555 = vpop.f32.mrb[0].mxu0
        %v1556 = vadd.f32 0.0, %v1555
        %v1557 = vpop.f32.mrb[0].mxu0
        %1558 = vmatprep.mubr.f32.mxu0 0.0
        %1559 = vmatmul.mubr.f32.gmra.mrb[0].mxu0 %v1382
        %v1560 = vpop.f32.mrb[0].mxu0
        %v1561 = vadd.f32 0.0, %v1560
        %v1562 = vpop.f32.mrb[0].mxu0
        %1563 = vmatprep.mubr.f32.mxu0 0.0
        %1564 = vmatmul.mubr.f32.gmra.mrb[0].mxu0 %v1385
        %v1565 = vpop.f32.mrb[0].mxu0
        %v1566 = vadd.f32 0.0, %v1565
        %v1567 = vpop.f32.mrb[0].mxu0
        %1568 = vmatprep.mubr.f32.mxu0 0.0
        %1569 = vmatmul.mubr.f32.gmra.mrb[0].mxu0 %v1388
        %v1570 = vpop.f32.mrb[0].mxu0
        %v1571 = vadd.f32 0.0, %v1570
        %v1572 = vpop.f32.mrb[0].mxu0
        %1573 = vmatprep.mubr.f32.mxu0 0.0
        %1574 = vmatmul.mubr.f32.gmra.mrb[0].mxu0 %v1391
        %v1575 = vpop.f32.mrb[0].mxu0
        %v1576 = vadd.f32 0.0, %v1575
        %v1577 = vpop.f32.mrb[0].mxu0
        %1578 = vmatprep.mubr.f32.mxu0 0.0
        %1579 = vmatmul.mubr.f32.gmra.mrb[0].mxu0 %v1394
        %v1580 = vpop.f32.mrb[0].mxu0
        %v1581 = vadd.f32 0.0, %v1580
        %v1582 = vpop.f32.mrb[0].mxu0
        %1583 = vmatprep.mubr.f32.mxu0 0.0
        %1584 = vmatmul.mubr.f32.gmra.mrb[0].mxu0 %v1397
        %v1585 = vpop.f32.mrb[0].mxu0
        %v1586 = vadd.f32 0.0, %v1585
        %v1587 = vpop.f32.mrb[0].mxu0
        %1588 = vmatprep.mubr.f32.mxu0 0.0
        %1589 = vmatmul.mubr.f32.gmra.mrb[0].mxu0 %v1400
        %v1590 = vpop.f32.mrb[0].mxu0
        %v1591 = vadd.f32 0.0, %v1590
        %v1592 = vpop.f32.mrb[0].mxu0
        %1593 = vmatprep.mubr.f32.mxu0 0.0
        %1594 = vmatmul.mubr.f32.gmra.mrb[0].mxu0 %v1403
        %v1595 = vpop.f32.mrb[0].mxu0
        %v1596 = vadd.f32 0.0, %v1595
        %v1597 = vpop.f32.mrb[0].mxu0
        %1598 = vmatprep.mubr.f32.mxu0 0.0
        %1599 = vmatmul.mubr.f32.gmra.mrb[0].mxu0 %v1406
        %v1600 = vpop.f32.mrb[0].mxu0
        %v1601 = vadd.f32 0.0, %v1600
        %v1602 = vpop.f32.mrb[0].mxu0
        %1603 = vmatprep.mubr.f32.mxu0 0.0
        %1604 = vmatmul.mubr.f32.gmra.mrb[0].mxu0 %v1409
        %v1605 = vpop.f32.mrb[0].mxu0
        %v1606 = vadd.f32 0.0, %v1605
        %v1607 = vpop.f32.mrb[0].mxu0
        %1608 = vmatprep.mubr.f32.mxu0 0.0
        %1609 = vmatmul.mubr.f32.gmra.mrb[0].mxu0 %v1412
        %v1610 = vpop.f32.mrb[0].mxu0
        %v1611 = vadd.f32 0.0, %v1610
        %v1612 = vpop.f32.mrb[0].mxu0
        %1613 = vmatprep.mubr.f32.mxu0 0.0
        %1614 = vmatmul.mubr.f32.gmra.mrb[0].mxu0 %v1415
        %v1615 = vpop.f32.mrb[0].mxu0
        %v1616 = vadd.f32 0.0, %v1615
        %v1617 = vpop.f32.mrb[0].mxu0
        %1618 = vmatprep.mubr.f32.mxu0 0.0
        %1619 = vmatmul.mubr.f32.gmra.mrb[0].mxu0 %v1418
        %v1620 = vpop.f32.mrb[0].mxu0
        %v1621 = vadd.f32 0.0, %v1620
        %v1622 = vpop.f32.mrb[0].mxu0
        %1623 = vmatprep.mubr.f32.mxu0 0.0
        %1624 = vmatmul.mubr.f32.gmra.mrb[0].mxu0 %v1421
        %v1625 = vpop.f32.mrb[0].mxu0
        %v1626 = vadd.f32 0.0, %v1625
        %v1627 = vpop.f32.mrb[0].mxu0
        %1628 = vmatprep.mubr.f32.mxu0 0.0
        %1629 = vmatmul.mubr.f32.gmra.mrb[0].mxu0 %v1424
        %v1630 = vpop.f32.mrb[0].mxu0
        %v1631 = vadd.f32 0.0, %v1630
        %v1632 = vpop.f32.mrb[0].mxu0
        %1633 = vmatprep.mubr.f32.mxu0 0.0
        %1634 = vmatmul.mubr.f32.gmra.mrb[0].mxu0 %v1427
        %v1635 = vpop.f32.mrb[0].mxu0
        %v1636 = vadd.f32 0.0, %v1635
        %v1637 = vpop.f32.mrb[0].mxu0
        %1638 = vmatprep.mubr.f32.mxu0 0.0
        %1639 = vmatmul.mubr.f32.gmra.mrb[0].mxu0 %v1430
        %v1640 = vpop.f32.mrb[0].mxu0
        %v1641 = vadd.f32 0.0, %v1640
        %v1642 = vpop.f32.mrb[0].mxu0
        %1643 = vmatprep.mubr.f32.mxu0 0.0
        %1644 = vmatmul.mubr.f32.gmra.mrb[0].mxu0 %v1433
        %v1645 = vpop.f32.mrb[0].mxu0
        %v1646 = vadd.f32 0.0, %v1645
        %v1647 = vpop.f32.mrb[0].mxu0
        %1648 = vmatprep.mubr.f32.mxu0 0.0
        %1649 = vmatmul.mubr.f32.gmra.mrb[0].mxu0 %v1436
        %v1650 = vpop.f32.mrb[0].mxu0
        %v1651 = vadd.f32 0.0, %v1650
        %v1652 = vpop.f32.mrb[0].mxu0
        %1653 = vmatprep.mubr.f32.mxu0 0.0
        %1654 = vmatmul.mubr.f32.gmra.mrb[0].mxu0 %v1439
        %v1655 = vpop.f32.mrb[0].mxu0
        %v1656 = vadd.f32 0.0, %v1655
        %v1657 = vpop.f32.mrb[0].mxu0
        %1658 = vmatprep.mubr.f32.mxu0 0.0
        %1659 = vmatmul.mubr.f32.gmra.mrb[0].mxu0 %v1442
        %v1660 = vpop.f32.mrb[0].mxu0
        %v1661 = vadd.f32 0.0, %v1660
        %v1662 = vpop.f32.mrb[0].mxu0
        %1663 = vmatprep.mubr.f32.mxu0 0.0
        %1664 = vmatmul.mubr.f32.gmra.mrb[0].mxu0 %v1445
        %v1665 = vpop.f32.mrb[0].mxu0
        %v1666 = vadd.f32 0.0, %v1665
        %v1667 = vpop.f32.mrb[0].mxu0
        %1668 = vmatprep.mubr.f32.mxu0 0.0
        %1669 = vmatmul.mubr.f32.gmra.mrb[0].mxu0 %v1448
        %v1670 = vpop.f32.mrb[0].mxu0
        %v1671 = vadd.f32 0.0, %v1670
        %v1672 = vpop.f32.mrb[0].mxu0
        %1673 = vmatprep.mubr.f32.mxu0 0.0
        %1674 = vmatmul.mubr.f32.gmra.mrb[0].mxu0 %v1451
        %v1675 = vpop.f32.mrb[0].mxu0
        %v1676 = vadd.f32 0.0, %v1675
        %v1677 = vpop.f32.mrb[0].mxu0
        %1678 = vmatprep.mubr.f32.mxu0 0.0
        %1679 = vmatmul.mubr.f32.gmra.mrb[0].mxu0 %v1454
        %v1680 = vpop.f32.mrb[0].mxu0
        %v1681 = vadd.f32 0.0, %v1680
        %v1682 = vpop.f32.mrb[0].mxu0
        %1683 = vdwg.mxu0
        %v1684 = vadd.f32 %v1293, %v1526
        %v1685 = vadd.f32 %v1294, %v1531
        %v1686 = vadd.f32 %v1295, %v1536
        %v1687 = vadd.f32 %v1296, %v1541
        %v1688 = vadd.f32 %v1297, %v1546
        %v1689 = vadd.f32 %v1298, %v1551
        %v1690 = vadd.f32 %v1299, %v1556
        %v1691 = vadd.f32 %v1300, %v1561
        %v1692 = vadd.f32 %v1301, %v1566
        %v1693 = vadd.f32 %v1302, %v1571
        %v1694 = vadd.f32 %v1303, %v1576
        %v1695 = vadd.f32 %v1304, %v1581
        %v1696 = vadd.f32 %v1305, %v1586
        %v1697 = vadd.f32 %v1306, %v1591
        %v1698 = vadd.f32 %v1307, %v1596
        %v1699 = vadd.f32 %v1308, %v1601
        %v1700 = vadd.f32 %v1309, %v1606
        %v1701 = vadd.f32 %v1310, %v1611
        %v1702 = vadd.f32 %v1311, %v1616
        %v1703 = vadd.f32 %v1312, %v1621
        %v1704 = vadd.f32 %v1313, %v1626
        %v1705 = vadd.f32 %v1314, %v1631
        %v1706 = vadd.f32 %v1315, %v1636
        %v1707 = vadd.f32 %v1316, %v1641
        %v1708 = vadd.f32 %v1317, %v1646
        %v1709 = vadd.f32 %v1318, %v1651
        %v1710 = vadd.f32 %v1319, %v1656
        %v1711 = vadd.f32 %v1320, %v1661
        %v1712 = vadd.f32 %v1321, %v1666
        %v1713 = vadd.f32 %v1322, %v1671
        %v1714 = vadd.f32 %v1323, %v1676
        %v1715 = vadd.f32 %v1324, %v1681
        %v1716 = vld [vmem:[%s1325 + $0x1] sm:$0xff]
        %v1717 = vld [vmem:[%s1325 + $0x9] sm:$0xff]
        %v1718 = vld [vmem:[%s1325 + $0x19] sm:$0xff]
        %v1719 = vld [vmem:[%s1325 + $0x21] sm:$0xff]
        %v1720 = vld [vmem:[%s1325 + $0x31] sm:$0xff]
        %v1721 = vld [vmem:[%s1325 + $0x39] sm:$0xff]
        %v1722 = vld [vmem:[%s1325 + $0x49] sm:$0xff]
        %v1723 = vld [vmem:[%s1325 + $0x51] sm:$0xff]
        %v1724 = vld [vmem:[%s1325 + $0x61] sm:$0xff]
        %v1725 = vld [vmem:[%s1325 + $0x69] sm:$0xff]
        %v1726 = vld [vmem:[%s1325 + $0x79] sm:$0xff]
        %v1727 = vld [vmem:[%s1325 + $0x81] sm:$0xff]
        %v1728 = vld [vmem:[%s1325 + $0x91] sm:$0xff]
        %v1729 = vld [vmem:[%s1325 + $0x99] sm:$0xff]
        %v1730 = vld [vmem:[%s1325 + $0xa9] sm:$0xff]
        %v1731 = vld [vmem:[%s1325 + $0xb1] sm:$0xff]
        %v1732 = vld [vmem:[%s1325 + $0xc1] sm:$0xff]
        %v1733 = vld [vmem:[%s1325 + $0xc9] sm:$0xff]
        %v1734 = vld [vmem:[%s1325 + $0xd9] sm:$0xff]
        %v1735 = vld [vmem:[%s1325 + $0xe1] sm:$0xff]
        %v1736 = vld [vmem:[%s1325 + $0xf1] sm:$0xff]
        %v1737 = vld [vmem:[%s1325 + $0xf9] sm:$0xff]
        %v1738 = vld [vmem:[%s1325 + $0x109] sm:$0xff]
        %v1739 = vld [vmem:[%s1325 + $0x111] sm:$0xff]
        %v1740 = vld [vmem:[%s1325 + $0x121] sm:$0xff]
        %v1741 = vld [vmem:[%s1325 + $0x129] sm:$0xff]
        %v1742 = vld [vmem:[%s1325 + $0x139] sm:$0xff]
        %v1743 = vld [vmem:[%s1325 + $0x141] sm:$0xff]
        %v1744 = vld [vmem:[%s1325 + $0x151] sm:$0xff]
        %v1745 = vld [vmem:[%s1325 + $0x159] sm:$0xff]
        %v1746 = vld [vmem:[%s1325 + $0x169] sm:$0xff]
        %v1747 = vld [vmem:[%s1325 + $0x171] sm:$0xff]
        %s1748 = scalar_lea.vmem %s1, 16
        %v1749 = vld [vmem:[%s1748] sm:$0xf]
        %v1751 = vsel %vm285, %v1716, 0
        %v1754 = vsel %vm285, %v1717, 0
        %v1757 = vsel %vm285, %v1718, 0
        %v1760 = vsel %vm285, %v1719, 0
        %v1763 = vsel %vm285, %v1720, 0
        %v1766 = vsel %vm285, %v1721, 0
        %v1769 = vsel %vm285, %v1722, 0
        %v1772 = vsel %vm285, %v1723, 0
        %v1775 = vsel %vm285, %v1724, 0
        %v1778 = vsel %vm285, %v1725, 0
        %v1781 = vsel %vm285, %v1726, 0
        %v1784 = vsel %vm285, %v1727, 0
        %v1787 = vsel %vm285, %v1728, 0
        %v1790 = vsel %vm285, %v1729, 0
        %v1793 = vsel %vm285, %v1730, 0
        %v1796 = vsel %vm285, %v1731, 0
        %v1799 = vsel %vm285, %v1732, 0
        %v1802 = vsel %vm285, %v1733, 0
        %v1805 = vsel %vm285, %v1734, 0
        %v1808 = vsel %vm285, %v1735, 0
        %v1811 = vsel %vm285, %v1736, 0
        %v1814 = vsel %vm285, %v1737, 0
        %v1817 = vsel %vm285, %v1738, 0
        %v1820 = vsel %vm285, %v1739, 0
        %v1823 = vsel %vm285, %v1740, 0
        %v1826 = vsel %vm285, %v1741, 0
        %v1829 = vsel %vm285, %v1742, 0
        %v1832 = vsel %vm285, %v1743, 0
        %v1835 = vsel %vm285, %v1744, 0
        %v1838 = vsel %vm285, %v1745, 0
        %v1841 = vsel %vm285, %v1746, 0
        %v1844 = vsel %vm285, %v1747, 0
        %v1847 = vsel %vm382, %v1749, 0
        %1849 = vmatprep.subr.mxu0 0.0
        %1850 = vmatpush1.msra.mxu0 %v1847
        %1851 = vmatprep.subr.mxu0 0.0
        %1852 = vmatpush1.msra.mxu0 0.0
        %1853 = vmatprep.subr.mxu0 0.0
        %1854 = vmatpush1.msra.mxu0 0.0
        %1855 = vmatprep.subr.mxu0 0.0
        %1856 = vmatpush1.msra.mxu0 0.0
        %1857 = vmatprep.subr.mxu0 0.0
        %1858 = vmatpush1.msra.mxu0 0.0
        %1859 = vmatprep.subr.mxu0 0.0
        %1860 = vmatpush1.msra.mxu0 0.0
        %1861 = vmatprep.subr.mxu0 0.0
        %1862 = vmatpush1.msra.mxu0 0.0
        %1863 = vmatprep.subr.mxu0 0.0
        %1864 = vmatpush1.msra.mxu0 0.0
        %1865 = vmatprep.subr.mxu0 0.0
        %1866 = vmatpush1.msra.mxu0 0.0
        %1867 = vmatprep.subr.mxu0 0.0
        %1868 = vmatpush1.msra.mxu0 0.0
        %1869 = vmatprep.subr.mxu0 0.0
        %1870 = vmatpush1.msra.mxu0 0.0
        %1871 = vmatprep.subr.mxu0 0.0
        %1872 = vmatpush1.msra.mxu0 0.0
        %1873 = vmatprep.subr.mxu0 0.0
        %1874 = vmatpush1.msra.mxu0 0.0
        %1875 = vmatprep.subr.mxu0 0.0
        %1876 = vmatpush1.msra.mxu0 0.0
        %1877 = vmatprep.subr.mxu0 0.0
        %1878 = vmatpush1.msra.mxu0 0.0
        %1879 = vmatprep.subr.mxu0 0.0
        %1880 = vmatpush1.msra.mxu0 0.0
        %1881 = vmatprep.subr.mxu0 0.0
        %1882 = vmatpush1.msra.mxu0 0.0
        %1883 = vmatprep.subr.mxu0 0.0
        %1884 = vmatpush1.msra.mxu0 0.0
        %1885 = vmatprep.subr.mxu0 0.0
        %1886 = vmatpush1.msra.mxu0 0.0
        %1887 = vmatprep.subr.mxu0 0.0
        %1888 = vmatpush1.msra.mxu0 0.0
        %1889 = vmatprep.subr.mxu0 0.0
        %1890 = vmatpush1.msra.mxu0 0.0
        %1891 = vmatprep.subr.mxu0 0.0
        %1892 = vmatpush1.msra.mxu0 0.0
        %1893 = vmatprep.subr.mxu0 0.0
        %1894 = vmatpush1.msra.mxu0 0.0
        %1895 = vmatprep.subr.mxu0 0.0
        %1896 = vmatpush1.msra.mxu0 0.0
        %1897 = vmatprep.subr.mxu0 0.0
        %1898 = vmatpush1.msra.mxu0 0.0
        %1899 = vmatprep.subr.mxu0 0.0
        %1900 = vmatpush1.msra.mxu0 0.0
        %1901 = vmatprep.subr.mxu0 0.0
        %1902 = vmatpush1.msra.mxu0 0.0
        %1903 = vmatprep.subr.mxu0 0.0
        %1904 = vmatpush1.msra.mxu0 0.0
        %1905 = vmatprep.subr.mxu0 0.0
        %1906 = vmatpush1.msra.mxu0 0.0
        %1907 = vmatprep.subr.mxu0 0.0
        %1908 = vmatpush1.msra.mxu0 0.0
        %1909 = vmatprep.subr.mxu0 0.0
        %1910 = vmatpush1.msra.mxu0 0.0
        %1911 = vmatprep.subr.mxu0 0.0
        %1912 = vmatpush1.msra.mxu0 0.0
        %1913 = vmatprep.mubr.f32.mxu0 0.0
        %1914 = vmatmul.mubr.f32.gmra.mrb[0].mxu0 %v1751
        %v1915 = vpop.f32.mrb[0].mxu0
        %v1916 = vadd.f32 0.0, %v1915
        %v1917 = vpop.f32.mrb[0].mxu0
        %1918 = vmatprep.mubr.f32.mxu0 0.0
        %1919 = vmatmul.mubr.f32.gmra.mrb[0].mxu0 %v1754
        %v1920 = vpop.f32.mrb[0].mxu0
        %v1921 = vadd.f32 0.0, %v1920
        %v1922 = vpop.f32.mrb[0].mxu0
        %1923 = vmatprep.mubr.f32.mxu0 0.0
        %1924 = vmatmul.mubr.f32.gmra.mrb[0].mxu0 %v1757
        %v1925 = vpop.f32.mrb[0].mxu0
        %v1926 = vadd.f32 0.0, %v1925
        %v1927 = vpop.f32.mrb[0].mxu0
        %1928 = vmatprep.mubr.f32.mxu0 0.0
        %1929 = vmatmul.mubr.f32.gmra.mrb[0].mxu0 %v1760
        %v1930 = vpop.f32.mrb[0].mxu0
        %v1931 = vadd.f32 0.0, %v1930
        %v1932 = vpop.f32.mrb[0].mxu0
        %1933 = vmatprep.mubr.f32.mxu0 0.0
        %1934 = vmatmul.mubr.f32.gmra.mrb[0].mxu0 %v1763
        %v1935 = vpop.f32.mrb[0].mxu0
        %v1936 = vadd.f32 0.0, %v1935
        %v1937 = vpop.f32.mrb[0].mxu0
        %1938 = vmatprep.mubr.f32.mxu0 0.0
        %1939 = vmatmul.mubr.f32.gmra.mrb[0].mxu0 %v1766
        %v1940 = vpop.f32.mrb[0].mxu0
        %v1941 = vadd.f32 0.0, %v1940
        %v1942 = vpop.f32.mrb[0].mxu0
        %1943 = vmatprep.mubr.f32.mxu0 0.0
        %1944 = vmatmul.mubr.f32.gmra.mrb[0].mxu0 %v1769
        %v1945 = vpop.f32.mrb[0].mxu0
        %v1946 = vadd.f32 0.0, %v1945
        %v1947 = vpop.f32.mrb[0].mxu0
        %1948 = vmatprep.mubr.f32.mxu0 0.0
        %1949 = vmatmul.mubr.f32.gmra.mrb[0].mxu0 %v1772
        %v1950 = vpop.f32.mrb[0].mxu0
        %v1951 = vadd.f32 0.0, %v1950
        %v1952 = vpop.f32.mrb[0].mxu0
        %1953 = vmatprep.mubr.f32.mxu0 0.0
        %1954 = vmatmul.mubr.f32.gmra.mrb[0].mxu0 %v1775
        %v1955 = vpop.f32.mrb[0].mxu0
        %v1956 = vadd.f32 0.0, %v1955
        %v1957 = vpop.f32.mrb[0].mxu0
        %1958 = vmatprep.mubr.f32.mxu0 0.0
        %1959 = vmatmul.mubr.f32.gmra.mrb[0].mxu0 %v1778
        %v1960 = vpop.f32.mrb[0].mxu0
        %v1961 = vadd.f32 0.0, %v1960
        %v1962 = vpop.f32.mrb[0].mxu0
        %1963 = vmatprep.mubr.f32.mxu0 0.0
        %1964 = vmatmul.mubr.f32.gmra.mrb[0].mxu0 %v1781
        %v1965 = vpop.f32.mrb[0].mxu0
        %v1966 = vadd.f32 0.0, %v1965
        %v1967 = vpop.f32.mrb[0].mxu0
        %1968 = vmatprep.mubr.f32.mxu0 0.0
        %1969 = vmatmul.mubr.f32.gmra.mrb[0].mxu0 %v1784
        %v1970 = vpop.f32.mrb[0].mxu0
        %v1971 = vadd.f32 0.0, %v1970
        %v1972 = vpop.f32.mrb[0].mxu0
        %1973 = vmatprep.mubr.f32.mxu0 0.0
        %1974 = vmatmul.mubr.f32.gmra.mrb[0].mxu0 %v1787
        %v1975 = vpop.f32.mrb[0].mxu0
        %v1976 = vadd.f32 0.0, %v1975
        %v1977 = vpop.f32.mrb[0].mxu0
        %1978 = vmatprep.mubr.f32.mxu0 0.0
        %1979 = vmatmul.mubr.f32.gmra.mrb[0].mxu0 %v1790
        %v1980 = vpop.f32.mrb[0].mxu0
        %v1981 = vadd.f32 0.0, %v1980
        %v1982 = vpop.f32.mrb[0].mxu0
        %1983 = vmatprep.mubr.f32.mxu0 0.0
        %1984 = vmatmul.mubr.f32.gmra.mrb[0].mxu0 %v1793
        %v1985 = vpop.f32.mrb[0].mxu0
        %v1986 = vadd.f32 0.0, %v1985
        %v1987 = vpop.f32.mrb[0].mxu0
        %1988 = vmatprep.mubr.f32.mxu0 0.0
        %1989 = vmatmul.mubr.f32.gmra.mrb[0].mxu0 %v1796
        %v1990 = vpop.f32.mrb[0].mxu0
        %v1991 = vadd.f32 0.0, %v1990
        %v1992 = vpop.f32.mrb[0].mxu0
        %1993 = vmatprep.mubr.f32.mxu0 0.0
        %1994 = vmatmul.mubr.f32.gmra.mrb[0].mxu0 %v1799
        %v1995 = vpop.f32.mrb[0].mxu0
        %v1996 = vadd.f32 0.0, %v1995
        %v1997 = vpop.f32.mrb[0].mxu0
        %1998 = vmatprep.mubr.f32.mxu0 0.0
        %1999 = vmatmul.mubr.f32.gmra.mrb[0].mxu0 %v1802
        %v2000 = vpop.f32.mrb[0].mxu0
        %v2001 = vadd.f32 0.0, %v2000
        %v2002 = vpop.f32.mrb[0].mxu0
        %2003 = vmatprep.mubr.f32.mxu0 0.0
        %2004 = vmatmul.mubr.f32.gmra.mrb[0].mxu0 %v1805
        %v2005 = vpop.f32.mrb[0].mxu0
        %v2006 = vadd.f32 0.0, %v2005
        %v2007 = vpop.f32.mrb[0].mxu0
        %2008 = vmatprep.mubr.f32.mxu0 0.0
        %2009 = vmatmul.mubr.f32.gmra.mrb[0].mxu0 %v1808
        %v2010 = vpop.f32.mrb[0].mxu0
        %v2011 = vadd.f32 0.0, %v2010
        %v2012 = vpop.f32.mrb[0].mxu0
        %2013 = vmatprep.mubr.f32.mxu0 0.0
        %2014 = vmatmul.mubr.f32.gmra.mrb[0].mxu0 %v1811
        %v2015 = vpop.f32.mrb[0].mxu0
        %v2016 = vadd.f32 0.0, %v2015
        %v2017 = vpop.f32.mrb[0].mxu0
        %2018 = vmatprep.mubr.f32.mxu0 0.0
        %2019 = vmatmul.mubr.f32.gmra.mrb[0].mxu0 %v1814
        %v2020 = vpop.f32.mrb[0].mxu0
        %v2021 = vadd.f32 0.0, %v2020
        %v2022 = vpop.f32.mrb[0].mxu0
        %2023 = vmatprep.mubr.f32.mxu0 0.0
        %2024 = vmatmul.mubr.f32.gmra.mrb[0].mxu0 %v1817
        %v2025 = vpop.f32.mrb[0].mxu0
        %v2026 = vadd.f32 0.0, %v2025
        %v2027 = vpop.f32.mrb[0].mxu0
        %2028 = vmatprep.mubr.f32.mxu0 0.0
        %2029 = vmatmul.mubr.f32.gmra.mrb[0].mxu0 %v1820
        %v2030 = vpop.f32.mrb[0].mxu0
        %v2031 = vadd.f32 0.0, %v2030
        %v2032 = vpop.f32.mrb[0].mxu0
        %2033 = vmatprep.mubr.f32.mxu0 0.0
        %2034 = vmatmul.mubr.f32.gmra.mrb[0].mxu0 %v1823
        %v2035 = vpop.f32.mrb[0].mxu0
        %v2036 = vadd.f32 0.0, %v2035
        %v2037 = vpop.f32.mrb[0].mxu0
        %2038 = vmatprep.mubr.f32.mxu0 0.0
        %2039 = vmatmul.mubr.f32.gmra.mrb[0].mxu0 %v1826
        %v2040 = vpop.f32.mrb[0].mxu0
        %v2041 = vadd.f32 0.0, %v2040
        %v2042 = vpop.f32.mrb[0].mxu0
        %2043 = vmatprep.mubr.f32.mxu0 0.0
        %2044 = vmatmul.mubr.f32.gmra.mrb[0].mxu0 %v1829
        %v2045 = vpop.f32.mrb[0].mxu0
        %v2046 = vadd.f32 0.0, %v2045
        %v2047 = vpop.f32.mrb[0].mxu0
        %2048 = vmatprep.mubr.f32.mxu0 0.0
        %2049 = vmatmul.mubr.f32.gmra.mrb[0].mxu0 %v1832
        %v2050 = vpop.f32.mrb[0].mxu0
        %v2051 = vadd.f32 0.0, %v2050
        %v2052 = vpop.f32.mrb[0].mxu0
        %2053 = vmatprep.mubr.f32.mxu0 0.0
        %2054 = vmatmul.mubr.f32.gmra.mrb[0].mxu0 %v1835
        %v2055 = vpop.f32.mrb[0].mxu0
        %v2056 = vadd.f32 0.0, %v2055
        %v2057 = vpop.f32.mrb[0].mxu0
        %2058 = vmatprep.mubr.f32.mxu0 0.0
        %2059 = vmatmul.mubr.f32.gmra.mrb[0].mxu0 %v1838
        %v2060 = vpop.f32.mrb[0].mxu0
        %v2061 = vadd.f32 0.0, %v2060
        %v2062 = vpop.f32.mrb[0].mxu0
        %2063 = vmatprep.mubr.f32.mxu0 0.0
        %2064 = vmatmul.mubr.f32.gmra.mrb[0].mxu0 %v1841
        %v2065 = vpop.f32.mrb[0].mxu0
        %v2066 = vadd.f32 0.0, %v2065
        %v2067 = vpop.f32.mrb[0].mxu0
        %2068 = vmatprep.mubr.f32.mxu0 0.0
        %2069 = vmatmul.mubr.f32.gmra.mrb[0].mxu0 %v1844
        %v2070 = vpop.f32.mrb[0].mxu0
        %v2071 = vadd.f32 0.0, %v2070
        %v2072 = vpop.f32.mrb[0].mxu0
        %2073 = vdwg.mxu0
        %v2074 = vadd.f32 %v1684, %v1916
        %v2075 = vadd.f32 %v1685, %v1921
        %v2076 = vadd.f32 %v1686, %v1926
        %v2077 = vadd.f32 %v1687, %v1931
        %v2078 = vadd.f32 %v1688, %v1936
        %v2079 = vadd.f32 %v1689, %v1941
        %v2080 = vadd.f32 %v1690, %v1946
        %v2081 = vadd.f32 %v1691, %v1951
        %v2082 = vadd.f32 %v1692, %v1956
        %v2083 = vadd.f32 %v1693, %v1961
        %v2084 = vadd.f32 %v1694, %v1966
        %v2085 = vadd.f32 %v1695, %v1971
        %v2086 = vadd.f32 %v1696, %v1976
        %v2087 = vadd.f32 %v1697, %v1981
        %v2088 = vadd.f32 %v1698, %v1986
        %v2089 = vadd.f32 %v1699, %v1991
        %v2090 = vadd.f32 %v1700, %v1996
        %v2091 = vadd.f32 %v1701, %v2001
        %v2092 = vadd.f32 %v1702, %v2006
        %v2093 = vadd.f32 %v1703, %v2011
        %v2094 = vadd.f32 %v1704, %v2016
        %v2095 = vadd.f32 %v1705, %v2021
        %v2096 = vadd.f32 %v1706, %v2026
        %v2097 = vadd.f32 %v1707, %v2031
        %v2098 = vadd.f32 %v1708, %v2036
        %v2099 = vadd.f32 %v1709, %v2041
        %v2100 = vadd.f32 %v1710, %v2046
        %v2101 = vadd.f32 %v1711, %v2051
        %v2102 = vadd.f32 %v1712, %v2056
        %v2103 = vadd.f32 %v1713, %v2061
        %v2104 = vadd.f32 %v1714, %v2066
        %v2105 = vadd.f32 %v1715, %v2071
        %v2106 = vld [vmem:[%s1325 + $0x2] sm:$0xff]
        %v2107 = vld [vmem:[%s1325 + $0xa] sm:$0xff]
        %v2108 = vld [vmem:[%s1325 + $0x1a] sm:$0xff]
        %v2109 = vld [vmem:[%s1325 + $0x22] sm:$0xff]
        %v2110 = vld [vmem:[%s1325 + $0x32] sm:$0xff]
        %v2111 = vld [vmem:[%s1325 + $0x3a] sm:$0xff]
        %v2112 = vld [vmem:[%s1325 + $0x4a] sm:$0xff]
        %v2113 = vld [vmem:[%s1325 + $0x52] sm:$0xff]
        %v2114 = vld [vmem:[%s1325 + $0x62] sm:$0xff]
        %v2115 = vld [vmem:[%s1325 + $0x6a] sm:$0xff]
        %v2116 = vld [vmem:[%s1325 + $0x7a] sm:$0xff]
        %v2117 = vld [vmem:[%s1325 + $0x82] sm:$0xff]
        %v2118 = vld [vmem:[%s1325 + $0x92] sm:$0xff]
        %v2119 = vld [vmem:[%s1325 + $0x9a] sm:$0xff]
        %v2120 = vld [vmem:[%s1325 + $0xaa] sm:$0xff]
        %v2121 = vld [vmem:[%s1325 + $0xb2] sm:$0xff]
        %v2122 = vld [vmem:[%s1325 + $0xc2] sm:$0xff]
        %v2123 = vld [vmem:[%s1325 + $0xca] sm:$0xff]
        %v2124 = vld [vmem:[%s1325 + $0xda] sm:$0xff]
        %v2125 = vld [vmem:[%s1325 + $0xe2] sm:$0xff]
        %v2126 = vld [vmem:[%s1325 + $0xf2] sm:$0xff]
        %v2127 = vld [vmem:[%s1325 + $0xfa] sm:$0xff]
        %v2128 = vld [vmem:[%s1325 + $0x10a] sm:$0xff]
        %v2129 = vld [vmem:[%s1325 + $0x112] sm:$0xff]
        %v2130 = vld [vmem:[%s1325 + $0x122] sm:$0xff]
        %v2131 = vld [vmem:[%s1325 + $0x12a] sm:$0xff]
        %v2132 = vld [vmem:[%s1325 + $0x13a] sm:$0xff]
        %v2133 = vld [vmem:[%s1325 + $0x142] sm:$0xff]
        %v2134 = vld [vmem:[%s1325 + $0x152] sm:$0xff]
        %v2135 = vld [vmem:[%s1325 + $0x15a] sm:$0xff]
        %v2136 = vld [vmem:[%s1325 + $0x16a] sm:$0xff]
        %v2137 = vld [vmem:[%s1325 + $0x172] sm:$0xff]
        %s2138 = scalar_lea.vmem %s1, 20
        %v2139 = vld [vmem:[%s2138] sm:$0xf]
        %v2141 = vsel %vm285, %v2106, 0
        %v2144 = vsel %vm285, %v2107, 0
        %v2147 = vsel %vm285, %v2108, 0
        %v2150 = vsel %vm285, %v2109, 0
        %v2153 = vsel %vm285, %v2110, 0
        %v2156 = vsel %vm285, %v2111, 0
        %v2159 = vsel %vm285, %v2112, 0
        %v2162 = vsel %vm285, %v2113, 0
        %v2165 = vsel %vm285, %v2114, 0
        %v2168 = vsel %vm285, %v2115, 0
        %v2171 = vsel %vm285, %v2116, 0
        %v2174 = vsel %vm285, %v2117, 0
        %v2177 = vsel %vm285, %v2118, 0
        %v2180 = vsel %vm285, %v2119, 0
        %v2183 = vsel %vm285, %v2120, 0
        %v2186 = vsel %vm285, %v2121, 0
        %v2189 = vsel %vm285, %v2122, 0
        %v2192 = vsel %vm285, %v2123, 0
        %v2195 = vsel %vm285, %v2124, 0
        %v2198 = vsel %vm285, %v2125, 0
        %v2201 = vsel %vm285, %v2126, 0
        %v2204 = vsel %vm285, %v2127, 0
        %v2207 = vsel %vm285, %v2128, 0
        %v2210 = vsel %vm285, %v2129, 0
        %v2213 = vsel %vm285, %v2130, 0
        %v2216 = vsel %vm285, %v2131, 0
        %v2219 = vsel %vm285, %v2132, 0
        %v2222 = vsel %vm285, %v2133, 0
        %v2225 = vsel %vm285, %v2134, 0
        %v2228 = vsel %vm285, %v2135, 0
        %v2231 = vsel %vm285, %v2136, 0
        %v2234 = vsel %vm285, %v2137, 0
        %v2237 = vsel %vm382, %v2139, 0
        %2239 = vmatprep.subr.mxu0 0.0
        %2240 = vmatpush1.msra.mxu0 %v2237
        %2241 = vmatprep.subr.mxu0 0.0
        %2242 = vmatpush1.msra.mxu0 0.0
        %2243 = vmatprep.subr.mxu0 0.0
        %2244 = vmatpush1.msra.mxu0 0.0
        %2245 = vmatprep.subr.mxu0 0.0
        %2246 = vmatpush1.msra.mxu0 0.0
        %2247 = vmatprep.subr.mxu0 0.0
        %2248 = vmatpush1.msra.mxu0 0.0
        %2249 = vmatprep.subr.mxu0 0.0
        %2250 = vmatpush1.msra.mxu0 0.0
        %2251 = vmatprep.subr.mxu0 0.0
        %2252 = vmatpush1.msra.mxu0 0.0
        %2253 = vmatprep.subr.mxu0 0.0
        %2254 = vmatpush1.msra.mxu0 0.0
        %2255 = vmatprep.subr.mxu0 0.0
        %2256 = vmatpush1.msra.mxu0 0.0
        %2257 = vmatprep.subr.mxu0 0.0
        %2258 = vmatpush1.msra.mxu0 0.0
        %2259 = vmatprep.subr.mxu0 0.0
        %2260 = vmatpush1.msra.mxu0 0.0
        %2261 = vmatprep.subr.mxu0 0.0
        %2262 = vmatpush1.msra.mxu0 0.0
        %2263 = vmatprep.subr.mxu0 0.0
        %2264 = vmatpush1.msra.mxu0 0.0
        %2265 = vmatprep.subr.mxu0 0.0
        %2266 = vmatpush1.msra.mxu0 0.0
        %2267 = vmatprep.subr.mxu0 0.0
        %2268 = vmatpush1.msra.mxu0 0.0
        %2269 = vmatprep.subr.mxu0 0.0
        %2270 = vmatpush1.msra.mxu0 0.0
        %2271 = vmatprep.subr.mxu0 0.0
        %2272 = vmatpush1.msra.mxu0 0.0
        %2273 = vmatprep.subr.mxu0 0.0
        %2274 = vmatpush1.msra.mxu0 0.0
        %2275 = vmatprep.subr.mxu0 0.0
        %2276 = vmatpush1.msra.mxu0 0.0
        %2277 = vmatprep.subr.mxu0 0.0
        %2278 = vmatpush1.msra.mxu0 0.0
        %2279 = vmatprep.subr.mxu0 0.0
        %2280 = vmatpush1.msra.mxu0 0.0
        %2281 = vmatprep.subr.mxu0 0.0
        %2282 = vmatpush1.msra.mxu0 0.0
        %2283 = vmatprep.subr.mxu0 0.0
        %2284 = vmatpush1.msra.mxu0 0.0
        %2285 = vmatprep.subr.mxu0 0.0
        %2286 = vmatpush1.msra.mxu0 0.0
        %2287 = vmatprep.subr.mxu0 0.0
        %2288 = vmatpush1.msra.mxu0 0.0
        %2289 = vmatprep.subr.mxu0 0.0
        %2290 = vmatpush1.msra.mxu0 0.0
        %2291 = vmatprep.subr.mxu0 0.0
        %2292 = vmatpush1.msra.mxu0 0.0
        %2293 = vmatprep.subr.mxu0 0.0
        %2294 = vmatpush1.msra.mxu0 0.0
        %2295 = vmatprep.subr.mxu0 0.0
        %2296 = vmatpush1.msra.mxu0 0.0
        %2297 = vmatprep.subr.mxu0 0.0
        %2298 = vmatpush1.msra.mxu0 0.0
        %2299 = vmatprep.subr.mxu0 0.0
        %2300 = vmatpush1.msra.mxu0 0.0
        %2301 = vmatprep.subr.mxu0 0.0
        %2302 = vmatpush1.msra.mxu0 0.0
        %2303 = vmatprep.mubr.f32.mxu0 0.0
        %2304 = vmatmul.mubr.f32.gmra.mrb[0].mxu0 %v2141
        %v2305 = vpop.f32.mrb[0].mxu0
        %v2306 = vadd.f32 0.0, %v2305
        %v2307 = vpop.f32.mrb[0].mxu0
        %2308 = vmatprep.mubr.f32.mxu0 0.0
        %2309 = vmatmul.mubr.f32.gmra.mrb[0].mxu0 %v2144
        %v2310 = vpop.f32.mrb[0].mxu0
        %v2311 = vadd.f32 0.0, %v2310
        %v2312 = vpop.f32.mrb[0].mxu0
        %2313 = vmatprep.mubr.f32.mxu0 0.0
        %2314 = vmatmul.mubr.f32.gmra.mrb[0].mxu0 %v2147
        %v2315 = vpop.f32.mrb[0].mxu0
        %v2316 = vadd.f32 0.0, %v2315
        %v2317 = vpop.f32.mrb[0].mxu0
        %2318 = vmatprep.mubr.f32.mxu0 0.0
        %2319 = vmatmul.mubr.f32.gmra.mrb[0].mxu0 %v2150
        %v2320 = vpop.f32.mrb[0].mxu0
        %v2321 = vadd.f32 0.0, %v2320
        %v2322 = vpop.f32.mrb[0].mxu0
        %2323 = vmatprep.mubr.f32.mxu0 0.0
        %2324 = vmatmul.mubr.f32.gmra.mrb[0].mxu0 %v2153
        %v2325 = vpop.f32.mrb[0].mxu0
        %v2326 = vadd.f32 0.0, %v2325
        %v2327 = vpop.f32.mrb[0].mxu0
        %2328 = vmatprep.mubr.f32.mxu0 0.0
        %2329 = vmatmul.mubr.f32.gmra.mrb[0].mxu0 %v2156
        %v2330 = vpop.f32.mrb[0].mxu0
        %v2331 = vadd.f32 0.0, %v2330
        %v2332 = vpop.f32.mrb[0].mxu0
        %2333 = vmatprep.mubr.f32.mxu0 0.0
        %2334 = vmatmul.mubr.f32.gmra.mrb[0].mxu0 %v2159
        %v2335 = vpop.f32.mrb[0].mxu0
        %v2336 = vadd.f32 0.0, %v2335
        %v2337 = vpop.f32.mrb[0].mxu0
        %2338 = vmatprep.mubr.f32.mxu0 0.0
        %2339 = vmatmul.mubr.f32.gmra.mrb[0].mxu0 %v2162
        %v2340 = vpop.f32.mrb[0].mxu0
        %v2341 = vadd.f32 0.0, %v2340
        %v2342 = vpop.f32.mrb[0].mxu0
        %2343 = vmatprep.mubr.f32.mxu0 0.0
        %2344 = vmatmul.mubr.f32.gmra.mrb[0].mxu0 %v2165
        %v2345 = vpop.f32.mrb[0].mxu0
        %v2346 = vadd.f32 0.0, %v2345
        %v2347 = vpop.f32.mrb[0].mxu0
        %2348 = vmatprep.mubr.f32.mxu0 0.0
        %2349 = vmatmul.mubr.f32.gmra.mrb[0].mxu0 %v2168
        %v2350 = vpop.f32.mrb[0].mxu0
        %v2351 = vadd.f32 0.0, %v2350
        %v2352 = vpop.f32.mrb[0].mxu0
        %2353 = vmatprep.mubr.f32.mxu0 0.0
        %2354 = vmatmul.mubr.f32.gmra.mrb[0].mxu0 %v2171
        %v2355 = vpop.f32.mrb[0].mxu0
        %v2356 = vadd.f32 0.0, %v2355
        %v2357 = vpop.f32.mrb[0].mxu0
        %2358 = vmatprep.mubr.f32.mxu0 0.0
        %2359 = vmatmul.mubr.f32.gmra.mrb[0].mxu0 %v2174
        %v2360 = vpop.f32.mrb[0].mxu0
        %v2361 = vadd.f32 0.0, %v2360
        %v2362 = vpop.f32.mrb[0].mxu0
        %2363 = vmatprep.mubr.f32.mxu0 0.0
        %2364 = vmatmul.mubr.f32.gmra.mrb[0].mxu0 %v2177
        %v2365 = vpop.f32.mrb[0].mxu0
        %v2366 = vadd.f32 0.0, %v2365
        %v2367 = vpop.f32.mrb[0].mxu0
        %2368 = vmatprep.mubr.f32.mxu0 0.0
        %2369 = vmatmul.mubr.f32.gmra.mrb[0].mxu0 %v2180
        %v2370 = vpop.f32.mrb[0].mxu0
        %v2371 = vadd.f32 0.0, %v2370
        %v2372 = vpop.f32.mrb[0].mxu0
        %2373 = vmatprep.mubr.f32.mxu0 0.0
        %2374 = vmatmul.mubr.f32.gmra.mrb[0].mxu0 %v2183
        %v2375 = vpop.f32.mrb[0].mxu0
        %v2376 = vadd.f32 0.0, %v2375
        %v2377 = vpop.f32.mrb[0].mxu0
        %2378 = vmatprep.mubr.f32.mxu0 0.0
        %2379 = vmatmul.mubr.f32.gmra.mrb[0].mxu0 %v2186
        %v2380 = vpop.f32.mrb[0].mxu0
        %v2381 = vadd.f32 0.0, %v2380
        %v2382 = vpop.f32.mrb[0].mxu0
        %2383 = vmatprep.mubr.f32.mxu0 0.0
        %2384 = vmatmul.mubr.f32.gmra.mrb[0].mxu0 %v2189
        %v2385 = vpop.f32.mrb[0].mxu0
        %v2386 = vadd.f32 0.0, %v2385
        %v2387 = vpop.f32.mrb[0].mxu0
        %2388 = vmatprep.mubr.f32.mxu0 0.0
        %2389 = vmatmul.mubr.f32.gmra.mrb[0].mxu0 %v2192
        %v2390 = vpop.f32.mrb[0].mxu0
        %v2391 = vadd.f32 0.0, %v2390
        %v2392 = vpop.f32.mrb[0].mxu0
        %2393 = vmatprep.mubr.f32.mxu0 0.0
        %2394 = vmatmul.mubr.f32.gmra.mrb[0].mxu0 %v2195
        %v2395 = vpop.f32.mrb[0].mxu0
        %v2396 = vadd.f32 0.0, %v2395
        %v2397 = vpop.f32.mrb[0].mxu0
        %2398 = vmatprep.mubr.f32.mxu0 0.0
        %2399 = vmatmul.mubr.f32.gmra.mrb[0].mxu0 %v2198
        %v2400 = vpop.f32.mrb[0].mxu0
        %v2401 = vadd.f32 0.0, %v2400
        %v2402 = vpop.f32.mrb[0].mxu0
        %2403 = vmatprep.mubr.f32.mxu0 0.0
        %2404 = vmatmul.mubr.f32.gmra.mrb[0].mxu0 %v2201
        %v2405 = vpop.f32.mrb[0].mxu0
        %v2406 = vadd.f32 0.0, %v2405
        %v2407 = vpop.f32.mrb[0].mxu0
        %2408 = vmatprep.mubr.f32.mxu0 0.0
        %2409 = vmatmul.mubr.f32.gmra.mrb[0].mxu0 %v2204
        %v2410 = vpop.f32.mrb[0].mxu0
        %v2411 = vadd.f32 0.0, %v2410
        %v2412 = vpop.f32.mrb[0].mxu0
        %2413 = vmatprep.mubr.f32.mxu0 0.0
        %2414 = vmatmul.mubr.f32.gmra.mrb[0].mxu0 %v2207
        %v2415 = vpop.f32.mrb[0].mxu0
        %v2416 = vadd.f32 0.0, %v2415
        %v2417 = vpop.f32.mrb[0].mxu0
        %2418 = vmatprep.mubr.f32.mxu0 0.0
        %2419 = vmatmul.mubr.f32.gmra.mrb[0].mxu0 %v2210
        %v2420 = vpop.f32.mrb[0].mxu0
        %v2421 = vadd.f32 0.0, %v2420
        %v2422 = vpop.f32.mrb[0].mxu0
        %2423 = vmatprep.mubr.f32.mxu0 0.0
        %2424 = vmatmul.mubr.f32.gmra.mrb[0].mxu0 %v2213
        %v2425 = vpop.f32.mrb[0].mxu0
        %v2426 = vadd.f32 0.0, %v2425
        %v2427 = vpop.f32.mrb[0].mxu0
        %2428 = vmatprep.mubr.f32.mxu0 0.0
        %2429 = vmatmul.mubr.f32.gmra.mrb[0].mxu0 %v2216
        %v2430 = vpop.f32.mrb[0].mxu0
        %v2431 = vadd.f32 0.0, %v2430
        %v2432 = vpop.f32.mrb[0].mxu0
        %2433 = vmatprep.mubr.f32.mxu0 0.0
        %2434 = vmatmul.mubr.f32.gmra.mrb[0].mxu0 %v2219
        %v2435 = vpop.f32.mrb[0].mxu0
        %v2436 = vadd.f32 0.0, %v2435
        %v2437 = vpop.f32.mrb[0].mxu0
        %2438 = vmatprep.mubr.f32.mxu0 0.0
        %2439 = vmatmul.mubr.f32.gmra.mrb[0].mxu0 %v2222
        %v2440 = vpop.f32.mrb[0].mxu0
        %v2441 = vadd.f32 0.0, %v2440
        %v2442 = vpop.f32.mrb[0].mxu0
        %2443 = vmatprep.mubr.f32.mxu0 0.0
        %2444 = vmatmul.mubr.f32.gmra.mrb[0].mxu0 %v2225
        %v2445 = vpop.f32.mrb[0].mxu0
        %v2446 = vadd.f32 0.0, %v2445
        %v2447 = vpop.f32.mrb[0].mxu0
        %2448 = vmatprep.mubr.f32.mxu0 0.0
        %2449 = vmatmul.mubr.f32.gmra.mrb[0].mxu0 %v2228
        %v2450 = vpop.f32.mrb[0].mxu0
        %v2451 = vadd.f32 0.0, %v2450
        %v2452 = vpop.f32.mrb[0].mxu0
        %2453 = vmatprep.mubr.f32.mxu0 0.0
        %2454 = vmatmul.mubr.f32.gmra.mrb[0].mxu0 %v2231
        %v2455 = vpop.f32.mrb[0].mxu0
        %v2456 = vadd.f32 0.0, %v2455
        %v2457 = vpop.f32.mrb[0].mxu0
        %2458 = vmatprep.mubr.f32.mxu0 0.0
        %2459 = vmatmul.mubr.f32.gmra.mrb[0].mxu0 %v2234
        %v2460 = vpop.f32.mrb[0].mxu0
        %v2461 = vadd.f32 0.0, %v2460
        %v2462 = vpop.f32.mrb[0].mxu0
        %2463 = vdwg.mxu0
        %v2464 = vadd.f32 %v2074, %v2306
        %v2465 = vadd.f32 %v2075, %v2311
        %v2466 = vadd.f32 %v2076, %v2316
        %v2467 = vadd.f32 %v2077, %v2321
        %v2468 = vadd.f32 %v2078, %v2326
        %v2469 = vadd.f32 %v2079, %v2331
        %v2470 = vadd.f32 %v2080, %v2336
        %v2471 = vadd.f32 %v2081, %v2341
        %v2472 = vadd.f32 %v2082, %v2346
        %v2473 = vadd.f32 %v2083, %v2351
        %v2474 = vadd.f32 %v2084, %v2356
        %v2475 = vadd.f32 %v2085, %v2361
        %v2476 = vadd.f32 %v2086, %v2366
        %v2477 = vadd.f32 %v2087, %v2371
        %v2478 = vadd.f32 %v2088, %v2376
        %v2479 = vadd.f32 %v2089, %v2381
        %v2480 = vadd.f32 %v2090, %v2386
        %v2481 = vadd.f32 %v2091, %v2391
        %v2482 = vadd.f32 %v2092, %v2396
        %v2483 = vadd.f32 %v2093, %v2401
        %v2484 = vadd.f32 %v2094, %v2406
        %v2485 = vadd.f32 %v2095, %v2411
        %v2486 = vadd.f32 %v2096, %v2416
        %v2487 = vadd.f32 %v2097, %v2421
        %v2488 = vadd.f32 %v2098, %v2426
        %v2489 = vadd.f32 %v2099, %v2431
        %v2490 = vadd.f32 %v2100, %v2436
        %v2491 = vadd.f32 %v2101, %v2441
        %v2492 = vadd.f32 %v2102, %v2446
        %v2493 = vadd.f32 %v2103, %v2451
        %v2494 = vadd.f32 %v2104, %v2456
        %v2495 = vadd.f32 %v2105, %v2461
        %s2496 = scalar_lea.vmem %s195, 48
        %v2497 = vld [vmem:[%s2496] sm:$0xff]
        %v2498 = vld [vmem:[%s2496 + $0x8] sm:$0xff]
        %v2499 = vld [vmem:[%s2496 + $0x18] sm:$0xff]
        %v2500 = vld [vmem:[%s2496 + $0x20] sm:$0xff]
        %v2501 = vld [vmem:[%s2496 + $0x30] sm:$0xff]
        %v2502 = vld [vmem:[%s2496 + $0x38] sm:$0xff]
        %v2503 = vld [vmem:[%s2496 + $0x48] sm:$0xff]
        %v2504 = vld [vmem:[%s2496 + $0x50] sm:$0xff]
        %v2505 = vld [vmem:[%s2496 + $0x60] sm:$0xff]
        %v2506 = vld [vmem:[%s2496 + $0x68] sm:$0xff]
        %v2507 = vld [vmem:[%s2496 + $0x78] sm:$0xff]
        %v2508 = vld [vmem:[%s2496 + $0x80] sm:$0xff]
        %v2509 = vld [vmem:[%s2496 + $0x90] sm:$0xff]
        %v2510 = vld [vmem:[%s2496 + $0x98] sm:$0xff]
        %v2511 = vld [vmem:[%s2496 + $0xa8] sm:$0xff]
        %v2512 = vld [vmem:[%s2496 + $0xb0] sm:$0xff]
        %v2513 = vld [vmem:[%s2496 + $0xc0] sm:$0xff]
        %v2514 = vld [vmem:[%s2496 + $0xc8] sm:$0xff]
        %v2515 = vld [vmem:[%s2496 + $0xd8] sm:$0xff]
        %v2516 = vld [vmem:[%s2496 + $0xe0] sm:$0xff]
        %v2517 = vld [vmem:[%s2496 + $0xf0] sm:$0xff]
        %v2518 = vld [vmem:[%s2496 + $0xf8] sm:$0xff]
        %v2519 = vld [vmem:[%s2496 + $0x108] sm:$0xff]
        %v2520 = vld [vmem:[%s2496 + $0x110] sm:$0xff]
        %v2521 = vld [vmem:[%s2496 + $0x120] sm:$0xff]
        %v2522 = vld [vmem:[%s2496 + $0x128] sm:$0xff]
        %v2523 = vld [vmem:[%s2496 + $0x138] sm:$0xff]
        %v2524 = vld [vmem:[%s2496 + $0x140] sm:$0xff]
        %v2525 = vld [vmem:[%s2496 + $0x150] sm:$0xff]
        %v2526 = vld [vmem:[%s2496 + $0x158] sm:$0xff]
        %v2527 = vld [vmem:[%s2496 + $0x168] sm:$0xff]
        %v2528 = vld [vmem:[%s2496 + $0x170] sm:$0xff]
        %s2529 = scalar_lea.vmem %s1, 24
        %v2530 = vld [vmem:[%s2529] sm:$0xf]
        %v2532 = vsel %vm285, %v2497, 0
        %v2535 = vsel %vm285, %v2498, 0
        %v2538 = vsel %vm285, %v2499, 0
        %v2541 = vsel %vm285, %v2500, 0
        %v2544 = vsel %vm285, %v2501, 0
        %v2547 = vsel %vm285, %v2502, 0
        %v2550 = vsel %vm285, %v2503, 0
        %v2553 = vsel %vm285, %v2504, 0
        %v2556 = vsel %vm285, %v2505, 0
        %v2559 = vsel %vm285, %v2506, 0
        %v2562 = vsel %vm285, %v2507, 0
        %v2565 = vsel %vm285, %v2508, 0
        %v2568 = vsel %vm285, %v2509, 0
        %v2571 = vsel %vm285, %v2510, 0
        %v2574 = vsel %vm285, %v2511, 0
        %v2577 = vsel %vm285, %v2512, 0
        %v2580 = vsel %vm285, %v2513, 0
        %v2583 = vsel %vm285, %v2514, 0
        %v2586 = vsel %vm285, %v2515, 0
        %v2589 = vsel %vm285, %v2516, 0
        %v2592 = vsel %vm285, %v2517, 0
        %v2595 = vsel %vm285, %v2518, 0
        %v2598 = vsel %vm285, %v2519, 0
        %v2601 = vsel %vm285, %v2520, 0
        %v2604 = vsel %vm285, %v2521, 0
        %v2607 = vsel %vm285, %v2522, 0
        %v2610 = vsel %vm285, %v2523, 0
        %v2613 = vsel %vm285, %v2524, 0
        %v2616 = vsel %vm285, %v2525, 0
        %v2619 = vsel %vm285, %v2526, 0
        %v2622 = vsel %vm285, %v2527, 0
        %v2625 = vsel %vm285, %v2528, 0
        %v2628 = vsel %vm382, %v2530, 0
        %2630 = vmatprep.subr.mxu0 0.0
        %2631 = vmatpush1.msra.mxu0 %v2628
        %2632 = vmatprep.subr.mxu0 0.0
        %2633 = vmatpush1.msra.mxu0 0.0
        %2634 = vmatprep.subr.mxu0 0.0
        %2635 = vmatpush1.msra.mxu0 0.0
        %2636 = vmatprep.subr.mxu0 0.0
        %2637 = vmatpush1.msra.mxu0 0.0
        %2638 = vmatprep.subr.mxu0 0.0
        %2639 = vmatpush1.msra.mxu0 0.0
        %2640 = vmatprep.subr.mxu0 0.0
        %2641 = vmatpush1.msra.mxu0 0.0
        %2642 = vmatprep.subr.mxu0 0.0
        %2643 = vmatpush1.msra.mxu0 0.0
        %2644 = vmatprep.subr.mxu0 0.0
        %2645 = vmatpush1.msra.mxu0 0.0
        %2646 = vmatprep.subr.mxu0 0.0
        %2647 = vmatpush1.msra.mxu0 0.0
        %2648 = vmatprep.subr.mxu0 0.0
        %2649 = vmatpush1.msra.mxu0 0.0
        %2650 = vmatprep.subr.mxu0 0.0
        %2651 = vmatpush1.msra.mxu0 0.0
        %2652 = vmatprep.subr.mxu0 0.0
        %2653 = vmatpush1.msra.mxu0 0.0
        %2654 = vmatprep.subr.mxu0 0.0
        %2655 = vmatpush1.msra.mxu0 0.0
        %2656 = vmatprep.subr.mxu0 0.0
        %2657 = vmatpush1.msra.mxu0 0.0
        %2658 = vmatprep.subr.mxu0 0.0
        %2659 = vmatpush1.msra.mxu0 0.0
        %2660 = vmatprep.subr.mxu0 0.0
        %2661 = vmatpush1.msra.mxu0 0.0
        %2662 = vmatprep.subr.mxu0 0.0
        %2663 = vmatpush1.msra.mxu0 0.0
        %2664 = vmatprep.subr.mxu0 0.0
        %2665 = vmatpush1.msra.mxu0 0.0
        %2666 = vmatprep.subr.mxu0 0.0
        %2667 = vmatpush1.msra.mxu0 0.0
        %2668 = vmatprep.subr.mxu0 0.0
        %2669 = vmatpush1.msra.mxu0 0.0
        %2670 = vmatprep.subr.mxu0 0.0
        %2671 = vmatpush1.msra.mxu0 0.0
        %2672 = vmatprep.subr.mxu0 0.0
        %2673 = vmatpush1.msra.mxu0 0.0
        %2674 = vmatprep.subr.mxu0 0.0
        %2675 = vmatpush1.msra.mxu0 0.0
        %2676 = vmatprep.subr.mxu0 0.0
        %2677 = vmatpush1.msra.mxu0 0.0
        %2678 = vmatprep.subr.mxu0 0.0
        %2679 = vmatpush1.msra.mxu0 0.0
        %2680 = vmatprep.subr.mxu0 0.0
        %2681 = vmatpush1.msra.mxu0 0.0
        %2682 = vmatprep.subr.mxu0 0.0
        %2683 = vmatpush1.msra.mxu0 0.0
        %2684 = vmatprep.subr.mxu0 0.0
        %2685 = vmatpush1.msra.mxu0 0.0
        %2686 = vmatprep.subr.mxu0 0.0
        %2687 = vmatpush1.msra.mxu0 0.0
        %2688 = vmatprep.subr.mxu0 0.0
        %2689 = vmatpush1.msra.mxu0 0.0
        %2690 = vmatprep.subr.mxu0 0.0
        %2691 = vmatpush1.msra.mxu0 0.0
        %2692 = vmatprep.subr.mxu0 0.0
        %2693 = vmatpush1.msra.mxu0 0.0
        %2694 = vmatprep.mubr.f32.mxu0 0.0
        %2695 = vmatmul.mubr.f32.gmra.mrb[0].mxu0 %v2532
        %v2696 = vpop.f32.mrb[0].mxu0
        %v2697 = vadd.f32 0.0, %v2696
        %v2698 = vpop.f32.mrb[0].mxu0
        %2699 = vmatprep.mubr.f32.mxu0 0.0
        %2700 = vmatmul.mubr.f32.gmra.mrb[0].mxu0 %v2535
        %v2701 = vpop.f32.mrb[0].mxu0
        %v2702 = vadd.f32 0.0, %v2701
        %v2703 = vpop.f32.mrb[0].mxu0
        %2704 = vmatprep.mubr.f32.mxu0 0.0
        %2705 = vmatmul.mubr.f32.gmra.mrb[0].mxu0 %v2538
        %v2706 = vpop.f32.mrb[0].mxu0
        %v2707 = vadd.f32 0.0, %v2706
        %v2708 = vpop.f32.mrb[0].mxu0
        %2709 = vmatprep.mubr.f32.mxu0 0.0
        %2710 = vmatmul.mubr.f32.gmra.mrb[0].mxu0 %v2541
        %v2711 = vpop.f32.mrb[0].mxu0
        %v2712 = vadd.f32 0.0, %v2711
        %v2713 = vpop.f32.mrb[0].mxu0
        %2714 = vmatprep.mubr.f32.mxu0 0.0
        %2715 = vmatmul.mubr.f32.gmra.mrb[0].mxu0 %v2544
        %v2716 = vpop.f32.mrb[0].mxu0
        %v2717 = vadd.f32 0.0, %v2716
        %v2718 = vpop.f32.mrb[0].mxu0
        %2719 = vmatprep.mubr.f32.mxu0 0.0
        %2720 = vmatmul.mubr.f32.gmra.mrb[0].mxu0 %v2547
        %v2721 = vpop.f32.mrb[0].mxu0
        %v2722 = vadd.f32 0.0, %v2721
        %v2723 = vpop.f32.mrb[0].mxu0
        %2724 = vmatprep.mubr.f32.mxu0 0.0
        %2725 = vmatmul.mubr.f32.gmra.mrb[0].mxu0 %v2550
        %v2726 = vpop.f32.mrb[0].mxu0
        %v2727 = vadd.f32 0.0, %v2726
        %v2728 = vpop.f32.mrb[0].mxu0
        %2729 = vmatprep.mubr.f32.mxu0 0.0
        %2730 = vmatmul.mubr.f32.gmra.mrb[0].mxu0 %v2553
        %v2731 = vpop.f32.mrb[0].mxu0
        %v2732 = vadd.f32 0.0, %v2731
        %v2733 = vpop.f32.mrb[0].mxu0
        %2734 = vmatprep.mubr.f32.mxu0 0.0
        %2735 = vmatmul.mubr.f32.gmra.mrb[0].mxu0 %v2556
        %v2736 = vpop.f32.mrb[0].mxu0
        %v2737 = vadd.f32 0.0, %v2736
        %v2738 = vpop.f32.mrb[0].mxu0
        %2739 = vmatprep.mubr.f32.mxu0 0.0
        %2740 = vmatmul.mubr.f32.gmra.mrb[0].mxu0 %v2559
        %v2741 = vpop.f32.mrb[0].mxu0
        %v2742 = vadd.f32 0.0, %v2741
        %v2743 = vpop.f32.mrb[0].mxu0
        %2744 = vmatprep.mubr.f32.mxu0 0.0
        %2745 = vmatmul.mubr.f32.gmra.mrb[0].mxu0 %v2562
        %v2746 = vpop.f32.mrb[0].mxu0
        %v2747 = vadd.f32 0.0, %v2746
        %v2748 = vpop.f32.mrb[0].mxu0
        %2749 = vmatprep.mubr.f32.mxu0 0.0
        %2750 = vmatmul.mubr.f32.gmra.mrb[0].mxu0 %v2565
        %v2751 = vpop.f32.mrb[0].mxu0
        %v2752 = vadd.f32 0.0, %v2751
        %v2753 = vpop.f32.mrb[0].mxu0
        %2754 = vmatprep.mubr.f32.mxu0 0.0
        %2755 = vmatmul.mubr.f32.gmra.mrb[0].mxu0 %v2568
        %v2756 = vpop.f32.mrb[0].mxu0
        %v2757 = vadd.f32 0.0, %v2756
        %v2758 = vpop.f32.mrb[0].mxu0
        %2759 = vmatprep.mubr.f32.mxu0 0.0
        %2760 = vmatmul.mubr.f32.gmra.mrb[0].mxu0 %v2571
        %v2761 = vpop.f32.mrb[0].mxu0
        %v2762 = vadd.f32 0.0, %v2761
        %v2763 = vpop.f32.mrb[0].mxu0
        %2764 = vmatprep.mubr.f32.mxu0 0.0
        %2765 = vmatmul.mubr.f32.gmra.mrb[0].mxu0 %v2574
        %v2766 = vpop.f32.mrb[0].mxu0
        %v2767 = vadd.f32 0.0, %v2766
        %v2768 = vpop.f32.mrb[0].mxu0
        %2769 = vmatprep.mubr.f32.mxu0 0.0
        %2770 = vmatmul.mubr.f32.gmra.mrb[0].mxu0 %v2577
        %v2771 = vpop.f32.mrb[0].mxu0
        %v2772 = vadd.f32 0.0, %v2771
        %v2773 = vpop.f32.mrb[0].mxu0
        %2774 = vmatprep.mubr.f32.mxu0 0.0
        %2775 = vmatmul.mubr.f32.gmra.mrb[0].mxu0 %v2580
        %v2776 = vpop.f32.mrb[0].mxu0
        %v2777 = vadd.f32 0.0, %v2776
        %v2778 = vpop.f32.mrb[0].mxu0
        %2779 = vmatprep.mubr.f32.mxu0 0.0
        %2780 = vmatmul.mubr.f32.gmra.mrb[0].mxu0 %v2583
        %v2781 = vpop.f32.mrb[0].mxu0
        %v2782 = vadd.f32 0.0, %v2781
        %v2783 = vpop.f32.mrb[0].mxu0
        %2784 = vmatprep.mubr.f32.mxu0 0.0
        %2785 = vmatmul.mubr.f32.gmra.mrb[0].mxu0 %v2586
        %v2786 = vpop.f32.mrb[0].mxu0
        %v2787 = vadd.f32 0.0, %v2786
        %v2788 = vpop.f32.mrb[0].mxu0
        %2789 = vmatprep.mubr.f32.mxu0 0.0
        %2790 = vmatmul.mubr.f32.gmra.mrb[0].mxu0 %v2589
        %v2791 = vpop.f32.mrb[0].mxu0
        %v2792 = vadd.f32 0.0, %v2791
        %v2793 = vpop.f32.mrb[0].mxu0
        %2794 = vmatprep.mubr.f32.mxu0 0.0
        %2795 = vmatmul.mubr.f32.gmra.mrb[0].mxu0 %v2592
        %v2796 = vpop.f32.mrb[0].mxu0
        %v2797 = vadd.f32 0.0, %v2796
        %v2798 = vpop.f32.mrb[0].mxu0
        %2799 = vmatprep.mubr.f32.mxu0 0.0
        %2800 = vmatmul.mubr.f32.gmra.mrb[0].mxu0 %v2595
        %v2801 = vpop.f32.mrb[0].mxu0
        %v2802 = vadd.f32 0.0, %v2801
        %v2803 = vpop.f32.mrb[0].mxu0
        %2804 = vmatprep.mubr.f32.mxu0 0.0
        %2805 = vmatmul.mubr.f32.gmra.mrb[0].mxu0 %v2598
        %v2806 = vpop.f32.mrb[0].mxu0
        %v2807 = vadd.f32 0.0, %v2806
        %v2808 = vpop.f32.mrb[0].mxu0
        %2809 = vmatprep.mubr.f32.mxu0 0.0
        %2810 = vmatmul.mubr.f32.gmra.mrb[0].mxu0 %v2601
        %v2811 = vpop.f32.mrb[0].mxu0
        %v2812 = vadd.f32 0.0, %v2811
        %v2813 = vpop.f32.mrb[0].mxu0
        %2814 = vmatprep.mubr.f32.mxu0 0.0
        %2815 = vmatmul.mubr.f32.gmra.mrb[0].mxu0 %v2604
        %v2816 = vpop.f32.mrb[0].mxu0
        %v2817 = vadd.f32 0.0, %v2816
        %v2818 = vpop.f32.mrb[0].mxu0
        %2819 = vmatprep.mubr.f32.mxu0 0.0
        %2820 = vmatmul.mubr.f32.gmra.mrb[0].mxu0 %v2607
        %v2821 = vpop.f32.mrb[0].mxu0
        %v2822 = vadd.f32 0.0, %v2821
        %v2823 = vpop.f32.mrb[0].mxu0
        %2824 = vmatprep.mubr.f32.mxu0 0.0
        %2825 = vmatmul.mubr.f32.gmra.mrb[0].mxu0 %v2610
        %v2826 = vpop.f32.mrb[0].mxu0
        %v2827 = vadd.f32 0.0, %v2826
        %v2828 = vpop.f32.mrb[0].mxu0
        %2829 = vmatprep.mubr.f32.mxu0 0.0
        %2830 = vmatmul.mubr.f32.gmra.mrb[0].mxu0 %v2613
        %v2831 = vpop.f32.mrb[0].mxu0
        %v2832 = vadd.f32 0.0, %v2831
        %v2833 = vpop.f32.mrb[0].mxu0
        %2834 = vmatprep.mubr.f32.mxu0 0.0
        %2835 = vmatmul.mubr.f32.gmra.mrb[0].mxu0 %v2616
        %v2836 = vpop.f32.mrb[0].mxu0
        %v2837 = vadd.f32 0.0, %v2836
        %v2838 = vpop.f32.mrb[0].mxu0
        %2839 = vmatprep.mubr.f32.mxu0 0.0
        %2840 = vmatmul.mubr.f32.gmra.mrb[0].mxu0 %v2619
        %v2841 = vpop.f32.mrb[0].mxu0
        %v2842 = vadd.f32 0.0, %v2841
        %v2843 = vpop.f32.mrb[0].mxu0
        %2844 = vmatprep.mubr.f32.mxu0 0.0
        %2845 = vmatmul.mubr.f32.gmra.mrb[0].mxu0 %v2622
        %v2846 = vpop.f32.mrb[0].mxu0
        %v2847 = vadd.f32 0.0, %v2846
        %v2848 = vpop.f32.mrb[0].mxu0
        %2849 = vmatprep.mubr.f32.mxu0 0.0
        %2850 = vmatmul.mubr.f32.gmra.mrb[0].mxu0 %v2625
        %v2851 = vpop.f32.mrb[0].mxu0
        %v2852 = vadd.f32 0.0, %v2851
        %v2853 = vpop.f32.mrb[0].mxu0
        %2854 = vdwg.mxu0
        %v2855 = vadd.f32 %v2464, %v2697
        %v2856 = vadd.f32 %v2465, %v2702
        %v2857 = vadd.f32 %v2466, %v2707
        %v2858 = vadd.f32 %v2467, %v2712
        %v2859 = vadd.f32 %v2468, %v2717
        %v2860 = vadd.f32 %v2469, %v2722
        %v2861 = vadd.f32 %v2470, %v2727
        %v2862 = vadd.f32 %v2471, %v2732
        %v2863 = vadd.f32 %v2472, %v2737
        %v2864 = vadd.f32 %v2473, %v2742
        %v2865 = vadd.f32 %v2474, %v2747
        %v2866 = vadd.f32 %v2475, %v2752
        %v2867 = vadd.f32 %v2476, %v2757
        %v2868 = vadd.f32 %v2477, %v2762
        %v2869 = vadd.f32 %v2478, %v2767
        %v2870 = vadd.f32 %v2479, %v2772
        %v2871 = vadd.f32 %v2480, %v2777
        %v2872 = vadd.f32 %v2481, %v2782
        %v2873 = vadd.f32 %v2482, %v2787
        %v2874 = vadd.f32 %v2483, %v2792
        %v2875 = vadd.f32 %v2484, %v2797
        %v2876 = vadd.f32 %v2485, %v2802
        %v2877 = vadd.f32 %v2486, %v2807
        %v2878 = vadd.f32 %v2487, %v2812
        %v2879 = vadd.f32 %v2488, %v2817
        %v2880 = vadd.f32 %v2489, %v2822
        %v2881 = vadd.f32 %v2490, %v2827
        %v2882 = vadd.f32 %v2491, %v2832
        %v2883 = vadd.f32 %v2492, %v2837
        %v2884 = vadd.f32 %v2493, %v2842
        %v2885 = vadd.f32 %v2494, %v2847
        %v2886 = vadd.f32 %v2495, %v2852
        %v2887 = vld [vmem:[%s2496 + $0x1] sm:$0xff]
        %v2888 = vld [vmem:[%s2496 + $0x9] sm:$0xff]
        %v2889 = vld [vmem:[%s2496 + $0x19] sm:$0xff]
        %v2890 = vld [vmem:[%s2496 + $0x21] sm:$0xff]
        %v2891 = vld [vmem:[%s2496 + $0x31] sm:$0xff]
        %v2892 = vld [vmem:[%s2496 + $0x39] sm:$0xff]
        %v2893 = vld [vmem:[%s2496 + $0x49] sm:$0xff]
        %v2894 = vld [vmem:[%s2496 + $0x51] sm:$0xff]
        %v2895 = vld [vmem:[%s2496 + $0x61] sm:$0xff]
        %v2896 = vld [vmem:[%s2496 + $0x69] sm:$0xff]
        %v2897 = vld [vmem:[%s2496 + $0x79] sm:$0xff]
        %v2898 = vld [vmem:[%s2496 + $0x81] sm:$0xff]
        %v2899 = vld [vmem:[%s2496 + $0x91] sm:$0xff]
        %v2900 = vld [vmem:[%s2496 + $0x99] sm:$0xff]
        %v2901 = vld [vmem:[%s2496 + $0xa9] sm:$0xff]
        %v2902 = vld [vmem:[%s2496 + $0xb1] sm:$0xff]
        %v2903 = vld [vmem:[%s2496 + $0xc1] sm:$0xff]
        %v2904 = vld [vmem:[%s2496 + $0xc9] sm:$0xff]
        %v2905 = vld [vmem:[%s2496 + $0xd9] sm:$0xff]
        %v2906 = vld [vmem:[%s2496 + $0xe1] sm:$0xff]
        %v2907 = vld [vmem:[%s2496 + $0xf1] sm:$0xff]
        %v2908 = vld [vmem:[%s2496 + $0xf9] sm:$0xff]
        %v2909 = vld [vmem:[%s2496 + $0x109] sm:$0xff]
        %v2910 = vld [vmem:[%s2496 + $0x111] sm:$0xff]
        %v2911 = vld [vmem:[%s2496 + $0x121] sm:$0xff]
        %v2912 = vld [vmem:[%s2496 + $0x129] sm:$0xff]
        %v2913 = vld [vmem:[%s2496 + $0x139] sm:$0xff]
        %v2914 = vld [vmem:[%s2496 + $0x141] sm:$0xff]
        %v2915 = vld [vmem:[%s2496 + $0x151] sm:$0xff]
        %v2916 = vld [vmem:[%s2496 + $0x159] sm:$0xff]
        %v2917 = vld [vmem:[%s2496 + $0x169] sm:$0xff]
        %v2918 = vld [vmem:[%s2496 + $0x171] sm:$0xff]
        %s2919 = scalar_lea.vmem %s1, 28
        %v2920 = vld [vmem:[%s2919] sm:$0xf]
        %v2922 = vsel %vm285, %v2887, 0
        %v2925 = vsel %vm285, %v2888, 0
        %v2928 = vsel %vm285, %v2889, 0
        %v2931 = vsel %vm285, %v2890, 0
        %v2934 = vsel %vm285, %v2891, 0
        %v2937 = vsel %vm285, %v2892, 0
        %v2940 = vsel %vm285, %v2893, 0
        %v2943 = vsel %vm285, %v2894, 0
        %v2946 = vsel %vm285, %v2895, 0
        %v2949 = vsel %vm285, %v2896, 0
        %v2952 = vsel %vm285, %v2897, 0
        %v2955 = vsel %vm285, %v2898, 0
        %v2958 = vsel %vm285, %v2899, 0
        %v2961 = vsel %vm285, %v2900, 0
        %v2964 = vsel %vm285, %v2901, 0
        %v2967 = vsel %vm285, %v2902, 0
        %v2970 = vsel %vm285, %v2903, 0
        %v2973 = vsel %vm285, %v2904, 0
        %v2976 = vsel %vm285, %v2905, 0
        %v2979 = vsel %vm285, %v2906, 0
        %v2982 = vsel %vm285, %v2907, 0
        %v2985 = vsel %vm285, %v2908, 0
        %v2988 = vsel %vm285, %v2909, 0
        %v2991 = vsel %vm285, %v2910, 0
        %v2994 = vsel %vm285, %v2911, 0
        %v2997 = vsel %vm285, %v2912, 0
        %v3000 = vsel %vm285, %v2913, 0
        %v3003 = vsel %vm285, %v2914, 0
        %v3006 = vsel %vm285, %v2915, 0
        %v3009 = vsel %vm285, %v2916, 0
        %v3012 = vsel %vm285, %v2917, 0
        %v3015 = vsel %vm285, %v2918, 0
        %v3018 = vsel %vm382, %v2920, 0
        %3020 = vmatprep.subr.mxu0 0.0
        %3021 = vmatpush1.msra.mxu0 %v3018
        %3022 = vmatprep.subr.mxu0 0.0
        %3023 = vmatpush1.msra.mxu0 0.0
        %3024 = vmatprep.subr.mxu0 0.0
        %3025 = vmatpush1.msra.mxu0 0.0
        %3026 = vmatprep.subr.mxu0 0.0
        %3027 = vmatpush1.msra.mxu0 0.0
        %3028 = vmatprep.subr.mxu0 0.0
        %3029 = vmatpush1.msra.mxu0 0.0
        %3030 = vmatprep.subr.mxu0 0.0
        %3031 = vmatpush1.msra.mxu0 0.0
        %3032 = vmatprep.subr.mxu0 0.0
        %3033 = vmatpush1.msra.mxu0 0.0
        %3034 = vmatprep.subr.mxu0 0.0
        %3035 = vmatpush1.msra.mxu0 0.0
        %3036 = vmatprep.subr.mxu0 0.0
        %3037 = vmatpush1.msra.mxu0 0.0
        %3038 = vmatprep.subr.mxu0 0.0
        %3039 = vmatpush1.msra.mxu0 0.0
        %3040 = vmatprep.subr.mxu0 0.0
        %3041 = vmatpush1.msra.mxu0 0.0
        %3042 = vmatprep.subr.mxu0 0.0
        %3043 = vmatpush1.msra.mxu0 0.0
        %3044 = vmatprep.subr.mxu0 0.0
        %3045 = vmatpush1.msra.mxu0 0.0
        %3046 = vmatprep.subr.mxu0 0.0
        %3047 = vmatpush1.msra.mxu0 0.0
        %3048 = vmatprep.subr.mxu0 0.0
        %3049 = vmatpush1.msra.mxu0 0.0
        %3050 = vmatprep.subr.mxu0 0.0
        %3051 = vmatpush1.msra.mxu0 0.0
        %3052 = vmatprep.subr.mxu0 0.0
        %3053 = vmatpush1.msra.mxu0 0.0
        %3054 = vmatprep.subr.mxu0 0.0
        %3055 = vmatpush1.msra.mxu0 0.0
        %3056 = vmatprep.subr.mxu0 0.0
        %3057 = vmatpush1.msra.mxu0 0.0
        %3058 = vmatprep.subr.mxu0 0.0
        %3059 = vmatpush1.msra.mxu0 0.0
        %3060 = vmatprep.subr.mxu0 0.0
        %3061 = vmatpush1.msra.mxu0 0.0
        %3062 = vmatprep.subr.mxu0 0.0
        %3063 = vmatpush1.msra.mxu0 0.0
        %3064 = vmatprep.subr.mxu0 0.0
        %3065 = vmatpush1.msra.mxu0 0.0
        %3066 = vmatprep.subr.mxu0 0.0
        %3067 = vmatpush1.msra.mxu0 0.0
        %3068 = vmatprep.subr.mxu0 0.0
        %3069 = vmatpush1.msra.mxu0 0.0
        %3070 = vmatprep.subr.mxu0 0.0
        %3071 = vmatpush1.msra.mxu0 0.0
        %3072 = vmatprep.subr.mxu0 0.0
        %3073 = vmatpush1.msra.mxu0 0.0
        %3074 = vmatprep.subr.mxu0 0.0
        %3075 = vmatpush1.msra.mxu0 0.0
        %3076 = vmatprep.subr.mxu0 0.0
        %3077 = vmatpush1.msra.mxu0 0.0
        %3078 = vmatprep.subr.mxu0 0.0
        %3079 = vmatpush1.msra.mxu0 0.0
        %3080 = vmatprep.subr.mxu0 0.0
        %3081 = vmatpush1.msra.mxu0 0.0
        %3082 = vmatprep.subr.mxu0 0.0
        %3083 = vmatpush1.msra.mxu0 0.0
        %3084 = vmatprep.mubr.f32.mxu0 0.0
        %3085 = vmatmul.mubr.f32.gmra.mrb[0].mxu0 %v2922
        %v3086 = vpop.f32.mrb[0].mxu0
        %v3087 = vadd.f32 0.0, %v3086
        %v3088 = vpop.f32.mrb[0].mxu0
        %3089 = vmatprep.mubr.f32.mxu0 0.0
        %3090 = vmatmul.mubr.f32.gmra.mrb[0].mxu0 %v2925
        %v3091 = vpop.f32.mrb[0].mxu0
        %v3092 = vadd.f32 0.0, %v3091
        %v3093 = vpop.f32.mrb[0].mxu0
        %3094 = vmatprep.mubr.f32.mxu0 0.0
        %3095 = vmatmul.mubr.f32.gmra.mrb[0].mxu0 %v2928
        %v3096 = vpop.f32.mrb[0].mxu0
        %v3097 = vadd.f32 0.0, %v3096
        %v3098 = vpop.f32.mrb[0].mxu0
        %3099 = vmatprep.mubr.f32.mxu0 0.0
        %3100 = vmatmul.mubr.f32.gmra.mrb[0].mxu0 %v2931
        %v3101 = vpop.f32.mrb[0].mxu0
        %v3102 = vadd.f32 0.0, %v3101
        %v3103 = vpop.f32.mrb[0].mxu0
        %3104 = vmatprep.mubr.f32.mxu0 0.0
        %3105 = vmatmul.mubr.f32.gmra.mrb[0].mxu0 %v2934
        %v3106 = vpop.f32.mrb[0].mxu0
        %v3107 = vadd.f32 0.0, %v3106
        %v3108 = vpop.f32.mrb[0].mxu0
        %3109 = vmatprep.mubr.f32.mxu0 0.0
        %3110 = vmatmul.mubr.f32.gmra.mrb[0].mxu0 %v2937
        %v3111 = vpop.f32.mrb[0].mxu0
        %v3112 = vadd.f32 0.0, %v3111
        %v3113 = vpop.f32.mrb[0].mxu0
        %3114 = vmatprep.mubr.f32.mxu0 0.0
        %3115 = vmatmul.mubr.f32.gmra.mrb[0].mxu0 %v2940
        %v3116 = vpop.f32.mrb[0].mxu0
        %v3117 = vadd.f32 0.0, %v3116
        %v3118 = vpop.f32.mrb[0].mxu0
        %3119 = vmatprep.mubr.f32.mxu0 0.0
        %3120 = vmatmul.mubr.f32.gmra.mrb[0].mxu0 %v2943
        %v3121 = vpop.f32.mrb[0].mxu0
        %v3122 = vadd.f32 0.0, %v3121
        %v3123 = vpop.f32.mrb[0].mxu0
        %3124 = vmatprep.mubr.f32.mxu0 0.0
        %3125 = vmatmul.mubr.f32.gmra.mrb[0].mxu0 %v2946
        %v3126 = vpop.f32.mrb[0].mxu0
        %v3127 = vadd.f32 0.0, %v3126
        %v3128 = vpop.f32.mrb[0].mxu0
        %3129 = vmatprep.mubr.f32.mxu0 0.0
        %3130 = vmatmul.mubr.f32.gmra.mrb[0].mxu0 %v2949
        %v3131 = vpop.f32.mrb[0].mxu0
        %v3132 = vadd.f32 0.0, %v3131
        %v3133 = vpop.f32.mrb[0].mxu0
        %3134 = vmatprep.mubr.f32.mxu0 0.0
        %3135 = vmatmul.mubr.f32.gmra.mrb[0].mxu0 %v2952
        %v3136 = vpop.f32.mrb[0].mxu0
        %v3137 = vadd.f32 0.0, %v3136
        %v3138 = vpop.f32.mrb[0].mxu0
        %3139 = vmatprep.mubr.f32.mxu0 0.0
        %3140 = vmatmul.mubr.f32.gmra.mrb[0].mxu0 %v2955
        %v3141 = vpop.f32.mrb[0].mxu0
        %v3142 = vadd.f32 0.0, %v3141
        %v3143 = vpop.f32.mrb[0].mxu0
        %3144 = vmatprep.mubr.f32.mxu0 0.0
        %3145 = vmatmul.mubr.f32.gmra.mrb[0].mxu0 %v2958
        %v3146 = vpop.f32.mrb[0].mxu0
        %v3147 = vadd.f32 0.0, %v3146
        %v3148 = vpop.f32.mrb[0].mxu0
        %3149 = vmatprep.mubr.f32.mxu0 0.0
        %3150 = vmatmul.mubr.f32.gmra.mrb[0].mxu0 %v2961
        %v3151 = vpop.f32.mrb[0].mxu0
        %v3152 = vadd.f32 0.0, %v3151
        %v3153 = vpop.f32.mrb[0].mxu0
        %3154 = vmatprep.mubr.f32.mxu0 0.0
        %3155 = vmatmul.mubr.f32.gmra.mrb[0].mxu0 %v2964
        %v3156 = vpop.f32.mrb[0].mxu0
        %v3157 = vadd.f32 0.0, %v3156
        %v3158 = vpop.f32.mrb[0].mxu0
        %3159 = vmatprep.mubr.f32.mxu0 0.0
        %3160 = vmatmul.mubr.f32.gmra.mrb[0].mxu0 %v2967
        %v3161 = vpop.f32.mrb[0].mxu0
        %v3162 = vadd.f32 0.0, %v3161
        %v3163 = vpop.f32.mrb[0].mxu0
        %3164 = vmatprep.mubr.f32.mxu0 0.0
        %3165 = vmatmul.mubr.f32.gmra.mrb[0].mxu0 %v2970
        %v3166 = vpop.f32.mrb[0].mxu0
        %v3167 = vadd.f32 0.0, %v3166
        %v3168 = vpop.f32.mrb[0].mxu0
        %3169 = vmatprep.mubr.f32.mxu0 0.0
        %3170 = vmatmul.mubr.f32.gmra.mrb[0].mxu0 %v2973
        %v3171 = vpop.f32.mrb[0].mxu0
        %v3172 = vadd.f32 0.0, %v3171
        %v3173 = vpop.f32.mrb[0].mxu0
        %3174 = vmatprep.mubr.f32.mxu0 0.0
        %3175 = vmatmul.mubr.f32.gmra.mrb[0].mxu0 %v2976
        %v3176 = vpop.f32.mrb[0].mxu0
        %v3177 = vadd.f32 0.0, %v3176
        %v3178 = vpop.f32.mrb[0].mxu0
        %3179 = vmatprep.mubr.f32.mxu0 0.0
        %3180 = vmatmul.mubr.f32.gmra.mrb[0].mxu0 %v2979
        %v3181 = vpop.f32.mrb[0].mxu0
        %v3182 = vadd.f32 0.0, %v3181
        %v3183 = vpop.f32.mrb[0].mxu0
        %3184 = vmatprep.mubr.f32.mxu0 0.0
        %3185 = vmatmul.mubr.f32.gmra.mrb[0].mxu0 %v2982
        %v3186 = vpop.f32.mrb[0].mxu0
        %v3187 = vadd.f32 0.0, %v3186
        %v3188 = vpop.f32.mrb[0].mxu0
        %3189 = vmatprep.mubr.f32.mxu0 0.0
        %3190 = vmatmul.mubr.f32.gmra.mrb[0].mxu0 %v2985
        %v3191 = vpop.f32.mrb[0].mxu0
        %v3192 = vadd.f32 0.0, %v3191
        %v3193 = vpop.f32.mrb[0].mxu0
        %3194 = vmatprep.mubr.f32.mxu0 0.0
        %3195 = vmatmul.mubr.f32.gmra.mrb[0].mxu0 %v2988
        %v3196 = vpop.f32.mrb[0].mxu0
        %v3197 = vadd.f32 0.0, %v3196
        %v3198 = vpop.f32.mrb[0].mxu0
        %3199 = vmatprep.mubr.f32.mxu0 0.0
        %3200 = vmatmul.mubr.f32.gmra.mrb[0].mxu0 %v2991
        %v3201 = vpop.f32.mrb[0].mxu0
        %v3202 = vadd.f32 0.0, %v3201
        %v3203 = vpop.f32.mrb[0].mxu0
        %3204 = vmatprep.mubr.f32.mxu0 0.0
        %3205 = vmatmul.mubr.f32.gmra.mrb[0].mxu0 %v2994
        %v3206 = vpop.f32.mrb[0].mxu0
        %v3207 = vadd.f32 0.0, %v3206
        %v3208 = vpop.f32.mrb[0].mxu0
        %3209 = vmatprep.mubr.f32.mxu0 0.0
        %3210 = vmatmul.mubr.f32.gmra.mrb[0].mxu0 %v2997
        %v3211 = vpop.f32.mrb[0].mxu0
        %v3212 = vadd.f32 0.0, %v3211
        %v3213 = vpop.f32.mrb[0].mxu0
        %3214 = vmatprep.mubr.f32.mxu0 0.0
        %3215 = vmatmul.mubr.f32.gmra.mrb[0].mxu0 %v3000
        %v3216 = vpop.f32.mrb[0].mxu0
        %v3217 = vadd.f32 0.0, %v3216
        %v3218 = vpop.f32.mrb[0].mxu0
        %3219 = vmatprep.mubr.f32.mxu0 0.0
        %3220 = vmatmul.mubr.f32.gmra.mrb[0].mxu0 %v3003
        %v3221 = vpop.f32.mrb[0].mxu0
        %v3222 = vadd.f32 0.0, %v3221
        %v3223 = vpop.f32.mrb[0].mxu0
        %3224 = vmatprep.mubr.f32.mxu0 0.0
        %3225 = vmatmul.mubr.f32.gmra.mrb[0].mxu0 %v3006
        %v3226 = vpop.f32.mrb[0].mxu0
        %v3227 = vadd.f32 0.0, %v3226
        %v3228 = vpop.f32.mrb[0].mxu0
        %3229 = vmatprep.mubr.f32.mxu0 0.0
        %3230 = vmatmul.mubr.f32.gmra.mrb[0].mxu0 %v3009
        %v3231 = vpop.f32.mrb[0].mxu0
        %v3232 = vadd.f32 0.0, %v3231
        %v3233 = vpop.f32.mrb[0].mxu0
        %3234 = vmatprep.mubr.f32.mxu0 0.0
        %3235 = vmatmul.mubr.f32.gmra.mrb[0].mxu0 %v3012
        %v3236 = vpop.f32.mrb[0].mxu0
        %v3237 = vadd.f32 0.0, %v3236
        %v3238 = vpop.f32.mrb[0].mxu0
        %3239 = vmatprep.mubr.f32.mxu0 0.0
        %3240 = vmatmul.mubr.f32.gmra.mrb[0].mxu0 %v3015
        %v3241 = vpop.f32.mrb[0].mxu0
        %v3242 = vadd.f32 0.0, %v3241
        %v3243 = vpop.f32.mrb[0].mxu0
        %3244 = vdwg.mxu0
        %v3245 = vadd.f32 %v2855, %v3087
        %v3246 = vadd.f32 %v2856, %v3092
        %v3247 = vadd.f32 %v2857, %v3097
        %v3248 = vadd.f32 %v2858, %v3102
        %v3249 = vadd.f32 %v2859, %v3107
        %v3250 = vadd.f32 %v2860, %v3112
        %v3251 = vadd.f32 %v2861, %v3117
        %v3252 = vadd.f32 %v2862, %v3122
        %v3253 = vadd.f32 %v2863, %v3127
        %v3254 = vadd.f32 %v2864, %v3132
        %v3255 = vadd.f32 %v2865, %v3137
        %v3256 = vadd.f32 %v2866, %v3142
        %v3257 = vadd.f32 %v2867, %v3147
        %v3258 = vadd.f32 %v2868, %v3152
        %v3259 = vadd.f32 %v2869, %v3157
        %v3260 = vadd.f32 %v2870, %v3162
        %v3261 = vadd.f32 %v2871, %v3167
        %v3262 = vadd.f32 %v2872, %v3172
        %v3263 = vadd.f32 %v2873, %v3177
        %v3264 = vadd.f32 %v2874, %v3182
        %v3265 = vadd.f32 %v2875, %v3187
        %v3266 = vadd.f32 %v2876, %v3192
        %v3267 = vadd.f32 %v2877, %v3197
        %v3268 = vadd.f32 %v2878, %v3202
        %v3269 = vadd.f32 %v2879, %v3207
        %v3270 = vadd.f32 %v2880, %v3212
        %v3271 = vadd.f32 %v2881, %v3217
        %v3272 = vadd.f32 %v2882, %v3222
        %v3273 = vadd.f32 %v2883, %v3227
        %v3274 = vadd.f32 %v2884, %v3232
        %v3275 = vadd.f32 %v2885, %v3237
        %v3276 = vadd.f32 %v2886, %v3242
        %v3277 = vld [vmem:[%s2496 + $0x2] sm:$0xff]
        %v3278 = vld [vmem:[%s2496 + $0xa] sm:$0xff]
        %v3279 = vld [vmem:[%s2496 + $0x1a] sm:$0xff]
        %v3280 = vld [vmem:[%s2496 + $0x22] sm:$0xff]
        %v3281 = vld [vmem:[%s2496 + $0x32] sm:$0xff]
        %v3282 = vld [vmem:[%s2496 + $0x3a] sm:$0xff]
        %v3283 = vld [vmem:[%s2496 + $0x4a] sm:$0xff]
        %v3284 = vld [vmem:[%s2496 + $0x52] sm:$0xff]
        %v3285 = vld [vmem:[%s2496 + $0x62] sm:$0xff]
        %v3286 = vld [vmem:[%s2496 + $0x6a] sm:$0xff]
        %v3287 = vld [vmem:[%s2496 + $0x7a] sm:$0xff]
        %v3288 = vld [vmem:[%s2496 + $0x82] sm:$0xff]
        %v3289 = vld [vmem:[%s2496 + $0x92] sm:$0xff]
        %v3290 = vld [vmem:[%s2496 + $0x9a] sm:$0xff]
        %v3291 = vld [vmem:[%s2496 + $0xaa] sm:$0xff]
        %v3292 = vld [vmem:[%s2496 + $0xb2] sm:$0xff]
        %v3293 = vld [vmem:[%s2496 + $0xc2] sm:$0xff]
        %v3294 = vld [vmem:[%s2496 + $0xca] sm:$0xff]
        %v3295 = vld [vmem:[%s2496 + $0xda] sm:$0xff]
        %v3296 = vld [vmem:[%s2496 + $0xe2] sm:$0xff]
        %v3297 = vld [vmem:[%s2496 + $0xf2] sm:$0xff]
        %v3298 = vld [vmem:[%s2496 + $0xfa] sm:$0xff]
        %v3299 = vld [vmem:[%s2496 + $0x10a] sm:$0xff]
        %v3300 = vld [vmem:[%s2496 + $0x112] sm:$0xff]
        %v3301 = vld [vmem:[%s2496 + $0x122] sm:$0xff]
        %v3302 = vld [vmem:[%s2496 + $0x12a] sm:$0xff]
        %v3303 = vld [vmem:[%s2496 + $0x13a] sm:$0xff]
        %v3304 = vld [vmem:[%s2496 + $0x142] sm:$0xff]
        %v3305 = vld [vmem:[%s2496 + $0x152] sm:$0xff]
        %v3306 = vld [vmem:[%s2496 + $0x15a] sm:$0xff]
        %v3307 = vld [vmem:[%s2496 + $0x16a] sm:$0xff]
        %v3308 = vld [vmem:[%s2496 + $0x172] sm:$0xff]
        %s3309 = scalar_lea.vmem %s1, 32
        %v3310 = vld [vmem:[%s3309] sm:$0xf]
        %v3312 = vsel %vm285, %v3277, 0
        %v3315 = vsel %vm285, %v3278, 0
        %v3318 = vsel %vm285, %v3279, 0
        %v3321 = vsel %vm285, %v3280, 0
        %v3324 = vsel %vm285, %v3281, 0
        %v3327 = vsel %vm285, %v3282, 0
        %v3330 = vsel %vm285, %v3283, 0
        %v3333 = vsel %vm285, %v3284, 0
        %v3336 = vsel %vm285, %v3285, 0
        %v3339 = vsel %vm285, %v3286, 0
        %v3342 = vsel %vm285, %v3287, 0
        %v3345 = vsel %vm285, %v3288, 0
        %v3348 = vsel %vm285, %v3289, 0
        %v3351 = vsel %vm285, %v3290, 0
        %v3354 = vsel %vm285, %v3291, 0
        %v3357 = vsel %vm285, %v3292, 0
        %v3360 = vsel %vm285, %v3293, 0
        %v3363 = vsel %vm285, %v3294, 0
        %v3366 = vsel %vm285, %v3295, 0
        %v3369 = vsel %vm285, %v3296, 0
        %v3372 = vsel %vm285, %v3297, 0
        %v3375 = vsel %vm285, %v3298, 0
        %v3378 = vsel %vm285, %v3299, 0
        %v3381 = vsel %vm285, %v3300, 0
        %v3384 = vsel %vm285, %v3301, 0
        %v3387 = vsel %vm285, %v3302, 0
        %v3390 = vsel %vm285, %v3303, 0
        %v3393 = vsel %vm285, %v3304, 0
        %v3396 = vsel %vm285, %v3305, 0
        %v3399 = vsel %vm285, %v3306, 0
        %v3402 = vsel %vm285, %v3307, 0
        %v3405 = vsel %vm285, %v3308, 0
        %v3408 = vsel %vm382, %v3310, 0
        %3410 = vmatprep.subr.mxu0 0.0
        %3411 = vmatpush1.msra.mxu0 %v3408
        %3412 = vmatprep.subr.mxu0 0.0
        %3413 = vmatpush1.msra.mxu0 0.0
        %3414 = vmatprep.subr.mxu0 0.0
        %3415 = vmatpush1.msra.mxu0 0.0
        %3416 = vmatprep.subr.mxu0 0.0
        %3417 = vmatpush1.msra.mxu0 0.0
        %3418 = vmatprep.subr.mxu0 0.0
        %3419 = vmatpush1.msra.mxu0 0.0
        %3420 = vmatprep.subr.mxu0 0.0
        %3421 = vmatpush1.msra.mxu0 0.0
        %3422 = vmatprep.subr.mxu0 0.0
        %3423 = vmatpush1.msra.mxu0 0.0
        %3424 = vmatprep.subr.mxu0 0.0
        %3425 = vmatpush1.msra.mxu0 0.0
        %3426 = vmatprep.subr.mxu0 0.0
        %3427 = vmatpush1.msra.mxu0 0.0
        %3428 = vmatprep.subr.mxu0 0.0
        %3429 = vmatpush1.msra.mxu0 0.0
        %3430 = vmatprep.subr.mxu0 0.0
        %3431 = vmatpush1.msra.mxu0 0.0
        %3432 = vmatprep.subr.mxu0 0.0
        %3433 = vmatpush1.msra.mxu0 0.0
        %3434 = vmatprep.subr.mxu0 0.0
        %3435 = vmatpush1.msra.mxu0 0.0
        %3436 = vmatprep.subr.mxu0 0.0
        %3437 = vmatpush1.msra.mxu0 0.0
        %3438 = vmatprep.subr.mxu0 0.0
        %3439 = vmatpush1.msra.mxu0 0.0
        %3440 = vmatprep.subr.mxu0 0.0
        %3441 = vmatpush1.msra.mxu0 0.0
        %3442 = vmatprep.subr.mxu0 0.0
        %3443 = vmatpush1.msra.mxu0 0.0
        %3444 = vmatprep.subr.mxu0 0.0
        %3445 = vmatpush1.msra.mxu0 0.0
        %3446 = vmatprep.subr.mxu0 0.0
        %3447 = vmatpush1.msra.mxu0 0.0
        %3448 = vmatprep.subr.mxu0 0.0
        %3449 = vmatpush1.msra.mxu0 0.0
        %3450 = vmatprep.subr.mxu0 0.0
        %3451 = vmatpush1.msra.mxu0 0.0
        %3452 = vmatprep.subr.mxu0 0.0
        %3453 = vmatpush1.msra.mxu0 0.0
        %3454 = vmatprep.subr.mxu0 0.0
        %3455 = vmatpush1.msra.mxu0 0.0
        %3456 = vmatprep.subr.mxu0 0.0
        %3457 = vmatpush1.msra.mxu0 0.0
        %3458 = vmatprep.subr.mxu0 0.0
        %3459 = vmatpush1.msra.mxu0 0.0
        %3460 = vmatprep.subr.mxu0 0.0
        %3461 = vmatpush1.msra.mxu0 0.0
        %3462 = vmatprep.subr.mxu0 0.0
        %3463 = vmatpush1.msra.mxu0 0.0
        %3464 = vmatprep.subr.mxu0 0.0
        %3465 = vmatpush1.msra.mxu0 0.0
        %3466 = vmatprep.subr.mxu0 0.0
        %3467 = vmatpush1.msra.mxu0 0.0
        %3468 = vmatprep.subr.mxu0 0.0
        %3469 = vmatpush1.msra.mxu0 0.0
        %3470 = vmatprep.subr.mxu0 0.0
        %3471 = vmatpush1.msra.mxu0 0.0
        %3472 = vmatprep.subr.mxu0 0.0
        %3473 = vmatpush1.msra.mxu0 0.0
        %3474 = vmatprep.mubr.f32.mxu0 0.0
        %3475 = vmatmul.mubr.f32.gmra.mrb[0].mxu0 %v3312
        %v3476 = vpop.f32.mrb[0].mxu0
        %v3477 = vadd.f32 0.0, %v3476
        %v3478 = vpop.f32.mrb[0].mxu0
        %3479 = vmatprep.mubr.f32.mxu0 0.0
        %3480 = vmatmul.mubr.f32.gmra.mrb[0].mxu0 %v3315
        %v3481 = vpop.f32.mrb[0].mxu0
        %v3482 = vadd.f32 0.0, %v3481
        %v3483 = vpop.f32.mrb[0].mxu0
        %3484 = vmatprep.mubr.f32.mxu0 0.0
        %3485 = vmatmul.mubr.f32.gmra.mrb[0].mxu0 %v3318
        %v3486 = vpop.f32.mrb[0].mxu0
        %v3487 = vadd.f32 0.0, %v3486
        %v3488 = vpop.f32.mrb[0].mxu0
        %3489 = vmatprep.mubr.f32.mxu0 0.0
        %3490 = vmatmul.mubr.f32.gmra.mrb[0].mxu0 %v3321
        %v3491 = vpop.f32.mrb[0].mxu0
        %v3492 = vadd.f32 0.0, %v3491
        %v3493 = vpop.f32.mrb[0].mxu0
        %3494 = vmatprep.mubr.f32.mxu0 0.0
        %3495 = vmatmul.mubr.f32.gmra.mrb[0].mxu0 %v3324
        %v3496 = vpop.f32.mrb[0].mxu0
        %v3497 = vadd.f32 0.0, %v3496
        %v3498 = vpop.f32.mrb[0].mxu0
        %3499 = vmatprep.mubr.f32.mxu0 0.0
        %3500 = vmatmul.mubr.f32.gmra.mrb[0].mxu0 %v3327
        %v3501 = vpop.f32.mrb[0].mxu0
        %v3502 = vadd.f32 0.0, %v3501
        %v3503 = vpop.f32.mrb[0].mxu0
        %3504 = vmatprep.mubr.f32.mxu0 0.0
        %3505 = vmatmul.mubr.f32.gmra.mrb[0].mxu0 %v3330
        %v3506 = vpop.f32.mrb[0].mxu0
        %v3507 = vadd.f32 0.0, %v3506
        %v3508 = vpop.f32.mrb[0].mxu0
        %3509 = vmatprep.mubr.f32.mxu0 0.0
        %3510 = vmatmul.mubr.f32.gmra.mrb[0].mxu0 %v3333
        %v3511 = vpop.f32.mrb[0].mxu0
        %v3512 = vadd.f32 0.0, %v3511
        %v3513 = vpop.f32.mrb[0].mxu0
        %3514 = vmatprep.mubr.f32.mxu0 0.0
        %3515 = vmatmul.mubr.f32.gmra.mrb[0].mxu0 %v3336
        %v3516 = vpop.f32.mrb[0].mxu0
        %v3517 = vadd.f32 0.0, %v3516
        %v3518 = vpop.f32.mrb[0].mxu0
        %3519 = vmatprep.mubr.f32.mxu0 0.0
        %3520 = vmatmul.mubr.f32.gmra.mrb[0].mxu0 %v3339
        %v3521 = vpop.f32.mrb[0].mxu0
        %v3522 = vadd.f32 0.0, %v3521
        %v3523 = vpop.f32.mrb[0].mxu0
        %3524 = vmatprep.mubr.f32.mxu0 0.0
        %3525 = vmatmul.mubr.f32.gmra.mrb[0].mxu0 %v3342
        %v3526 = vpop.f32.mrb[0].mxu0
        %v3527 = vadd.f32 0.0, %v3526
        %v3528 = vpop.f32.mrb[0].mxu0
        %3529 = vmatprep.mubr.f32.mxu0 0.0
        %3530 = vmatmul.mubr.f32.gmra.mrb[0].mxu0 %v3345
        %v3531 = vpop.f32.mrb[0].mxu0
        %v3532 = vadd.f32 0.0, %v3531
        %v3533 = vpop.f32.mrb[0].mxu0
        %3534 = vmatprep.mubr.f32.mxu0 0.0
        %3535 = vmatmul.mubr.f32.gmra.mrb[0].mxu0 %v3348
        %v3536 = vpop.f32.mrb[0].mxu0
        %v3537 = vadd.f32 0.0, %v3536
        %v3538 = vpop.f32.mrb[0].mxu0
        %3539 = vmatprep.mubr.f32.mxu0 0.0
        %3540 = vmatmul.mubr.f32.gmra.mrb[0].mxu0 %v3351
        %v3541 = vpop.f32.mrb[0].mxu0
        %v3542 = vadd.f32 0.0, %v3541
        %v3543 = vpop.f32.mrb[0].mxu0
        %3544 = vmatprep.mubr.f32.mxu0 0.0
        %3545 = vmatmul.mubr.f32.gmra.mrb[0].mxu0 %v3354
        %v3546 = vpop.f32.mrb[0].mxu0
        %v3547 = vadd.f32 0.0, %v3546
        %v3548 = vpop.f32.mrb[0].mxu0
        %3549 = vmatprep.mubr.f32.mxu0 0.0
        %3550 = vmatmul.mubr.f32.gmra.mrb[0].mxu0 %v3357
        %v3551 = vpop.f32.mrb[0].mxu0
        %v3552 = vadd.f32 0.0, %v3551
        %v3553 = vpop.f32.mrb[0].mxu0
        %3554 = vmatprep.mubr.f32.mxu0 0.0
        %3555 = vmatmul.mubr.f32.gmra.mrb[0].mxu0 %v3360
        %v3556 = vpop.f32.mrb[0].mxu0
        %v3557 = vadd.f32 0.0, %v3556
        %v3558 = vpop.f32.mrb[0].mxu0
        %3559 = vmatprep.mubr.f32.mxu0 0.0
        %3560 = vmatmul.mubr.f32.gmra.mrb[0].mxu0 %v3363
        %v3561 = vpop.f32.mrb[0].mxu0
        %v3562 = vadd.f32 0.0, %v3561
        %v3563 = vpop.f32.mrb[0].mxu0
        %3564 = vmatprep.mubr.f32.mxu0 0.0
        %3565 = vmatmul.mubr.f32.gmra.mrb[0].mxu0 %v3366
        %v3566 = vpop.f32.mrb[0].mxu0
        %v3567 = vadd.f32 0.0, %v3566
        %v3568 = vpop.f32.mrb[0].mxu0
        %3569 = vmatprep.mubr.f32.mxu0 0.0
        %3570 = vmatmul.mubr.f32.gmra.mrb[0].mxu0 %v3369
        %v3571 = vpop.f32.mrb[0].mxu0
        %v3572 = vadd.f32 0.0, %v3571
        %v3573 = vpop.f32.mrb[0].mxu0
        %3574 = vmatprep.mubr.f32.mxu0 0.0
        %3575 = vmatmul.mubr.f32.gmra.mrb[0].mxu0 %v3372
        %v3576 = vpop.f32.mrb[0].mxu0
        %v3577 = vadd.f32 0.0, %v3576
        %v3578 = vpop.f32.mrb[0].mxu0
        %3579 = vmatprep.mubr.f32.mxu0 0.0
        %3580 = vmatmul.mubr.f32.gmra.mrb[0].mxu0 %v3375
        %v3581 = vpop.f32.mrb[0].mxu0
        %v3582 = vadd.f32 0.0, %v3581
        %v3583 = vpop.f32.mrb[0].mxu0
        %3584 = vmatprep.mubr.f32.mxu0 0.0
        %3585 = vmatmul.mubr.f32.gmra.mrb[0].mxu0 %v3378
        %v3586 = vpop.f32.mrb[0].mxu0
        %v3587 = vadd.f32 0.0, %v3586
        %v3588 = vpop.f32.mrb[0].mxu0
        %3589 = vmatprep.mubr.f32.mxu0 0.0
        %3590 = vmatmul.mubr.f32.gmra.mrb[0].mxu0 %v3381
        %v3591 = vpop.f32.mrb[0].mxu0
        %v3592 = vadd.f32 0.0, %v3591
        %v3593 = vpop.f32.mrb[0].mxu0
        %3594 = vmatprep.mubr.f32.mxu0 0.0
        %3595 = vmatmul.mubr.f32.gmra.mrb[0].mxu0 %v3384
        %v3596 = vpop.f32.mrb[0].mxu0
        %v3597 = vadd.f32 0.0, %v3596
        %v3598 = vpop.f32.mrb[0].mxu0
        %3599 = vmatprep.mubr.f32.mxu0 0.0
        %3600 = vmatmul.mubr.f32.gmra.mrb[0].mxu0 %v3387
        %v3601 = vpop.f32.mrb[0].mxu0
        %v3602 = vadd.f32 0.0, %v3601
        %v3603 = vpop.f32.mrb[0].mxu0
        %3604 = vmatprep.mubr.f32.mxu0 0.0
        %3605 = vmatmul.mubr.f32.gmra.mrb[0].mxu0 %v3390
        %v3606 = vpop.f32.mrb[0].mxu0
        %v3607 = vadd.f32 0.0, %v3606
        %v3608 = vpop.f32.mrb[0].mxu0
        %3609 = vmatprep.mubr.f32.mxu0 0.0
        %3610 = vmatmul.mubr.f32.gmra.mrb[0].mxu0 %v3393
        %v3611 = vpop.f32.mrb[0].mxu0
        %v3612 = vadd.f32 0.0, %v3611
        %v3613 = vpop.f32.mrb[0].mxu0
        %3614 = vmatprep.mubr.f32.mxu0 0.0
        %3615 = vmatmul.mubr.f32.gmra.mrb[0].mxu0 %v3396
        %v3616 = vpop.f32.mrb[0].mxu0
        %v3617 = vadd.f32 0.0, %v3616
        %v3618 = vpop.f32.mrb[0].mxu0
        %3619 = vmatprep.mubr.f32.mxu0 0.0
        %3620 = vmatmul.mubr.f32.gmra.mrb[0].mxu0 %v3399
        %v3621 = vpop.f32.mrb[0].mxu0
        %v3622 = vadd.f32 0.0, %v3621
        %v3623 = vpop.f32.mrb[0].mxu0
        %3624 = vmatprep.mubr.f32.mxu0 0.0
        %3625 = vmatmul.mubr.f32.gmra.mrb[0].mxu0 %v3402
        %v3626 = vpop.f32.mrb[0].mxu0
        %v3627 = vadd.f32 0.0, %v3626
        %v3628 = vpop.f32.mrb[0].mxu0
        %3629 = vmatprep.mubr.f32.mxu0 0.0
        %3630 = vmatmul.mubr.f32.gmra.mrb[0].mxu0 %v3405
        %v3631 = vpop.f32.mrb[0].mxu0
        %v3632 = vadd.f32 0.0, %v3631
        %v3633 = vpop.f32.mrb[0].mxu0
        %3634 = vdwg.mxu0
        %v3635 = vadd.f32 %v3245, %v3477
        %v3636 = vadd.f32 %v3246, %v3482
        %v3637 = vadd.f32 %v3247, %v3487
        %v3638 = vadd.f32 %v3248, %v3492
        %v3639 = vadd.f32 %v3249, %v3497
        %v3640 = vadd.f32 %v3250, %v3502
        %v3641 = vadd.f32 %v3251, %v3507
        %v3642 = vadd.f32 %v3252, %v3512
        %v3643 = vadd.f32 %v3253, %v3517
        %v3644 = vadd.f32 %v3254, %v3522
        %v3645 = vadd.f32 %v3255, %v3527
        %v3646 = vadd.f32 %v3256, %v3532
        %v3647 = vadd.f32 %v3257, %v3537
        %v3648 = vadd.f32 %v3258, %v3542
        %v3649 = vadd.f32 %v3259, %v3547
        %v3650 = vadd.f32 %v3260, %v3552
        %v3651 = vadd.f32 %v3261, %v3557
        %v3652 = vadd.f32 %v3262, %v3562
        %v3653 = vadd.f32 %v3263, %v3567
        %v3654 = vadd.f32 %v3264, %v3572
        %v3655 = vadd.f32 %v3265, %v3577
        %v3656 = vadd.f32 %v3266, %v3582
        %v3657 = vadd.f32 %v3267, %v3587
        %v3658 = vadd.f32 %v3268, %v3592
        %v3659 = vadd.f32 %v3269, %v3597
        %v3660 = vadd.f32 %v3270, %v3602
        %v3661 = vadd.f32 %v3271, %v3607
        %v3662 = vadd.f32 %v3272, %v3612
        %v3663 = vadd.f32 %v3273, %v3617
        %v3664 = vadd.f32 %v3274, %v3622
        %v3665 = vadd.f32 %v3275, %v3627
        %v3666 = vadd.f32 %v3276, %v3632
        %v3667 = vld [vmem:[%s2] sm:$0x1]
        %v3668 = vlaneseq
        %v3669 = vshrl.u32 %v3668, 7
        %v3670 = vsub.s32 0, %v3669
        %v3671 = vrot.slane %v3667, %v3670
        %v3672 = vadd.f32 %v3635, %v3671
        %v3673 = vadd.f32 %v3636, %v3671
        %v3674 = vadd.f32 %v3637, %v3671
        %v3675 = vadd.f32 %v3638, %v3671
        %v3676 = vadd.f32 %v3639, %v3671
        %v3677 = vadd.f32 %v3640, %v3671
        %v3678 = vadd.f32 %v3641, %v3671
        %v3679 = vadd.f32 %v3642, %v3671
        %v3680 = vadd.f32 %v3643, %v3671
        %v3681 = vadd.f32 %v3644, %v3671
        %v3682 = vadd.f32 %v3645, %v3671
        %v3683 = vadd.f32 %v3646, %v3671
        %v3684 = vadd.f32 %v3647, %v3671
        %v3685 = vadd.f32 %v3648, %v3671
        %v3686 = vadd.f32 %v3649, %v3671
        %v3687 = vadd.f32 %v3650, %v3671
        %v3688 = vadd.f32 %v3651, %v3671
        %v3689 = vadd.f32 %v3652, %v3671
        %v3690 = vadd.f32 %v3653, %v3671
        %v3691 = vadd.f32 %v3654, %v3671
        %v3692 = vadd.f32 %v3655, %v3671
        %v3693 = vadd.f32 %v3656, %v3671
        %v3694 = vadd.f32 %v3657, %v3671
        %v3695 = vadd.f32 %v3658, %v3671
        %v3696 = vadd.f32 %v3659, %v3671
        %v3697 = vadd.f32 %v3660, %v3671
        %v3698 = vadd.f32 %v3661, %v3671
        %v3699 = vadd.f32 %v3662, %v3671
        %v3700 = vadd.f32 %v3663, %v3671
        %v3701 = vadd.f32 %v3664, %v3671
        %v3702 = vadd.f32 %v3665, %v3671
        %v3703 = vadd.f32 %v3666, %v3671
        %v3704 = vmax.f32 %v3672, 0.0
        %v3705 = vmax.f32 %v3673, 0.0
        %v3706 = vmax.f32 %v3674, 0.0
        %v3707 = vmax.f32 %v3675, 0.0
        %v3708 = vmax.f32 %v3676, 0.0
        %v3709 = vmax.f32 %v3677, 0.0
        %v3710 = vmax.f32 %v3678, 0.0
        %v3711 = vmax.f32 %v3679, 0.0
        %v3712 = vmax.f32 %v3680, 0.0
        %v3713 = vmax.f32 %v3681, 0.0
        %v3714 = vmax.f32 %v3682, 0.0
        %v3715 = vmax.f32 %v3683, 0.0
        %v3716 = vmax.f32 %v3684, 0.0
        %v3717 = vmax.f32 %v3685, 0.0
        %v3718 = vmax.f32 %v3686, 0.0
        %v3719 = vmax.f32 %v3687, 0.0
        %v3720 = vmax.f32 %v3688, 0.0
        %v3721 = vmax.f32 %v3689, 0.0
        %v3722 = vmax.f32 %v3690, 0.0
        %v3723 = vmax.f32 %v3691, 0.0
        %v3724 = vmax.f32 %v3692, 0.0
        %v3725 = vmax.f32 %v3693, 0.0
        %v3726 = vmax.f32 %v3694, 0.0
        %v3727 = vmax.f32 %v3695, 0.0
        %v3728 = vmax.f32 %v3696, 0.0
        %v3729 = vmax.f32 %v3697, 0.0
        %v3730 = vmax.f32 %v3698, 0.0
        %v3731 = vmax.f32 %v3699, 0.0
        %v3732 = vmax.f32 %v3700, 0.0
        %v3733 = vmax.f32 %v3701, 0.0
        %v3734 = vmax.f32 %v3702, 0.0
        %v3735 = vmax.f32 %v3703, 0.0
        %s3736 = smul.u32 %s19, 256
        %s3737 = scalar_lea.vmem [#allocation2], %s3736
        %vm3738 = vcmask 64512
        %3739 = vst.msk [vmem:[%s3737] sm:$0xff] %vm3738, %v3704
        %3740 = vst.msk [vmem:[%s3737 + $0x8] sm:$0xff] %vm3738, %v3705
        %3741 = vst.msk [vmem:[%s3737 + $0x10] sm:$0xff] %vm3738, %v3706
        %3742 = vst.msk [vmem:[%s3737 + $0x18] sm:$0xff] %vm3738, %v3707
        %3743 = vst.msk [vmem:[%s3737 + $0x20] sm:$0xff] %vm3738, %v3708
        %3744 = vst.msk [vmem:[%s3737 + $0x28] sm:$0xff] %vm3738, %v3709
        %3745 = vst.msk [vmem:[%s3737 + $0x30] sm:$0xff] %vm3738, %v3710
        %3746 = vst.msk [vmem:[%s3737 + $0x38] sm:$0xff] %vm3738, %v3711
        %3747 = vst.msk [vmem:[%s3737 + $0x40] sm:$0xff] %vm3738, %v3712
        %3748 = vst.msk [vmem:[%s3737 + $0x48] sm:$0xff] %vm3738, %v3713
        %3749 = vst.msk [vmem:[%s3737 + $0x50] sm:$0xff] %vm3738, %v3714
        %3750 = vst.msk [vmem:[%s3737 + $0x58] sm:$0xff] %vm3738, %v3715
        %3751 = vst.msk [vmem:[%s3737 + $0x60] sm:$0xff] %vm3738, %v3716
        %3752 = vst.msk [vmem:[%s3737 + $0x68] sm:$0xff] %vm3738, %v3717
        %3753 = vst.msk [vmem:[%s3737 + $0x70] sm:$0xff] %vm3738, %v3718
        %3754 = vst.msk [vmem:[%s3737 + $0x78] sm:$0xff] %vm3738, %v3719
        %3755 = vst.msk [vmem:[%s3737 + $0x80] sm:$0xff] %vm3738, %v3720
        %3756 = vst.msk [vmem:[%s3737 + $0x88] sm:$0xff] %vm3738, %v3721
        %3757 = vst.msk [vmem:[%s3737 + $0x90] sm:$0xff] %vm3738, %v3722
        %3758 = vst.msk [vmem:[%s3737 + $0x98] sm:$0xff] %vm3738, %v3723
        %3759 = vst.msk [vmem:[%s3737 + $0xa0] sm:$0xff] %vm3738, %v3724
        %3760 = vst.msk [vmem:[%s3737 + $0xa8] sm:$0xff] %vm3738, %v3725
        %3761 = vst.msk [vmem:[%s3737 + $0xb0] sm:$0xff] %vm3738, %v3726
        %3762 = vst.msk [vmem:[%s3737 + $0xb8] sm:$0xff] %vm3738, %v3727
        %3763 = vst.msk [vmem:[%s3737 + $0xc0] sm:$0xff] %vm3738, %v3728
        %3764 = vst.msk [vmem:[%s3737 + $0xc8] sm:$0xff] %vm3738, %v3729
        %3765 = vst.msk [vmem:[%s3737 + $0xd0] sm:$0xff] %vm3738, %v3730
        %3766 = vst.msk [vmem:[%s3737 + $0xd8] sm:$0xff] %vm3738, %v3731
        %3767 = vst.msk [vmem:[%s3737 + $0xe0] sm:$0xff] %vm3738, %v3732
        %3768 = vst.msk [vmem:[%s3737 + $0xe8] sm:$0xff] %vm3738, %v3733
        %3769 = vst.msk [vmem:[%s3737 + $0xf0] sm:$0xff] %vm3738, %v3734
        %3770 = vst.msk [vmem:[%s3737 + $0xf8] sm:$0xff] %vm3738, %v3735
        %v3771 = vld [vmem:[#allocation3] sm:$0x1]
        %v3772 = vsel %vm3738, %v3704, 0.0
        %v3773 = vsel %vm3738, %v3705, 0.0
        %v3774 = vadd.f32 %v3772, %v3773
        %v3775 = vsel %vm3738, %v3706, 0.0
        %v3776 = vadd.f32 %v3774, %v3775
        %v3777 = vsel %vm3738, %v3707, 0.0
        %v3778 = vadd.f32 %v3776, %v3777
        %v3779 = vsel %vm3738, %v3708, 0.0
        %v3780 = vadd.f32 %v3778, %v3779
        %v3781 = vsel %vm3738, %v3709, 0.0
        %v3782 = vadd.f32 %v3780, %v3781
        %v3783 = vsel %vm3738, %v3710, 0.0
        %v3784 = vadd.f32 %v3782, %v3783
        %v3785 = vsel %vm3738, %v3711, 0.0
        %v3786 = vadd.f32 %v3784, %v3785
        %v3787 = vsel %vm3738, %v3712, 0.0
        %v3788 = vadd.f32 %v3786, %v3787
        %v3789 = vsel %vm3738, %v3713, 0.0
        %v3790 = vadd.f32 %v3788, %v3789
        %v3791 = vsel %vm3738, %v3714, 0.0
        %v3792 = vadd.f32 %v3790, %v3791
        %v3793 = vsel %vm3738, %v3715, 0.0
        %v3794 = vadd.f32 %v3792, %v3793
        %v3795 = vsel %vm3738, %v3716, 0.0
        %v3796 = vadd.f32 %v3794, %v3795
        %v3797 = vsel %vm3738, %v3717, 0.0
        %v3798 = vadd.f32 %v3796, %v3797
        %v3799 = vsel %vm3738, %v3718, 0.0
        %v3800 = vadd.f32 %v3798, %v3799
        %v3801 = vsel %vm3738, %v3719, 0.0
        %v3802 = vadd.f32 %v3800, %v3801
        %v3803 = vsel %vm3738, %v3720, 0.0
        %v3804 = vadd.f32 %v3802, %v3803
        %v3805 = vsel %vm3738, %v3721, 0.0
        %v3806 = vadd.f32 %v3804, %v3805
        %v3807 = vsel %vm3738, %v3722, 0.0
        %v3808 = vadd.f32 %v3806, %v3807
        %v3809 = vsel %vm3738, %v3723, 0.0
        %v3810 = vadd.f32 %v3808, %v3809
        %v3811 = vsel %vm3738, %v3724, 0.0
        %v3812 = vadd.f32 %v3810, %v3811
        %v3813 = vsel %vm3738, %v3725, 0.0
        %v3814 = vadd.f32 %v3812, %v3813
        %v3815 = vsel %vm3738, %v3726, 0.0
        %v3816 = vadd.f32 %v3814, %v3815
        %v3817 = vsel %vm3738, %v3727, 0.0
        %v3818 = vadd.f32 %v3816, %v3817
        %v3819 = vsel %vm3738, %v3728, 0.0
        %v3820 = vadd.f32 %v3818, %v3819
        %v3821 = vsel %vm3738, %v3729, 0.0
        %v3822 = vadd.f32 %v3820, %v3821
        %v3823 = vsel %vm3738, %v3730, 0.0
        %v3824 = vadd.f32 %v3822, %v3823
        %v3825 = vsel %vm3738, %v3731, 0.0
        %v3826 = vadd.f32 %v3824, %v3825
        %v3827 = vsel %vm3738, %v3732, 0.0
        %v3828 = vadd.f32 %v3826, %v3827
        %v3829 = vsel %vm3738, %v3733, 0.0
        %v3830 = vadd.f32 %v3828, %v3829
        %v3831 = vsel %vm3738, %v3734, 0.0
        %v3832 = vadd.f32 %v3830, %v3831
        %v3833 = vsel %vm3738, %v3735, 0.0
        %v3834 = vadd.f32 %v3832, %v3833
        %v3835 = vrot.slane %v3834, 4
        %v3836 = vadd.f32 %v3834, %v3835
        %v3837 = vrot.slane %v3836, 2
        %v3838 = vadd.f32 %v3836, %v3837
        %v3839 = vrot.slane %v3838, 1
        %v3840 = vadd.f32 %v3838, %v3839
        %v3841 = vadd.f32 %v3771, %v3840
        %vm3842 = vcmask 57344
        %3843 = vst.msk [vmem:[#allocation3] sm:$0x1] %vm3842, %v3841
      $region40: #{complete_conv_layer.1} parent=31 // pred_fallthru
        _
      %p3844 = scmp.eq.s32.totalorder %s18, 1
      // Predicated region
      $region41: #{complete_conv_layer.1} parent=31 // pred_check
        %p3845 = pneg %p3844
      $region42: #{complete_conv_layer.1} parent=31 // pred_check_branch
        %3847 = sbr.rel (%p3845) target = $region44
      $region43: #{complete_conv_layer.1} parent=31 // pred_region
        %v3848 = vld [vmem:[#allocation3] sm:$0x1]
        %v3849 = vmul.f32 %v3848, 0.001953125
        %s3850 = smul.u32 %s19, 256
        %s3851 = scalar_lea.vmem [#allocation2], %s3850
        %v3852 = vld [vmem:[%s3851] sm:$0xff]
        %v3853 = vld [vmem:[%s3851 + $0x8] sm:$0xff]
        %v3854 = vld [vmem:[%s3851 + $0x10] sm:$0xff]
        %v3855 = vld [vmem:[%s3851 + $0x18] sm:$0xff]
        %v3856 = vld [vmem:[%s3851 + $0x20] sm:$0xff]
        %v3857 = vld [vmem:[%s3851 + $0x28] sm:$0xff]
        %v3858 = vld [vmem:[%s3851 + $0x30] sm:$0xff]
        %v3859 = vld [vmem:[%s3851 + $0x38] sm:$0xff]
        %v3860 = vld [vmem:[%s3851 + $0x40] sm:$0xff]
        %v3861 = vld [vmem:[%s3851 + $0x48] sm:$0xff]
        %v3862 = vld [vmem:[%s3851 + $0x50] sm:$0xff]
        %v3863 = vld [vmem:[%s3851 + $0x58] sm:$0xff]
        %v3864 = vld [vmem:[%s3851 + $0x60] sm:$0xff]
        %v3865 = vld [vmem:[%s3851 + $0x68] sm:$0xff]
        %v3866 = vld [vmem:[%s3851 + $0x70] sm:$0xff]
        %v3867 = vld [vmem:[%s3851 + $0x78] sm:$0xff]
        %v3868 = vld [vmem:[%s3851 + $0x80] sm:$0xff]
        %v3869 = vld [vmem:[%s3851 + $0x88] sm:$0xff]
        %v3870 = vld [vmem:[%s3851 + $0x90] sm:$0xff]
        %v3871 = vld [vmem:[%s3851 + $0x98] sm:$0xff]
        %v3872 = vld [vmem:[%s3851 + $0xa0] sm:$0xff]
        %v3873 = vld [vmem:[%s3851 + $0xa8] sm:$0xff]
        %v3874 = vld [vmem:[%s3851 + $0xb0] sm:$0xff]
        %v3875 = vld [vmem:[%s3851 + $0xb8] sm:$0xff]
        %v3876 = vld [vmem:[%s3851 + $0xc0] sm:$0xff]
        %v3877 = vld [vmem:[%s3851 + $0xc8] sm:$0xff]
        %v3878 = vld [vmem:[%s3851 + $0xd0] sm:$0xff]
        %v3879 = vld [vmem:[%s3851 + $0xd8] sm:$0xff]
        %v3880 = vld [vmem:[%s3851 + $0xe0] sm:$0xff]
        %v3881 = vld [vmem:[%s3851 + $0xe8] sm:$0xff]
        %v3882 = vld [vmem:[%s3851 + $0xf0] sm:$0xff]
        %v3883 = vld [vmem:[%s3851 + $0xf8] sm:$0xff]
        %v3884 = vlaneseq
        %v3885 = vshrl.u32 %v3884, 7
        %v3886 = vsub.s32 0, %v3885
        %v3887 = vrot.slane %v3849, %v3886
        %v3888 = vsub.f32 %v3852, %v3887
        %v3889 = vsub.f32 %v3853, %v3887
        %v3890 = vsub.f32 %v3854, %v3887
        %v3891 = vsub.f32 %v3855, %v3887
        %v3892 = vsub.f32 %v3856, %v3887
        %v3893 = vsub.f32 %v3857, %v3887
        %v3894 = vsub.f32 %v3858, %v3887
        %v3895 = vsub.f32 %v3859, %v3887
        %v3896 = vsub.f32 %v3860, %v3887
        %v3897 = vsub.f32 %v3861, %v3887
        %v3898 = vsub.f32 %v3862, %v3887
        %v3899 = vsub.f32 %v3863, %v3887
        %v3900 = vsub.f32 %v3864, %v3887
        %v3901 = vsub.f32 %v3865, %v3887
        %v3902 = vsub.f32 %v3866, %v3887
        %v3903 = vsub.f32 %v3867, %v3887
        %v3904 = vsub.f32 %v3868, %v3887
        %v3905 = vsub.f32 %v3869, %v3887
        %v3906 = vsub.f32 %v3870, %v3887
        %v3907 = vsub.f32 %v3871, %v3887
        %v3908 = vsub.f32 %v3872, %v3887
        %v3909 = vsub.f32 %v3873, %v3887
        %v3910 = vsub.f32 %v3874, %v3887
        %v3911 = vsub.f32 %v3875, %v3887
        %v3912 = vsub.f32 %v3876, %v3887
        %v3913 = vsub.f32 %v3877, %v3887
        %v3914 = vsub.f32 %v3878, %v3887
        %v3915 = vsub.f32 %v3879, %v3887
        %v3916 = vsub.f32 %v3880, %v3887
        %v3917 = vsub.f32 %v3881, %v3887
        %v3918 = vsub.f32 %v3882, %v3887
        %v3919 = vsub.f32 %v3883, %v3887
        %v3920 = vld [vmem:[#allocation3 + $0x1] sm:$0x1]
        %v3921 = vmul.f32 %v3888, %v3888
        %v3922 = vmul.f32 %v3889, %v3889
        %v3923 = vmul.f32 %v3890, %v3890
        %v3924 = vmul.f32 %v3891, %v3891
        %v3925 = vmul.f32 %v3892, %v3892
        %v3926 = vmul.f32 %v3893, %v3893
        %v3927 = vmul.f32 %v3894, %v3894
        %v3928 = vmul.f32 %v3895, %v3895
        %v3929 = vmul.f32 %v3896, %v3896
        %v3930 = vmul.f32 %v3897, %v3897
        %v3931 = vmul.f32 %v3898, %v3898
        %v3932 = vmul.f32 %v3899, %v3899
        %v3933 = vmul.f32 %v3900, %v3900
        %v3934 = vmul.f32 %v3901, %v3901
        %v3935 = vmul.f32 %v3902, %v3902
        %v3936 = vmul.f32 %v3903, %v3903
        %v3937 = vmul.f32 %v3904, %v3904
        %v3938 = vmul.f32 %v3905, %v3905
        %v3939 = vmul.f32 %v3906, %v3906
        %v3940 = vmul.f32 %v3907, %v3907
        %v3941 = vmul.f32 %v3908, %v3908
        %v3942 = vmul.f32 %v3909, %v3909
        %v3943 = vmul.f32 %v3910, %v3910
        %v3944 = vmul.f32 %v3911, %v3911
        %v3945 = vmul.f32 %v3912, %v3912
        %v3946 = vmul.f32 %v3913, %v3913
        %v3947 = vmul.f32 %v3914, %v3914
        %v3948 = vmul.f32 %v3915, %v3915
        %v3949 = vmul.f32 %v3916, %v3916
        %v3950 = vmul.f32 %v3917, %v3917
        %v3951 = vmul.f32 %v3918, %v3918
        %v3952 = vmul.f32 %v3919, %v3919
        %vm3953 = vcmask 64512
        %v3954 = vsel %vm3953, %v3921, 0.0
        %v3955 = vsel %vm3953, %v3922, 0.0
        %v3956 = vadd.f32 %v3954, %v3955
        %v3957 = vsel %vm3953, %v3923, 0.0
        %v3958 = vadd.f32 %v3956, %v3957
        %v3959 = vsel %vm3953, %v3924, 0.0
        %v3960 = vadd.f32 %v3958, %v3959
        %v3961 = vsel %vm3953, %v3925, 0.0
        %v3962 = vadd.f32 %v3960, %v3961
        %v3963 = vsel %vm3953, %v3926, 0.0
        %v3964 = vadd.f32 %v3962, %v3963
        %v3965 = vsel %vm3953, %v3927, 0.0
        %v3966 = vadd.f32 %v3964, %v3965
        %v3967 = vsel %vm3953, %v3928, 0.0
        %v3968 = vadd.f32 %v3966, %v3967
        %v3969 = vsel %vm3953, %v3929, 0.0
        %v3970 = vadd.f32 %v3968, %v3969
        %v3971 = vsel %vm3953, %v3930, 0.0
        %v3972 = vadd.f32 %v3970, %v3971
        %v3973 = vsel %vm3953, %v3931, 0.0
        %v3974 = vadd.f32 %v3972, %v3973
        %v3975 = vsel %vm3953, %v3932, 0.0
        %v3976 = vadd.f32 %v3974, %v3975
        %v3977 = vsel %vm3953, %v3933, 0.0
        %v3978 = vadd.f32 %v3976, %v3977
        %v3979 = vsel %vm3953, %v3934, 0.0
        %v3980 = vadd.f32 %v3978, %v3979
        %v3981 = vsel %vm3953, %v3935, 0.0
        %v3982 = vadd.f32 %v3980, %v3981
        %v3983 = vsel %vm3953, %v3936, 0.0
        %v3984 = vadd.f32 %v3982, %v3983
        %v3985 = vsel %vm3953, %v3937, 0.0
        %v3986 = vadd.f32 %v3984, %v3985
        %v3987 = vsel %vm3953, %v3938, 0.0
        %v3988 = vadd.f32 %v3986, %v3987
        %v3989 = vsel %vm3953, %v3939, 0.0
        %v3990 = vadd.f32 %v3988, %v3989
        %v3991 = vsel %vm3953, %v3940, 0.0
        %v3992 = vadd.f32 %v3990, %v3991
        %v3993 = vsel %vm3953, %v3941, 0.0
        %v3994 = vadd.f32 %v3992, %v3993
        %v3995 = vsel %vm3953, %v3942, 0.0
        %v3996 = vadd.f32 %v3994, %v3995
        %v3997 = vsel %vm3953, %v3943, 0.0
        %v3998 = vadd.f32 %v3996, %v3997
        %v3999 = vsel %vm3953, %v3944, 0.0
        %v4000 = vadd.f32 %v3998, %v3999
        %v4001 = vsel %vm3953, %v3945, 0.0
        %v4002 = vadd.f32 %v4000, %v4001
        %v4003 = vsel %vm3953, %v3946, 0.0
        %v4004 = vadd.f32 %v4002, %v4003
        %v4005 = vsel %vm3953, %v3947, 0.0
        %v4006 = vadd.f32 %v4004, %v4005
        %v4007 = vsel %vm3953, %v3948, 0.0
        %v4008 = vadd.f32 %v4006, %v4007
        %v4009 = vsel %vm3953, %v3949, 0.0
        %v4010 = vadd.f32 %v4008, %v4009
        %v4011 = vsel %vm3953, %v3950, 0.0
        %v4012 = vadd.f32 %v4010, %v4011
        %v4013 = vsel %vm3953, %v3951, 0.0
        %v4014 = vadd.f32 %v4012, %v4013
        %v4015 = vsel %vm3953, %v3952, 0.0
        %v4016 = vadd.f32 %v4014, %v4015
        %v4017 = vrot.slane %v4016, 4
        %v4018 = vadd.f32 %v4016, %v4017
        %v4019 = vrot.slane %v4018, 2
        %v4020 = vadd.f32 %v4018, %v4019
        %v4021 = vrot.slane %v4020, 1
        %v4022 = vadd.f32 %v4020, %v4021
        %v4023 = vadd.f32 %v3920, %v4022
        %vm4024 = vcmask 57344
        %4025 = vst.msk [vmem:[#allocation3 + $0x1] sm:$0x1] %vm4024, %v4023
      $region44: #{complete_conv_layer.1} parent=31 // pred_fallthru
        _
      %p4026 = scmp.eq.s32.totalorder %s18, 2
      // Predicated region
      $region45: #{complete_conv_layer.1} parent=31 // pred_check
        %p4027 = pneg %p4026
      $region46: #{complete_conv_layer.1} parent=31 // pred_check_branch
        %4029 = sbr.rel (%p4027) target = $region48
      $region47: #{complete_conv_layer.1} parent=31 // pred_region
        %v4030 = vld [vmem:[#allocation3] sm:$0x1]
        %v4031 = vmul.f32 %v4030, 0.001953125
        %v4032 = vld [vmem:[#allocation3 + $0x1] sm:$0x1]
        %v4033 = vmul.f32 %v4032, 0.001953125
        %v4034 = vadd.f32 %v4033, 1e-05
        %v4035 = vrsqrt.pop %v4034
        %v4036 = vld [vmem:[%s2 + $0x1] sm:$0x1]
        %v4037 = vmul.f32 %v4036, %v4035
        %v4038 = vld [vmem:[%s2 + $0x2] sm:$0x1]
        %v4039 = vmul.f32 %v4031, %v4037
        %v4040 = vsub.f32 %v4038, %v4039
        %s4041 = smul.u32 %s19, 256
        %s4042 = scalar_lea.vmem [#allocation2], %s4041
        %v4043 = vld [vmem:[%s4042] sm:$0xff]
        %v4044 = vld [vmem:[%s4042 + $0x8] sm:$0xff]
        %v4045 = vld [vmem:[%s4042 + $0x10] sm:$0xff]
        %v4046 = vld [vmem:[%s4042 + $0x18] sm:$0xff]
        %v4047 = vld [vmem:[%s4042 + $0x20] sm:$0xff]
        %v4048 = vld [vmem:[%s4042 + $0x28] sm:$0xff]
        %v4049 = vld [vmem:[%s4042 + $0x30] sm:$0xff]
        %v4050 = vld [vmem:[%s4042 + $0x38] sm:$0xff]
        %v4051 = vld [vmem:[%s4042 + $0x40] sm:$0xff]
        %v4052 = vld [vmem:[%s4042 + $0x48] sm:$0xff]
        %v4053 = vld [vmem:[%s4042 + $0x50] sm:$0xff]
        %v4054 = vld [vmem:[%s4042 + $0x58] sm:$0xff]
        %v4055 = vld [vmem:[%s4042 + $0x60] sm:$0xff]
        %v4056 = vld [vmem:[%s4042 + $0x68] sm:$0xff]
        %v4057 = vld [vmem:[%s4042 + $0x70] sm:$0xff]
        %v4058 = vld [vmem:[%s4042 + $0x78] sm:$0xff]
        %v4059 = vld [vmem:[%s4042 + $0x80] sm:$0xff]
        %v4060 = vld [vmem:[%s4042 + $0x88] sm:$0xff]
        %v4061 = vld [vmem:[%s4042 + $0x90] sm:$0xff]
        %v4062 = vld [vmem:[%s4042 + $0x98] sm:$0xff]
        %v4063 = vld [vmem:[%s4042 + $0xa0] sm:$0xff]
        %v4064 = vld [vmem:[%s4042 + $0xa8] sm:$0xff]
        %v4065 = vld [vmem:[%s4042 + $0xb0] sm:$0xff]
        %v4066 = vld [vmem:[%s4042 + $0xb8] sm:$0xff]
        %v4067 = vld [vmem:[%s4042 + $0xc0] sm:$0xff]
        %v4068 = vld [vmem:[%s4042 + $0xc8] sm:$0xff]
        %v4069 = vld [vmem:[%s4042 + $0xd0] sm:$0xff]
        %v4070 = vld [vmem:[%s4042 + $0xd8] sm:$0xff]
        %v4071 = vld [vmem:[%s4042 + $0xe0] sm:$0xff]
        %v4072 = vld [vmem:[%s4042 + $0xe8] sm:$0xff]
        %v4073 = vld [vmem:[%s4042 + $0xf0] sm:$0xff]
        %v4074 = vld [vmem:[%s4042 + $0xf8] sm:$0xff]
        %v4075 = vlaneseq
        %v4076 = vshrl.u32 %v4075, 7
        %v4077 = vsub.s32 0, %v4076
        %v4078 = vrot.slane %v4037, %v4077
        %v4079 = vmul.f32 %v4043, %v4078
        %v4080 = vmul.f32 %v4044, %v4078
        %v4081 = vmul.f32 %v4045, %v4078
        %v4082 = vmul.f32 %v4046, %v4078
        %v4083 = vmul.f32 %v4047, %v4078
        %v4084 = vmul.f32 %v4048, %v4078
        %v4085 = vmul.f32 %v4049, %v4078
        %v4086 = vmul.f32 %v4050, %v4078
        %v4087 = vmul.f32 %v4051, %v4078
        %v4088 = vmul.f32 %v4052, %v4078
        %v4089 = vmul.f32 %v4053, %v4078
        %v4090 = vmul.f32 %v4054, %v4078
        %v4091 = vmul.f32 %v4055, %v4078
        %v4092 = vmul.f32 %v4056, %v4078
        %v4093 = vmul.f32 %v4057, %v4078
        %v4094 = vmul.f32 %v4058, %v4078
        %v4095 = vmul.f32 %v4059, %v4078
        %v4096 = vmul.f32 %v4060, %v4078
        %v4097 = vmul.f32 %v4061, %v4078
        %v4098 = vmul.f32 %v4062, %v4078
        %v4099 = vmul.f32 %v4063, %v4078
        %v4100 = vmul.f32 %v4064, %v4078
        %v4101 = vmul.f32 %v4065, %v4078
        %v4102 = vmul.f32 %v4066, %v4078
        %v4103 = vmul.f32 %v4067, %v4078
        %v4104 = vmul.f32 %v4068, %v4078
        %v4105 = vmul.f32 %v4069, %v4078
        %v4106 = vmul.f32 %v4070, %v4078
        %v4107 = vmul.f32 %v4071, %v4078
        %v4108 = vmul.f32 %v4072, %v4078
        %v4109 = vmul.f32 %v4073, %v4078
        %v4110 = vmul.f32 %v4074, %v4078
        %v4111 = vlaneseq
        %v4112 = vshrl.u32 %v4111, 7
        %v4113 = vsub.s32 0, %v4112
        %v4114 = vrot.slane %v4040, %v4113
        %v4115 = vadd.f32 %v4079, %v4114
        %v4116 = vadd.f32 %v4080, %v4114
        %v4117 = vadd.f32 %v4081, %v4114
        %v4118 = vadd.f32 %v4082, %v4114
        %v4119 = vadd.f32 %v4083, %v4114
        %v4120 = vadd.f32 %v4084, %v4114
        %v4121 = vadd.f32 %v4085, %v4114
        %v4122 = vadd.f32 %v4086, %v4114
        %v4123 = vadd.f32 %v4087, %v4114
        %v4124 = vadd.f32 %v4088, %v4114
        %v4125 = vadd.f32 %v4089, %v4114
        %v4126 = vadd.f32 %v4090, %v4114
        %v4127 = vadd.f32 %v4091, %v4114
        %v4128 = vadd.f32 %v4092, %v4114
        %v4129 = vadd.f32 %v4093, %v4114
        %v4130 = vadd.f32 %v4094, %v4114
        %v4131 = vadd.f32 %v4095, %v4114
        %v4132 = vadd.f32 %v4096, %v4114
        %v4133 = vadd.f32 %v4097, %v4114
        %v4134 = vadd.f32 %v4098, %v4114
        %v4135 = vadd.f32 %v4099, %v4114
        %v4136 = vadd.f32 %v4100, %v4114
        %v4137 = vadd.f32 %v4101, %v4114
        %v4138 = vadd.f32 %v4102, %v4114
        %v4139 = vadd.f32 %v4103, %v4114
        %v4140 = vadd.f32 %v4104, %v4114
        %v4141 = vadd.f32 %v4105, %v4114
        %v4142 = vadd.f32 %v4106, %v4114
        %v4143 = vadd.f32 %v4107, %v4114
        %v4144 = vadd.f32 %v4108, %v4114
        %v4145 = vadd.f32 %v4109, %v4114
        %v4146 = vadd.f32 %v4110, %v4114
        %vm4147 = vcmask 64512
        %v4148 = vsel %vm4147, %v4115, -inf
        %v4149 = vsel %vm4147, %v4117, -inf
        %v4150 = vmax.f32 %v4148, %v4149
        %v4151 = vsel %vm4147, %v4116, -inf
        %v4152 = vsel %vm4147, %v4118, -inf
        %v4153 = vmax.f32 %v4151, %v4152
        %v4154 = vsel %vm4147, %v4119, -inf
        %v4155 = vsel %vm4147, %v4121, -inf
        %v4156 = vmax.f32 %v4154, %v4155
        %v4157 = vsel %vm4147, %v4120, -inf
        %v4158 = vsel %vm4147, %v4122, -inf
        %v4159 = vmax.f32 %v4157, %v4158
        %v4160 = vsel %vm4147, %v4123, -inf
        %v4161 = vsel %vm4147, %v4125, -inf
        %v4162 = vmax.f32 %v4160, %v4161
        %v4163 = vsel %vm4147, %v4124, -inf
        %v4164 = vsel %vm4147, %v4126, -inf
        %v4165 = vmax.f32 %v4163, %v4164
        %v4166 = vsel %vm4147, %v4127, -inf
        %v4167 = vsel %vm4147, %v4129, -inf
        %v4168 = vmax.f32 %v4166, %v4167
        %v4169 = vsel %vm4147, %v4128, -inf
        %v4170 = vsel %vm4147, %v4130, -inf
        %v4171 = vmax.f32 %v4169, %v4170
        %v4172 = vsel %vm4147, %v4131, -inf
        %v4173 = vsel %vm4147, %v4133, -inf
        %v4174 = vmax.f32 %v4172, %v4173
        %v4175 = vsel %vm4147, %v4132, -inf
        %v4176 = vsel %vm4147, %v4134, -inf
        %v4177 = vmax.f32 %v4175, %v4176
        %v4178 = vsel %vm4147, %v4135, -inf
        %v4179 = vsel %vm4147, %v4137, -inf
        %v4180 = vmax.f32 %v4178, %v4179
        %v4181 = vsel %vm4147, %v4136, -inf
        %v4182 = vsel %vm4147, %v4138, -inf
        %v4183 = vmax.f32 %v4181, %v4182
        %v4184 = vsel %vm4147, %v4139, -inf
        %v4185 = vsel %vm4147, %v4141, -inf
        %v4186 = vmax.f32 %v4184, %v4185
        %v4187 = vsel %vm4147, %v4140, -inf
        %v4188 = vsel %vm4147, %v4142, -inf
        %v4189 = vmax.f32 %v4187, %v4188
        %v4190 = vsel %vm4147, %v4143, -inf
        %v4191 = vsel %vm4147, %v4145, -inf
        %v4192 = vmax.f32 %v4190, %v4191
        %v4193 = vsel %vm4147, %v4144, -inf
        %v4194 = vsel %vm4147, %v4146, -inf
        %v4195 = vmax.f32 %v4193, %v4194
        %v4212 = vcombine.high %v4150, %v4150
        %v4214 = vunpack.c.l.s4 1983009808
        %v4215 = vunpack.c.0.s8 %v4214
        %v4216 = vlaneseq
        %v4217 = vshrl.u32 %v4216, 7
        %v4218 = vsub.s32 %v4215, %v4217
        %v4219 = vrot.slane %v4150, %v4218
        %v4221 = vunpack.c.l.s4 1983009808
        %v4222 = vunpack.c.0.s8 %v4221
        %v4223 = vlaneseq
        %v4224 = vshrl.u32 %v4223, 7
        %v4225 = vsub.s32 %v4222, %v4224
        %v4226 = vrot.slane %v4212, %v4225
        %v4227 = vcombine.high %v4219, %v4219
        %v4228 = vcombine.high %v4226, %v4226
        %v4229 = vcombine.high %v4153, %v4153
        %v4231 = vunpack.c.l.s4 1983009808
        %v4232 = vunpack.c.0.s8 %v4231
        %v4233 = vlaneseq
        %v4234 = vshrl.u32 %v4233, 7
        %v4235 = vsub.s32 %v4232, %v4234
        %v4236 = vrot.slane %v4153, %v4235
        %v4238 = vunpack.c.l.s4 1983009808
        %v4239 = vunpack.c.0.s8 %v4238
        %v4240 = vlaneseq
        %v4241 = vshrl.u32 %v4240, 7
        %v4242 = vsub.s32 %v4239, %v4241
        %v4243 = vrot.slane %v4229, %v4242
        %v4244 = vcombine.high %v4236, %v4236
        %v4245 = vcombine.high %v4243, %v4243
        %v4246 = vcombine.high %v4156, %v4156
        %v4248 = vunpack.c.l.s4 1983009808
        %v4249 = vunpack.c.0.s8 %v4248
        %v4250 = vlaneseq
        %v4251 = vshrl.u32 %v4250, 7
        %v4252 = vsub.s32 %v4249, %v4251
        %v4253 = vrot.slane %v4156, %v4252
        %v4255 = vunpack.c.l.s4 1983009808
        %v4256 = vunpack.c.0.s8 %v4255
        %v4257 = vlaneseq
        %v4258 = vshrl.u32 %v4257, 7
        %v4259 = vsub.s32 %v4256, %v4258
        %v4260 = vrot.slane %v4246, %v4259
        %v4261 = vcombine.high %v4253, %v4253
        %v4262 = vcombine.high %v4260, %v4260
        %v4263 = vcombine.high %v4159, %v4159
        %v4265 = vunpack.c.l.s4 1983009808
        %v4266 = vunpack.c.0.s8 %v4265
        %v4267 = vlaneseq
        %v4268 = vshrl.u32 %v4267, 7
        %v4269 = vsub.s32 %v4266, %v4268
        %v4270 = vrot.slane %v4159, %v4269
        %v4272 = vunpack.c.l.s4 1983009808
        %v4273 = vunpack.c.0.s8 %v4272
        %v4274 = vlaneseq
        %v4275 = vshrl.u32 %v4274, 7
        %v4276 = vsub.s32 %v4273, %v4275
        %v4277 = vrot.slane %v4263, %v4276
        %v4278 = vcombine.high %v4270, %v4270
        %v4279 = vcombine.high %v4277, %v4277
        %v4280 = vcombine.high %v4162, %v4162
        %v4282 = vunpack.c.l.s4 1983009808
        %v4283 = vunpack.c.0.s8 %v4282
        %v4284 = vlaneseq
        %v4285 = vshrl.u32 %v4284, 7
        %v4286 = vsub.s32 %v4283, %v4285
        %v4287 = vrot.slane %v4162, %v4286
        %v4289 = vunpack.c.l.s4 1983009808
        %v4290 = vunpack.c.0.s8 %v4289
        %v4291 = vlaneseq
        %v4292 = vshrl.u32 %v4291, 7
        %v4293 = vsub.s32 %v4290, %v4292
        %v4294 = vrot.slane %v4280, %v4293
        %v4295 = vcombine.high %v4287, %v4287
        %v4296 = vcombine.high %v4294, %v4294
        %v4297 = vcombine.high %v4165, %v4165
        %v4299 = vunpack.c.l.s4 1983009808
        %v4300 = vunpack.c.0.s8 %v4299
        %v4301 = vlaneseq
        %v4302 = vshrl.u32 %v4301, 7
        %v4303 = vsub.s32 %v4300, %v4302
        %v4304 = vrot.slane %v4165, %v4303
        %v4306 = vunpack.c.l.s4 1983009808
        %v4307 = vunpack.c.0.s8 %v4306
        %v4308 = vlaneseq
        %v4309 = vshrl.u32 %v4308, 7
        %v4310 = vsub.s32 %v4307, %v4309
        %v4311 = vrot.slane %v4297, %v4310
        %v4312 = vcombine.high %v4304, %v4304
        %v4313 = vcombine.high %v4311, %v4311
        %v4314 = vcombine.high %v4168, %v4168
        %v4316 = vunpack.c.l.s4 1983009808
        %v4317 = vunpack.c.0.s8 %v4316
        %v4318 = vlaneseq
        %v4319 = vshrl.u32 %v4318, 7
        %v4320 = vsub.s32 %v4317, %v4319
        %v4321 = vrot.slane %v4168, %v4320
        %v4323 = vunpack.c.l.s4 1983009808
        %v4324 = vunpack.c.0.s8 %v4323
        %v4325 = vlaneseq
        %v4326 = vshrl.u32 %v4325, 7
        %v4327 = vsub.s32 %v4324, %v4326
        %v4328 = vrot.slane %v4314, %v4327
        %v4329 = vcombine.high %v4321, %v4321
        %v4330 = vcombine.high %v4328, %v4328
        %v4331 = vcombine.high %v4171, %v4171
        %v4333 = vunpack.c.l.s4 1983009808
        %v4334 = vunpack.c.0.s8 %v4333
        %v4335 = vlaneseq
        %v4336 = vshrl.u32 %v4335, 7
        %v4337 = vsub.s32 %v4334, %v4336
        %v4338 = vrot.slane %v4171, %v4337
        %v4340 = vunpack.c.l.s4 1983009808
        %v4341 = vunpack.c.0.s8 %v4340
        %v4342 = vlaneseq
        %v4343 = vshrl.u32 %v4342, 7
        %v4344 = vsub.s32 %v4341, %v4343
        %v4345 = vrot.slane %v4331, %v4344
        %v4346 = vcombine.high %v4338, %v4338
        %v4347 = vcombine.high %v4345, %v4345
        %v4348 = vcombine.high %v4174, %v4174
        %v4350 = vunpack.c.l.s4 1983009808
        %v4351 = vunpack.c.0.s8 %v4350
        %v4352 = vlaneseq
        %v4353 = vshrl.u32 %v4352, 7
        %v4354 = vsub.s32 %v4351, %v4353
        %v4355 = vrot.slane %v4174, %v4354
        %v4357 = vunpack.c.l.s4 1983009808
        %v4358 = vunpack.c.0.s8 %v4357
        %v4359 = vlaneseq
        %v4360 = vshrl.u32 %v4359, 7
        %v4361 = vsub.s32 %v4358, %v4360
        %v4362 = vrot.slane %v4348, %v4361
        %v4363 = vcombine.high %v4355, %v4355
        %v4364 = vcombine.high %v4362, %v4362
        %v4365 = vcombine.high %v4177, %v4177
        %v4367 = vunpack.c.l.s4 1983009808
        %v4368 = vunpack.c.0.s8 %v4367
        %v4369 = vlaneseq
        %v4370 = vshrl.u32 %v4369, 7
        %v4371 = vsub.s32 %v4368, %v4370
        %v4372 = vrot.slane %v4177, %v4371
        %v4374 = vunpack.c.l.s4 1983009808
        %v4375 = vunpack.c.0.s8 %v4374
        %v4376 = vlaneseq
        %v4377 = vshrl.u32 %v4376, 7
        %v4378 = vsub.s32 %v4375, %v4377
        %v4379 = vrot.slane %v4365, %v4378
        %v4380 = vcombine.high %v4372, %v4372
        %v4381 = vcombine.high %v4379, %v4379
        %v4382 = vcombine.high %v4180, %v4180
        %v4384 = vunpack.c.l.s4 1983009808
        %v4385 = vunpack.c.0.s8 %v4384
        %v4386 = vlaneseq
        %v4387 = vshrl.u32 %v4386, 7
        %v4388 = vsub.s32 %v4385, %v4387
        %v4389 = vrot.slane %v4180, %v4388
        %v4391 = vunpack.c.l.s4 1983009808
        %v4392 = vunpack.c.0.s8 %v4391
        %v4393 = vlaneseq
        %v4394 = vshrl.u32 %v4393, 7
        %v4395 = vsub.s32 %v4392, %v4394
        %v4396 = vrot.slane %v4382, %v4395
        %v4397 = vcombine.high %v4389, %v4389
        %v4398 = vcombine.high %v4396, %v4396
        %v4399 = vcombine.high %v4183, %v4183
        %v4401 = vunpack.c.l.s4 1983009808
        %v4402 = vunpack.c.0.s8 %v4401
        %v4403 = vlaneseq
        %v4404 = vshrl.u32 %v4403, 7
        %v4405 = vsub.s32 %v4402, %v4404
        %v4406 = vrot.slane %v4183, %v4405
        %v4408 = vunpack.c.l.s4 1983009808
        %v4409 = vunpack.c.0.s8 %v4408
        %v4410 = vlaneseq
        %v4411 = vshrl.u32 %v4410, 7
        %v4412 = vsub.s32 %v4409, %v4411
        %v4413 = vrot.slane %v4399, %v4412
        %v4414 = vcombine.high %v4406, %v4406
        %v4415 = vcombine.high %v4413, %v4413
        %v4416 = vcombine.high %v4186, %v4186
        %v4418 = vunpack.c.l.s4 1983009808
        %v4419 = vunpack.c.0.s8 %v4418
        %v4420 = vlaneseq
        %v4421 = vshrl.u32 %v4420, 7
        %v4422 = vsub.s32 %v4419, %v4421
        %v4423 = vrot.slane %v4186, %v4422
        %v4425 = vunpack.c.l.s4 1983009808
        %v4426 = vunpack.c.0.s8 %v4425
        %v4427 = vlaneseq
        %v4428 = vshrl.u32 %v4427, 7
        %v4429 = vsub.s32 %v4426, %v4428
        %v4430 = vrot.slane %v4416, %v4429
        %v4431 = vcombine.high %v4423, %v4423
        %v4432 = vcombine.high %v4430, %v4430
        %v4433 = vcombine.high %v4189, %v4189
        %v4435 = vunpack.c.l.s4 1983009808
        %v4436 = vunpack.c.0.s8 %v4435
        %v4437 = vlaneseq
        %v4438 = vshrl.u32 %v4437, 7
        %v4439 = vsub.s32 %v4436, %v4438
        %v4440 = vrot.slane %v4189, %v4439
        %v4442 = vunpack.c.l.s4 1983009808
        %v4443 = vunpack.c.0.s8 %v4442
        %v4444 = vlaneseq
        %v4445 = vshrl.u32 %v4444, 7
        %v4446 = vsub.s32 %v4443, %v4445
        %v4447 = vrot.slane %v4433, %v4446
        %v4448 = vcombine.high %v4440, %v4440
        %v4449 = vcombine.high %v4447, %v4447
        %v4450 = vcombine.high %v4192, %v4192
        %v4452 = vunpack.c.l.s4 1983009808
        %v4453 = vunpack.c.0.s8 %v4452
        %v4454 = vlaneseq
        %v4455 = vshrl.u32 %v4454, 7
        %v4456 = vsub.s32 %v4453, %v4455
        %v4457 = vrot.slane %v4192, %v4456
        %v4459 = vunpack.c.l.s4 1983009808
        %v4460 = vunpack.c.0.s8 %v4459
        %v4461 = vlaneseq
        %v4462 = vshrl.u32 %v4461, 7
        %v4463 = vsub.s32 %v4460, %v4462
        %v4464 = vrot.slane %v4450, %v4463
        %v4465 = vcombine.high %v4457, %v4457
        %v4466 = vcombine.high %v4464, %v4464
        %v4467 = vcombine.high %v4195, %v4195
        %v4469 = vunpack.c.l.s4 1983009808
        %v4470 = vunpack.c.0.s8 %v4469
        %v4471 = vlaneseq
        %v4472 = vshrl.u32 %v4471, 7
        %v4473 = vsub.s32 %v4470, %v4472
        %v4474 = vrot.slane %v4195, %v4473
        %v4476 = vunpack.c.l.s4 1983009808
        %v4477 = vunpack.c.0.s8 %v4476
        %v4478 = vlaneseq
        %v4479 = vshrl.u32 %v4478, 7
        %v4480 = vsub.s32 %v4477, %v4479
        %v4481 = vrot.slane %v4467, %v4480
        %v4482 = vcombine.high %v4474, %v4474
        %v4483 = vcombine.high %v4481, %v4481
        %vm4548 = vcmask 58368
        %v4549 = vsel %vm4548, %v4219, -inf
        %v4550 = vrot.slane %v4549, 4
        %v4551 = vmax.f32 %v4549, %v4550
        %v4552 = vrot.slane %v4551, 2
        %v4553 = vmax.f32 %v4551, %v4552
        %v4554 = vrot.slane %v4553, 1
        %v4555 = vmax.f32 %v4553, %v4554
        %v4556 = vsel %vm4548, %v4227, -inf
        %v4557 = vrot.slane %v4556, 4
        %v4558 = vmax.f32 %v4556, %v4557
        %v4559 = vrot.slane %v4558, 2
        %v4560 = vmax.f32 %v4558, %v4559
        %v4561 = vrot.slane %v4560, 1
        %v4562 = vmax.f32 %v4560, %v4561
        %v4563 = vsel %vm4548, %v4226, -inf
        %v4564 = vrot.slane %v4563, 4
        %v4565 = vmax.f32 %v4563, %v4564
        %v4566 = vrot.slane %v4565, 2
        %v4567 = vmax.f32 %v4565, %v4566
        %v4568 = vrot.slane %v4567, 1
        %v4569 = vmax.f32 %v4567, %v4568
        %v4570 = vsel %vm4548, %v4228, -inf
        %v4571 = vrot.slane %v4570, 4
        %v4572 = vmax.f32 %v4570, %v4571
        %v4573 = vrot.slane %v4572, 2
        %v4574 = vmax.f32 %v4572, %v4573
        %v4575 = vrot.slane %v4574, 1
        %v4576 = vmax.f32 %v4574, %v4575
        %v4577 = vsel %vm4548, %v4236, -inf
        %v4578 = vrot.slane %v4577, 4
        %v4579 = vmax.f32 %v4577, %v4578
        %v4580 = vrot.slane %v4579, 2
        %v4581 = vmax.f32 %v4579, %v4580
        %v4582 = vrot.slane %v4581, 1
        %v4583 = vmax.f32 %v4581, %v4582
        %v4584 = vsel %vm4548, %v4244, -inf
        %v4585 = vrot.slane %v4584, 4
        %v4586 = vmax.f32 %v4584, %v4585
        %v4587 = vrot.slane %v4586, 2
        %v4588 = vmax.f32 %v4586, %v4587
        %v4589 = vrot.slane %v4588, 1
        %v4590 = vmax.f32 %v4588, %v4589
        %v4591 = vsel %vm4548, %v4243, -inf
        %v4592 = vrot.slane %v4591, 4
        %v4593 = vmax.f32 %v4591, %v4592
        %v4594 = vrot.slane %v4593, 2
        %v4595 = vmax.f32 %v4593, %v4594
        %v4596 = vrot.slane %v4595, 1
        %v4597 = vmax.f32 %v4595, %v4596
        %v4598 = vsel %vm4548, %v4245, -inf
        %v4599 = vrot.slane %v4598, 4
        %v4600 = vmax.f32 %v4598, %v4599
        %v4601 = vrot.slane %v4600, 2
        %v4602 = vmax.f32 %v4600, %v4601
        %v4603 = vrot.slane %v4602, 1
        %v4604 = vmax.f32 %v4602, %v4603
        %v4605 = vsel %vm4548, %v4253, -inf
        %v4606 = vrot.slane %v4605, 4
        %v4607 = vmax.f32 %v4605, %v4606
        %v4608 = vrot.slane %v4607, 2
        %v4609 = vmax.f32 %v4607, %v4608
        %v4610 = vrot.slane %v4609, 1
        %v4611 = vmax.f32 %v4609, %v4610
        %v4612 = vsel %vm4548, %v4261, -inf
        %v4613 = vrot.slane %v4612, 4
        %v4614 = vmax.f32 %v4612, %v4613
        %v4615 = vrot.slane %v4614, 2
        %v4616 = vmax.f32 %v4614, %v4615
        %v4617 = vrot.slane %v4616, 1
        %v4618 = vmax.f32 %v4616, %v4617
        %v4619 = vsel %vm4548, %v4260, -inf
        %v4620 = vrot.slane %v4619, 4
        %v4621 = vmax.f32 %v4619, %v4620
        %v4622 = vrot.slane %v4621, 2
        %v4623 = vmax.f32 %v4621, %v4622
        %v4624 = vrot.slane %v4623, 1
        %v4625 = vmax.f32 %v4623, %v4624
        %v4626 = vsel %vm4548, %v4262, -inf
        %v4627 = vrot.slane %v4626, 4
        %v4628 = vmax.f32 %v4626, %v4627
        %v4629 = vrot.slane %v4628, 2
        %v4630 = vmax.f32 %v4628, %v4629
        %v4631 = vrot.slane %v4630, 1
        %v4632 = vmax.f32 %v4630, %v4631
        %v4633 = vsel %vm4548, %v4270, -inf
        %v4634 = vrot.slane %v4633, 4
        %v4635 = vmax.f32 %v4633, %v4634
        %v4636 = vrot.slane %v4635, 2
        %v4637 = vmax.f32 %v4635, %v4636
        %v4638 = vrot.slane %v4637, 1
        %v4639 = vmax.f32 %v4637, %v4638
        %v4640 = vsel %vm4548, %v4278, -inf
        %v4641 = vrot.slane %v4640, 4
        %v4642 = vmax.f32 %v4640, %v4641
        %v4643 = vrot.slane %v4642, 2
        %v4644 = vmax.f32 %v4642, %v4643
        %v4645 = vrot.slane %v4644, 1
        %v4646 = vmax.f32 %v4644, %v4645
        %v4647 = vsel %vm4548, %v4277, -inf
        %v4648 = vrot.slane %v4647, 4
        %v4649 = vmax.f32 %v4647, %v4648
        %v4650 = vrot.slane %v4649, 2
        %v4651 = vmax.f32 %v4649, %v4650
        %v4652 = vrot.slane %v4651, 1
        %v4653 = vmax.f32 %v4651, %v4652
        %v4654 = vsel %vm4548, %v4279, -inf
        %v4655 = vrot.slane %v4654, 4
        %v4656 = vmax.f32 %v4654, %v4655
        %v4657 = vrot.slane %v4656, 2
        %v4658 = vmax.f32 %v4656, %v4657
        %v4659 = vrot.slane %v4658, 1
        %v4660 = vmax.f32 %v4658, %v4659
        %v4661 = vsel %vm4548, %v4287, -inf
        %v4662 = vrot.slane %v4661, 4
        %v4663 = vmax.f32 %v4661, %v4662
        %v4664 = vrot.slane %v4663, 2
        %v4665 = vmax.f32 %v4663, %v4664
        %v4666 = vrot.slane %v4665, 1
        %v4667 = vmax.f32 %v4665, %v4666
        %v4668 = vsel %vm4548, %v4295, -inf
        %v4669 = vrot.slane %v4668, 4
        %v4670 = vmax.f32 %v4668, %v4669
        %v4671 = vrot.slane %v4670, 2
        %v4672 = vmax.f32 %v4670, %v4671
        %v4673 = vrot.slane %v4672, 1
        %v4674 = vmax.f32 %v4672, %v4673
        %v4675 = vsel %vm4548, %v4294, -inf
        %v4676 = vrot.slane %v4675, 4
        %v4677 = vmax.f32 %v4675, %v4676
        %v4678 = vrot.slane %v4677, 2
        %v4679 = vmax.f32 %v4677, %v4678
        %v4680 = vrot.slane %v4679, 1
        %v4681 = vmax.f32 %v4679, %v4680
        %v4682 = vsel %vm4548, %v4296, -inf
        %v4683 = vrot.slane %v4682, 4
        %v4684 = vmax.f32 %v4682, %v4683
        %v4685 = vrot.slane %v4684, 2
        %v4686 = vmax.f32 %v4684, %v4685
        %v4687 = vrot.slane %v4686, 1
        %v4688 = vmax.f32 %v4686, %v4687
        %v4689 = vsel %vm4548, %v4304, -inf
        %v4690 = vrot.slane %v4689, 4
        %v4691 = vmax.f32 %v4689, %v4690
        %v4692 = vrot.slane %v4691, 2
        %v4693 = vmax.f32 %v4691, %v4692
        %v4694 = vrot.slane %v4693, 1
        %v4695 = vmax.f32 %v4693, %v4694
        %v4696 = vsel %vm4548, %v4312, -inf
        %v4697 = vrot.slane %v4696, 4
        %v4698 = vmax.f32 %v4696, %v4697
        %v4699 = vrot.slane %v4698, 2
        %v4700 = vmax.f32 %v4698, %v4699
        %v4701 = vrot.slane %v4700, 1
        %v4702 = vmax.f32 %v4700, %v4701
        %v4703 = vsel %vm4548, %v4311, -inf
        %v4704 = vrot.slane %v4703, 4
        %v4705 = vmax.f32 %v4703, %v4704
        %v4706 = vrot.slane %v4705, 2
        %v4707 = vmax.f32 %v4705, %v4706
        %v4708 = vrot.slane %v4707, 1
        %v4709 = vmax.f32 %v4707, %v4708
        %v4710 = vsel %vm4548, %v4313, -inf
        %v4711 = vrot.slane %v4710, 4
        %v4712 = vmax.f32 %v4710, %v4711
        %v4713 = vrot.slane %v4712, 2
        %v4714 = vmax.f32 %v4712, %v4713
        %v4715 = vrot.slane %v4714, 1
        %v4716 = vmax.f32 %v4714, %v4715
        %v4717 = vsel %vm4548, %v4321, -inf
        %v4718 = vrot.slane %v4717, 4
        %v4719 = vmax.f32 %v4717, %v4718
        %v4720 = vrot.slane %v4719, 2
        %v4721 = vmax.f32 %v4719, %v4720
        %v4722 = vrot.slane %v4721, 1
        %v4723 = vmax.f32 %v4721, %v4722
        %v4724 = vsel %vm4548, %v4329, -inf
        %v4725 = vrot.slane %v4724, 4
        %v4726 = vmax.f32 %v4724, %v4725
        %v4727 = vrot.slane %v4726, 2
        %v4728 = vmax.f32 %v4726, %v4727
        %v4729 = vrot.slane %v4728, 1
        %v4730 = vmax.f32 %v4728, %v4729
        %v4731 = vsel %vm4548, %v4328, -inf
        %v4732 = vrot.slane %v4731, 4
        %v4733 = vmax.f32 %v4731, %v4732
        %v4734 = vrot.slane %v4733, 2
        %v4735 = vmax.f32 %v4733, %v4734
        %v4736 = vrot.slane %v4735, 1
        %v4737 = vmax.f32 %v4735, %v4736
        %v4738 = vsel %vm4548, %v4330, -inf
        %v4739 = vrot.slane %v4738, 4
        %v4740 = vmax.f32 %v4738, %v4739
        %v4741 = vrot.slane %v4740, 2
        %v4742 = vmax.f32 %v4740, %v4741
        %v4743 = vrot.slane %v4742, 1
        %v4744 = vmax.f32 %v4742, %v4743
        %v4745 = vsel %vm4548, %v4338, -inf
        %v4746 = vrot.slane %v4745, 4
        %v4747 = vmax.f32 %v4745, %v4746
        %v4748 = vrot.slane %v4747, 2
        %v4749 = vmax.f32 %v4747, %v4748
        %v4750 = vrot.slane %v4749, 1
        %v4751 = vmax.f32 %v4749, %v4750
        %v4752 = vsel %vm4548, %v4346, -inf
        %v4753 = vrot.slane %v4752, 4
        %v4754 = vmax.f32 %v4752, %v4753
        %v4755 = vrot.slane %v4754, 2
        %v4756 = vmax.f32 %v4754, %v4755
        %v4757 = vrot.slane %v4756, 1
        %v4758 = vmax.f32 %v4756, %v4757
        %v4759 = vsel %vm4548, %v4345, -inf
        %v4760 = vrot.slane %v4759, 4
        %v4761 = vmax.f32 %v4759, %v4760
        %v4762 = vrot.slane %v4761, 2
        %v4763 = vmax.f32 %v4761, %v4762
        %v4764 = vrot.slane %v4763, 1
        %v4765 = vmax.f32 %v4763, %v4764
        %v4766 = vsel %vm4548, %v4347, -inf
        %v4767 = vrot.slane %v4766, 4
        %v4768 = vmax.f32 %v4766, %v4767
        %v4769 = vrot.slane %v4768, 2
        %v4770 = vmax.f32 %v4768, %v4769
        %v4771 = vrot.slane %v4770, 1
        %v4772 = vmax.f32 %v4770, %v4771
        %v4773 = vsel %vm4548, %v4355, -inf
        %v4774 = vrot.slane %v4773, 4
        %v4775 = vmax.f32 %v4773, %v4774
        %v4776 = vrot.slane %v4775, 2
        %v4777 = vmax.f32 %v4775, %v4776
        %v4778 = vrot.slane %v4777, 1
        %v4779 = vmax.f32 %v4777, %v4778
        %v4780 = vsel %vm4548, %v4363, -inf
        %v4781 = vrot.slane %v4780, 4
        %v4782 = vmax.f32 %v4780, %v4781
        %v4783 = vrot.slane %v4782, 2
        %v4784 = vmax.f32 %v4782, %v4783
        %v4785 = vrot.slane %v4784, 1
        %v4786 = vmax.f32 %v4784, %v4785
        %v4787 = vsel %vm4548, %v4362, -inf
        %v4788 = vrot.slane %v4787, 4
        %v4789 = vmax.f32 %v4787, %v4788
        %v4790 = vrot.slane %v4789, 2
        %v4791 = vmax.f32 %v4789, %v4790
        %v4792 = vrot.slane %v4791, 1
        %v4793 = vmax.f32 %v4791, %v4792
        %v4794 = vsel %vm4548, %v4364, -inf
        %v4795 = vrot.slane %v4794, 4
        %v4796 = vmax.f32 %v4794, %v4795
        %v4797 = vrot.slane %v4796, 2
        %v4798 = vmax.f32 %v4796, %v4797
        %v4799 = vrot.slane %v4798, 1
        %v4800 = vmax.f32 %v4798, %v4799
        %v4801 = vsel %vm4548, %v4372, -inf
        %v4802 = vrot.slane %v4801, 4
        %v4803 = vmax.f32 %v4801, %v4802
        %v4804 = vrot.slane %v4803, 2
        %v4805 = vmax.f32 %v4803, %v4804
        %v4806 = vrot.slane %v4805, 1
        %v4807 = vmax.f32 %v4805, %v4806
        %v4808 = vsel %vm4548, %v4380, -inf
        %v4809 = vrot.slane %v4808, 4
        %v4810 = vmax.f32 %v4808, %v4809
        %v4811 = vrot.slane %v4810, 2
        %v4812 = vmax.f32 %v4810, %v4811
        %v4813 = vrot.slane %v4812, 1
        %v4814 = vmax.f32 %v4812, %v4813
        %v4815 = vsel %vm4548, %v4379, -inf
        %v4816 = vrot.slane %v4815, 4
        %v4817 = vmax.f32 %v4815, %v4816
        %v4818 = vrot.slane %v4817, 2
        %v4819 = vmax.f32 %v4817, %v4818
        %v4820 = vrot.slane %v4819, 1
        %v4821 = vmax.f32 %v4819, %v4820
        %v4822 = vsel %vm4548, %v4381, -inf
        %v4823 = vrot.slane %v4822, 4
        %v4824 = vmax.f32 %v4822, %v4823
        %v4825 = vrot.slane %v4824, 2
        %v4826 = vmax.f32 %v4824, %v4825
        %v4827 = vrot.slane %v4826, 1
        %v4828 = vmax.f32 %v4826, %v4827
        %v4829 = vsel %vm4548, %v4389, -inf
        %v4830 = vrot.slane %v4829, 4
        %v4831 = vmax.f32 %v4829, %v4830
        %v4832 = vrot.slane %v4831, 2
        %v4833 = vmax.f32 %v4831, %v4832
        %v4834 = vrot.slane %v4833, 1
        %v4835 = vmax.f32 %v4833, %v4834
        %v4836 = vsel %vm4548, %v4397, -inf
        %v4837 = vrot.slane %v4836, 4
        %v4838 = vmax.f32 %v4836, %v4837
        %v4839 = vrot.slane %v4838, 2
        %v4840 = vmax.f32 %v4838, %v4839
        %v4841 = vrot.slane %v4840, 1
        %v4842 = vmax.f32 %v4840, %v4841
        %v4843 = vsel %vm4548, %v4396, -inf
        %v4844 = vrot.slane %v4843, 4
        %v4845 = vmax.f32 %v4843, %v4844
        %v4846 = vrot.slane %v4845, 2
        %v4847 = vmax.f32 %v4845, %v4846
        %v4848 = vrot.slane %v4847, 1
        %v4849 = vmax.f32 %v4847, %v4848
        %v4850 = vsel %vm4548, %v4398, -inf
        %v4851 = vrot.slane %v4850, 4
        %v4852 = vmax.f32 %v4850, %v4851
        %v4853 = vrot.slane %v4852, 2
        %v4854 = vmax.f32 %v4852, %v4853
        %v4855 = vrot.slane %v4854, 1
        %v4856 = vmax.f32 %v4854, %v4855
        %v4857 = vsel %vm4548, %v4406, -inf
        %v4858 = vrot.slane %v4857, 4
        %v4859 = vmax.f32 %v4857, %v4858
        %v4860 = vrot.slane %v4859, 2
        %v4861 = vmax.f32 %v4859, %v4860
        %v4862 = vrot.slane %v4861, 1
        %v4863 = vmax.f32 %v4861, %v4862
        %v4864 = vsel %vm4548, %v4414, -inf
        %v4865 = vrot.slane %v4864, 4
        %v4866 = vmax.f32 %v4864, %v4865
        %v4867 = vrot.slane %v4866, 2
        %v4868 = vmax.f32 %v4866, %v4867
        %v4869 = vrot.slane %v4868, 1
        %v4870 = vmax.f32 %v4868, %v4869
        %v4871 = vsel %vm4548, %v4413, -inf
        %v4872 = vrot.slane %v4871, 4
        %v4873 = vmax.f32 %v4871, %v4872
        %v4874 = vrot.slane %v4873, 2
        %v4875 = vmax.f32 %v4873, %v4874
        %v4876 = vrot.slane %v4875, 1
        %v4877 = vmax.f32 %v4875, %v4876
        %v4878 = vsel %vm4548, %v4415, -inf
        %v4879 = vrot.slane %v4878, 4
        %v4880 = vmax.f32 %v4878, %v4879
        %v4881 = vrot.slane %v4880, 2
        %v4882 = vmax.f32 %v4880, %v4881
        %v4883 = vrot.slane %v4882, 1
        %v4884 = vmax.f32 %v4882, %v4883
        %v4885 = vsel %vm4548, %v4423, -inf
        %v4886 = vrot.slane %v4885, 4
        %v4887 = vmax.f32 %v4885, %v4886
        %v4888 = vrot.slane %v4887, 2
        %v4889 = vmax.f32 %v4887, %v4888
        %v4890 = vrot.slane %v4889, 1
        %v4891 = vmax.f32 %v4889, %v4890
        %v4892 = vsel %vm4548, %v4431, -inf
        %v4893 = vrot.slane %v4892, 4
        %v4894 = vmax.f32 %v4892, %v4893
        %v4895 = vrot.slane %v4894, 2
        %v4896 = vmax.f32 %v4894, %v4895
        %v4897 = vrot.slane %v4896, 1
        %v4898 = vmax.f32 %v4896, %v4897
        %v4899 = vsel %vm4548, %v4430, -inf
        %v4900 = vrot.slane %v4899, 4
        %v4901 = vmax.f32 %v4899, %v4900
        %v4902 = vrot.slane %v4901, 2
        %v4903 = vmax.f32 %v4901, %v4902
        %v4904 = vrot.slane %v4903, 1
        %v4905 = vmax.f32 %v4903, %v4904
        %v4906 = vsel %vm4548, %v4432, -inf
        %v4907 = vrot.slane %v4906, 4
        %v4908 = vmax.f32 %v4906, %v4907
        %v4909 = vrot.slane %v4908, 2
        %v4910 = vmax.f32 %v4908, %v4909
        %v4911 = vrot.slane %v4910, 1
        %v4912 = vmax.f32 %v4910, %v4911
        %v4913 = vsel %vm4548, %v4440, -inf
        %v4914 = vrot.slane %v4913, 4
        %v4915 = vmax.f32 %v4913, %v4914
        %v4916 = vrot.slane %v4915, 2
        %v4917 = vmax.f32 %v4915, %v4916
        %v4918 = vrot.slane %v4917, 1
        %v4919 = vmax.f32 %v4917, %v4918
        %v4920 = vsel %vm4548, %v4448, -inf
        %v4921 = vrot.slane %v4920, 4
        %v4922 = vmax.f32 %v4920, %v4921
        %v4923 = vrot.slane %v4922, 2
        %v4924 = vmax.f32 %v4922, %v4923
        %v4925 = vrot.slane %v4924, 1
        %v4926 = vmax.f32 %v4924, %v4925
        %v4927 = vsel %vm4548, %v4447, -inf
        %v4928 = vrot.slane %v4927, 4
        %v4929 = vmax.f32 %v4927, %v4928
        %v4930 = vrot.slane %v4929, 2
        %v4931 = vmax.f32 %v4929, %v4930
        %v4932 = vrot.slane %v4931, 1
        %v4933 = vmax.f32 %v4931, %v4932
        %v4934 = vsel %vm4548, %v4449, -inf
        %v4935 = vrot.slane %v4934, 4
        %v4936 = vmax.f32 %v4934, %v4935
        %v4937 = vrot.slane %v4936, 2
        %v4938 = vmax.f32 %v4936, %v4937
        %v4939 = vrot.slane %v4938, 1
        %v4940 = vmax.f32 %v4938, %v4939
        %v4941 = vsel %vm4548, %v4457, -inf
        %v4942 = vrot.slane %v4941, 4
        %v4943 = vmax.f32 %v4941, %v4942
        %v4944 = vrot.slane %v4943, 2
        %v4945 = vmax.f32 %v4943, %v4944
        %v4946 = vrot.slane %v4945, 1
        %v4947 = vmax.f32 %v4945, %v4946
        %v4948 = vsel %vm4548, %v4465, -inf
        %v4949 = vrot.slane %v4948, 4
        %v4950 = vmax.f32 %v4948, %v4949
        %v4951 = vrot.slane %v4950, 2
        %v4952 = vmax.f32 %v4950, %v4951
        %v4953 = vrot.slane %v4952, 1
        %v4954 = vmax.f32 %v4952, %v4953
        %v4955 = vsel %vm4548, %v4464, -inf
        %v4956 = vrot.slane %v4955, 4
        %v4957 = vmax.f32 %v4955, %v4956
        %v4958 = vrot.slane %v4957, 2
        %v4959 = vmax.f32 %v4957, %v4958
        %v4960 = vrot.slane %v4959, 1
        %v4961 = vmax.f32 %v4959, %v4960
        %v4962 = vsel %vm4548, %v4466, -inf
        %v4963 = vrot.slane %v4962, 4
        %v4964 = vmax.f32 %v4962, %v4963
        %v4965 = vrot.slane %v4964, 2
        %v4966 = vmax.f32 %v4964, %v4965
        %v4967 = vrot.slane %v4966, 1
        %v4968 = vmax.f32 %v4966, %v4967
        %v4969 = vsel %vm4548, %v4474, -inf
        %v4970 = vrot.slane %v4969, 4
        %v4971 = vmax.f32 %v4969, %v4970
        %v4972 = vrot.slane %v4971, 2
        %v4973 = vmax.f32 %v4971, %v4972
        %v4974 = vrot.slane %v4973, 1
        %v4975 = vmax.f32 %v4973, %v4974
        %v4976 = vsel %vm4548, %v4482, -inf
        %v4977 = vrot.slane %v4976, 4
        %v4978 = vmax.f32 %v4976, %v4977
        %v4979 = vrot.slane %v4978, 2
        %v4980 = vmax.f32 %v4978, %v4979
        %v4981 = vrot.slane %v4980, 1
        %v4982 = vmax.f32 %v4980, %v4981
        %v4983 = vsel %vm4548, %v4481, -inf
        %v4984 = vrot.slane %v4983, 4
        %v4985 = vmax.f32 %v4983, %v4984
        %v4986 = vrot.slane %v4985, 2
        %v4987 = vmax.f32 %v4985, %v4986
        %v4988 = vrot.slane %v4987, 1
        %v4989 = vmax.f32 %v4987, %v4988
        %v4990 = vsel %vm4548, %v4483, -inf
        %v4991 = vrot.slane %v4990, 4
        %v4992 = vmax.f32 %v4990, %v4991
        %v4993 = vrot.slane %v4992, 2
        %v4994 = vmax.f32 %v4992, %v4993
        %v4995 = vrot.slane %v4994, 1
        %v4996 = vmax.f32 %v4994, %v4995
        %vm5061 = vcmask 1041409
        %v5062 = vsel %vm5061, %v4562, %v4555
        %vm5063 = vcmask 1042434
        %v5064 = vsel %vm5063, %v4569, %v5062
        %vm5065 = vcmask 1043459
        %v5066 = vsel %vm5065, %v4576, %v5064
        %vm5067 = vcmask 1044484
        %v5068 = vsel %vm5067, %v4583, %v5066
        %vm5069 = vcmask 1045509
        %v5070 = vsel %vm5069, %v4590, %v5068
        %vm5071 = vcmask 1046534
        %v5072 = vsel %vm5071, %v4597, %v5070
        %vm5073 = vcmask 1047559
        %v5074 = vsel %vm5073, %v4604, %v5072
        %v5075 = vsel %vm5061, %v4618, %v4611
        %v5076 = vsel %vm5063, %v4625, %v5075
        %v5077 = vsel %vm5065, %v4632, %v5076
        %v5078 = vsel %vm5067, %v4639, %v5077
        %v5079 = vsel %vm5069, %v4646, %v5078
        %v5080 = vsel %vm5071, %v4653, %v5079
        %v5081 = vsel %vm5073, %v4660, %v5080
        %v5082 = vsel %vm5061, %v4674, %v4667
        %v5083 = vsel %vm5063, %v4681, %v5082
        %v5084 = vsel %vm5065, %v4688, %v5083
        %v5085 = vsel %vm5067, %v4695, %v5084
        %v5086 = vsel %vm5069, %v4702, %v5085
        %v5087 = vsel %vm5071, %v4709, %v5086
        %v5088 = vsel %vm5073, %v4716, %v5087
        %v5089 = vsel %vm5061, %v4730, %v4723
        %v5090 = vsel %vm5063, %v4737, %v5089
        %v5091 = vsel %vm5065, %v4744, %v5090
        %v5092 = vsel %vm5067, %v4751, %v5091
        %v5093 = vsel %vm5069, %v4758, %v5092
        %v5094 = vsel %vm5071, %v4765, %v5093
        %v5095 = vsel %vm5073, %v4772, %v5094
        %v5096 = vsel %vm5061, %v4786, %v4779
        %v5097 = vsel %vm5063, %v4793, %v5096
        %v5098 = vsel %vm5065, %v4800, %v5097
        %v5099 = vsel %vm5067, %v4807, %v5098
        %v5100 = vsel %vm5069, %v4814, %v5099
        %v5101 = vsel %vm5071, %v4821, %v5100
        %v5102 = vsel %vm5073, %v4828, %v5101
        %v5103 = vsel %vm5061, %v4842, %v4835
        %v5104 = vsel %vm5063, %v4849, %v5103
        %v5105 = vsel %vm5065, %v4856, %v5104
        %v5106 = vsel %vm5067, %v4863, %v5105
        %v5107 = vsel %vm5069, %v4870, %v5106
        %v5108 = vsel %vm5071, %v4877, %v5107
        %v5109 = vsel %vm5073, %v4884, %v5108
        %v5110 = vsel %vm5061, %v4898, %v4891
        %v5111 = vsel %vm5063, %v4905, %v5110
        %v5112 = vsel %vm5065, %v4912, %v5111
        %v5113 = vsel %vm5067, %v4919, %v5112
        %v5114 = vsel %vm5069, %v4926, %v5113
        %v5115 = vsel %vm5071, %v4933, %v5114
        %v5116 = vsel %vm5073, %v4940, %v5115
        %v5117 = vsel %vm5061, %v4954, %v4947
        %v5118 = vsel %vm5063, %v4961, %v5117
        %v5119 = vsel %vm5065, %v4968, %v5118
        %v5120 = vsel %vm5067, %v4975, %v5119
        %v5121 = vsel %vm5069, %v4982, %v5120
        %v5122 = vsel %vm5071, %v4989, %v5121
        %v5123 = vsel %vm5073, %v4996, %v5122
        %5132 = vst.msk [vmem:[%s204] sm:$0xff] %vm4147, %v5074
        %5133 = vst.msk [vmem:[%s204 + $0x8] sm:$0xff] %vm4147, %v5081
        %5134 = vst.msk [vmem:[%s204 + $0x10] sm:$0xff] %vm4147, %v5088
        %5135 = vst.msk [vmem:[%s204 + $0x18] sm:$0xff] %vm4147, %v5095
        %5136 = vst.msk [vmem:[%s204 + $0x20] sm:$0xff] %vm4147, %v5102
        %5137 = vst.msk [vmem:[%s204 + $0x28] sm:$0xff] %vm4147, %v5109
        %5138 = vst.msk [vmem:[%s204 + $0x30] sm:$0xff] %vm4147, %v5116
        %5139 = vst.msk [vmem:[%s204 + $0x38] sm:$0xff] %vm4147, %v5123
      $region48: #{complete_conv_layer.1} parent=31 // pred_fallthru
        _
      %p5140 = scmp.eq.s32.totalorder %s18, 2
      %s5141 = scalar_select %p5140, %s19, 0
      %p5142 = scmp.lt.s32.totalorder %s5141, 1
      %s5143 = scalar_select %p5142, %s5141, 1
      %s5144 = smul.addr %s5143, 8
      %s5145 = smul.addr %s5144, 8
      %s5146 = scalar_lea.vmem %s3, %s5145
      // Predicated region
      $region49: #{complete_conv_layer.1} parent=31 // pred_check
        %p5147 = pneg %p120
      $region50: #{complete_conv_layer.1} parent=31 // pred_check_branch
        %5149 = sbr.rel (%p5147) target = $region52
      $region51: #{complete_conv_layer.1} parent=31 // pred_region
        %p5150 = scmp.eq.s32.totalorder %s18, 2
        %s5151 = scalar_select %p5150, %s19, 0
      $region52: #{complete_conv_layer.1} parent=31 // pred_fallthru
        _
    $region32: #{complete_conv_layer.1} parent=5 // pred_fallthru
      _
    %p5152 = scmp.le.s32.totalorder 2, %s9
    // Predicated region
    $region53: #{complete_conv_layer.1} parent=5 // pred_check
      %p5153 = pneg %p5152
    $region54: #{complete_conv_layer.1} parent=5 // pred_check_branch
      %5155 = sbr.rel (%p5153) target = $region56
    $region55: #{complete_conv_layer.1} parent=5 // pred_region
      %s5156 = ssub.s32 %s9, 2
      // Predicated region
      $region57: #{complete_conv_layer.1} parent=55 // pred_check
        %p5157 = pneg %p126
      $region58: #{complete_conv_layer.1} parent=55 // pred_check_branch
        %5159 = sbr.rel (%p5157) target = $region60
      $region59: #{complete_conv_layer.1} parent=55 // pred_region
        %p5160 = scmp.eq.s32.totalorder %s20, 2
        %s5161 = scalar_select %p5160, %s21, 0
        %p5162 = scmp.lt.s32.totalorder %s5161, 1
        %s5163 = scalar_select %p5162, %s5161, 1
        %s5164 = smul.addr %s5163, 8
        %s5165 = smul.addr %s5164, 8
        %s5166 = scalar_lea.vmem %s3, %s5165
      $region60: #{complete_conv_layer.1} parent=55 // pred_fallthru
        _
    $region56: #{complete_conv_layer.1} parent=5 // pred_fallthru
      _
  $region6: #{complete_conv_layer.1} parent=0 // loop_footer
    %s13 = sadd.s32 1, %s9
  $region7: #{complete_conv_layer.1} parent=0 // loop_footer_branch
    %8 = sbr.rel target = $region3
  $region8: #{complete_conv_layer.1} parent=0 // loop_exit
    _

</llo_original>
